<compile_context>
chip_gen: v5e
topology: v5e:2x2
jax: 0.10.0
libtpu: 0.0.40
codegen_flags: <defaults>
</compile_context>

<pallas_src>
import jax
import jax.numpy as jnp
from jax.experimental import pallas as pl
from jax.experimental.pallas import tpu as pltpu


# ----------------------------------------------------------------------------------
# Kernel 1: streaming GAP partial sums (per parallel split).
# ----------------------------------------------------------------------------------
def _make_gap_kernel(hw, thw, tiles_per_split):
    groups = thw // 128  # static number of 128-lane groups per block

    def kernel(x_ref, psum_ref, acc_ref):
        t = pl.program_id(1)

        @pl.when(t == 0)
        def _init():
            acc_ref[...] = jnp.zeros_like(acc_ref)

        # Global (unclamped) block index along the HW axis; used only for masking.
        gb = pl.program_id(0) * tiles_per_split + t
        valid = hw - gb * thw                        # <= 0 for fully padded grid steps
        lane = jax.lax.broadcasted_iota(jnp.int32, (1, 1, 128), 2)

        def masked_group(g):
            xg = x_ref[:, :, g * 128:(g + 1) * 128].astype(jnp.float32)
            return jnp.where(lane + g * 128 < valid, xg, 0.0)

        # Pure VPU lane-group accumulation into the persistent (B, C, 128) accumulator;
        # no cross-lane work and no big VMEM temporaries per step.
        s = masked_group(0)
        for g in range(1, groups):
            s = s + masked_group(g)
        acc_ref[...] += s

        @pl.when(t == pl.num_programs(1) - 1)
        def _finalize():
            # Single cross-lane (XLU) reduce per split.
            psum_ref[...] = jnp.sum(acc_ref[...], axis=-1)[None]

    return kernel


# ----------------------------------------------------------------------------------
# Kernel 2: tiny epilogue (GAP divide -> Linear -> BN -> ReLU -> Linear -> Sigmoid -> *).
# ----------------------------------------------------------------------------------
def _make_epilogue_kernel(inv_hw):
    def kernel(psum_ref, w1t_ref, b1_ref, gamma_ref, beta_ref, w2t_ref, b2_ref, out_ref):
        # Combine per-split partial sums and finish the average pool.
        sa = jnp.sum(psum_ref[...], axis=0) * inv_hw                    # (B, C)

        # Linear(512, 32)
        z = jnp.dot(sa, w1t_ref[...], preferred_element_type=jnp.float32) + b1_ref[...]

        # BatchNorm1d(32): training-mode batch statistics, biased variance, eps=1e-5.
        mu = jnp.mean(z, axis=0, keepdims=True)
        var = jnp.mean((z - mu) * (z - mu), axis=0, keepdims=True)
        z_bn = (z - mu) * jax.lax.rsqrt(var + 1e-5) * gamma_ref[...] + beta_ref[...]

        # ReLU -> Linear(32, 512) -> Sigmoid
        h = jnp.maximum(z_bn, 0.0)
        logits = jnp.dot(h, w2t_ref[...], preferred_element_type=jnp.float32) + b2_ref[...]
        y = jax.nn.sigmoid(logits)

        out_ref[...] = (sa * y).astype(out_ref.dtype)

    return kernel


def _auto_budget():
    """Pick (target_block_bytes, vmem_limit_bytes) from the chip's VMEM capacity."""
    vmem_bytes = 64 << 20
    try:
        info = pltpu.get_tpu_info()
        vmem_bytes = int(getattr(info, "vmem_capacity_bytes", vmem_bytes))
    except Exception:
        pass
    if vmem_bytes >= (96 << 20):          # v5e / v6e: 128 MiB physical VMEM
        return 16 << 20, 80 << 20
    return 12 << 20, 48 << 20             # v7x: 64 MiB physical VMEM (conservative default)


def channel_attention(x, w1, b1, gamma, beta, w2, b2, *,
                      num_core_splits=2,
                      target_block_bytes=None,
                      vmem_limit_bytes=None):
    """x: (B, 512, H, W) NCHW (as in PyTorch).  Returns (B, 512)."""
    B, C, H, W = x.shape
    assert C == 512, "ChannelAttention expects 512 input channels"
    HW = H * W

    auto_tb, auto_vl = _auto_budget()
    if target_block_bytes is None:
        target_block_bytes = auto_tb
    if vmem_limit_bytes is None:
        vmem_limit_bytes = auto_vl

    # Free, contiguous reshape of the NCHW input -- no transpose, no pad.
    x3 = x.reshape(B, C, HW)

    # ---- HW tiling: lane-axis tiles of `thw` (multiple of 128) ----------------------
    elem = x.dtype.itemsize
    thw0 = max(128, (target_block_bytes // (B * C * elem)) // 128 * 128)
    nblk0 = pl.cdiv(HW, thw0)
    n_split = max(1, min(num_core_splits, nblk0))        # v7x: 2 TCs; degenerate -> 1
    tiles_per_split = pl.cdiv(nblk0, n_split)
    num_blocks = n_split * tiles_per_split
    thw = max(128, pl.cdiv(pl.cdiv(HW, num_blocks), 128) * 128)
    last_blk = pl.cdiv(HW, thw) - 1                       # clamp target for padded steps

    gap_cost = pl.CostEstimate(
        flops=2 * B * C * num_blocks * thw,
        transcendentals=0,
        bytes_accessed=B * C * HW * elem + n_split * B * C * 4,
    )

    gap = pl.pallas_call(
        _make_gap_kernel(HW, thw, tiles_per_split),
        out_shape=jax.ShapeDtypeStruct((n_split, B, C), jnp.float32),
        grid_spec=pltpu.PrefetchScalarGridSpec(
            num_scalar_prefetch=0,
            grid=(n_split, tiles_per_split),
            in_specs=[
                # Streamed, auto double-buffered lane-dense blocks of x.
                pl.BlockSpec(
                    (B, C, thw),
                    lambda c, t: (0, 0, jnp.minimum(c * tiles_per_split + t, last_blk)),
                ),
            ],
            out_specs=pl.BlockSpec((1, B, C), lambda c, t: (c, 0, 0)),
            scratch_shapes=[pltpu.VMEM((B, C, 128), jnp.float32)],  # per-lane GAP acc
        ),
        compiler_params=pltpu.CompilerParams(
            dimension_semantics=("parallel", "arbitrary"),  # split across TCs on v7x
            vmem_limit_bytes=vmem_limit_bytes,
        ),
        cost_estimate=gap_cost,
    )
    psum = gap(x3)                                           # (n_split, B, C) f32

    # ---- tiny epilogue (single program, everything in VMEM) -------------------------
    w1t = jnp.transpose(w1)          # (512, 32)
    w2t = jnp.transpose(w2)          # (32, 512)
    b1_2 = b1.reshape(1, -1)         # (1, 32)
    b2_2 = b2.reshape(1, -1)         # (1, 512)
    gamma_2 = gamma.reshape(1, -1)   # (1, 32)
    beta_2 = beta.reshape(1, -1)     # (1, 32)

    out = pl.pallas_call(
        _make_epilogue_kernel(1.0 / float(HW)),
        out_shape=jax.ShapeDtypeStruct((B, C), x.dtype),
    )(psum, w1t, b1_2, gamma_2, beta_2, w2t, b2_2)
    return out


# ----------------------------------------------------------------------------------
# Reference + test harness
# ----------------------------------------------------------------------------------
def channel_attention_ref(x, w1, b1, gamma, beta, w2, b2):
    """Pure-JAX reference of the PyTorch forward (training-mode BatchNorm)."""
    B, C = x.shape[0], x.shape[1]
    sa = jnp.mean(x.reshape(B, C, -1), axis=-1)
    z = sa @ w1.T + b1
    mu = jnp.mean(z, axis=0, keepdims=True)
    var = jnp.mean((z - mu) ** 2, axis=0, keepdims=True)
    zbn = (z - mu) / jnp.sqrt(var + 1e-5) * gamma + beta
    h = jnp.maximum(zbn, 0.0)
    y = jax.nn.sigmoid(h @ w2.T + b2)
    return sa * y


def _init_params(key):
    """Deterministic synthetic parameters matching the PyTorch module shapes."""
    k1, k2, k3, k4 = jax.random.split(key, 4)
    lim1 = 1.0 / jnp.sqrt(512.0)
    w1 = jax.random.uniform(k1, (32, 512), jnp.float32, -lim1, lim1)
    b1 = jax.random.uniform(k2, (32,), jnp.float32, -lim1, lim1)
    lim2 = 1.0 / jnp.sqrt(32.0)
    w2 = jax.random.uniform(k3, (512, 32), jnp.float32, -lim2, lim2)
    b2 = jax.random.uniform(k4, (512,), jnp.float32, -lim2, lim2)
    gamma = jnp.ones((32,), jnp.float32)
    beta = jnp.zeros((32,), jnp.float32)
    return w1, b1, gamma, beta, w2, b2


if __name__ == "__main__":
    key = jax.random.PRNGKey(0)
    kx1, kx2, kp = jax.random.split(key, 3)
    params = _init_params(kp)

    # Test 1: default tiling (single block, no split needed).
    B, C, H, W = 2, 512, 8, 8
    x1 = jax.random.normal(kx1, (B, C, H, W), jnp.float32)
    out1 = jax.block_until_ready(channel_attention(x1, *params))
    assert out1.shape == (B, C) and out1.dtype == jnp.float32
    ref1 = channel_attention_ref(x1, *params)
    assert jnp.allclose(out1, ref1, atol=1e-5, rtol=1e-5)

    # Test 2: force multiple HW tiles, the 2-way parallel split and the ragged-tail mask
    # (HW = 169 -> one full 128-lane block + one partially masked block per split path).
    H2 = W2 = 13
    x2 = jax.random.normal(kx2, (B, C, H2, W2), jnp.float32)
    out2 = jax.block_until_ready(
        channel_attention(x2, *params, num_core_splits=2,
                          target_block_bytes=512 << 10))
    ref2 = channel_attention_ref(x2, *params)
    assert jnp.allclose(out2, ref2, atol=1e-5, rtol=1e-5)

    print("KERNEL_OK")
</pallas_src>

<mosaic_0001>
module attributes {stable_mosaic.version = 11 : i64} {
  func.func @kernel(%arg0: i32, %arg1: i32, %arg2: memref<2x512x128xf32, #tpu.memory_space<vmem>>, %arg3: memref<1x2x512xf32, #tpu.memory_space<vmem>>, %arg4: memref<2x512x128xf32, #tpu.memory_space<vmem>>) attributes {dimension_semantics = [#tpu.dimension_semantics<parallel>, #tpu.dimension_semantics<arbitrary>], iteration_bounds = array<i64: 1, 1>, scalar_prefetch = 0 : i64, scratch_operands = 1 : i64, tpu.core_type = #tpu.core_type<tc>, window_params = [{transform_indices = @transform_0, window_bounds = array<i64: 2, 512, 128>}, {transform_indices = @transform_1, window_bounds = array<i64: 1, 2, 512>}]} {
    %c0_i32 = arith.constant 0 : i32
    %0 = arith.cmpi eq, %arg1, %c0_i32 : i32
    %1 = arith.extui %0 : i1 to i32
    %c0_i32_0 = arith.constant 0 : i32
    %2 = arith.cmpi ne, %1, %c0_i32_0 : i32
    scf.if %2 {
      %cst_12 = arith.constant 0.000000e+00 : f32
      %23 = vector.broadcast %cst_12 : f32 to vector<2x512x128xf32>
      %c0_13 = arith.constant 0 : index
      %c0_14 = arith.constant 0 : index
      %c0_15 = arith.constant 0 : index
      %24 = vector.load %arg4[%c0_13, %c0_14, %c0_15] : memref<2x512x128xf32, #tpu.memory_space<vmem>>, vector<2x512x128xf32>
      tpu.vector_store %arg4[%c0_13, %c0_14, %c0_15], %23 {strides = array<i32>} : memref<2x512x128xf32, #tpu.memory_space<vmem>>, vector<2x512x128xf32>,
    } else {
    }
    %c1_i32 = arith.constant 1 : i32
    %3 = arith.muli %arg0, %c1_i32 : i32
    %4 = arith.addi %3, %arg1 : i32
    %c128_i32 = arith.constant 128 : i32
    %5 = arith.muli %4, %c128_i32 : i32
    %c64_i32 = arith.constant 64 : i32
    %6 = arith.subi %c64_i32, %5 : i32
    %7 = tpu.iota {dimensions = array<i32: 2>} : vector<1x1x128xi32>
    %c0 = arith.constant 0 : index
    %c0_1 = arith.constant 0 : index
    %c0_2 = arith.constant 0 : index
    %8 = vector.load %arg2[%c0, %c0_1, %c0_2] : memref<2x512x128xf32, #tpu.memory_space<vmem>>, vector<2x512x128xf32>
    %c0_i32_3 = arith.constant 0 : i32
    %9 = vector.broadcast %c0_i32_3 : i32 to vector<1x1x128xi32>
    %10 = arith.addi %7, %9 : vector<1x1x128xi32>
    %11 = vector.broadcast %6 : i32 to vector<1x1x128xi32>
    %12 = arith.cmpi slt, %10, %11 : vector<1x1x128xi32>
    %cst = arith.constant 0.000000e+00 : f32
    %13 = vector.shape_cast %12 : vector<1x1x128xi1> to vector<1x1x128xi1>
    %14 = vector.broadcast %13 : vector<1x1x128xi1> to vector<2x512x128xi1>
    %15 = vector.broadcast %cst : f32 to vector<2x512x128xf32>
    %16 = arith.select %14, %8, %15 : vector<2x512x128xi1>, vector<2x512x128xf32>
    %c0_4 = arith.constant 0 : index
    %c0_5 = arith.constant 0 : index
    %c0_6 = arith.constant 0 : index
    %17 = vector.load %arg4[%c0_4, %c0_5, %c0_6] : memref<2x512x128xf32, #tpu.memory_space<vmem>>, vector<2x512x128xf32>
    %18 = arith.addf %17, %16 : vector<2x512x128xf32>
    %c0_7 = arith.constant 0 : index
    %c0_8 = arith.constant 0 : index
    %c0_9 = arith.constant 0 : index
    %19 = vector.load %arg4[%c0_7, %c0_8, %c0_9] : memref<2x512x128xf32, #tpu.memory_space<vmem>>, vector<2x512x128xf32>
    tpu.vector_store %arg4[%c0_7, %c0_8, %c0_9], %18 {strides = array<i32>} : memref<2x512x128xf32, #tpu.memory_space<vmem>>, vector<2x512x128xf32>,
    %c0_i32_10 = arith.constant 0 : i32
    %20 = arith.cmpi eq, %arg1, %c0_i32_10 : i32
    %21 = arith.extui %20 : i1 to i32
    %c0_i32_11 = arith.constant 0 : i32
    %22 = arith.cmpi ne, %21, %c0_i32_11 : i32
    scf.if %22 {
      %c0_12 = arith.constant 0 : index
      %c0_13 = arith.constant 0 : index
      %c0_14 = arith.constant 0 : index
      %23 = vector.load %arg4[%c0_12, %c0_13, %c0_14] : memref<2x512x128xf32, #tpu.memory_space<vmem>>, vector<2x512x128xf32>
      %cst_15 = arith.constant dense<0.000000e+00> : vector<2x512xf32>
      %24 = vector.multi_reduction <add>, %23, %cst_15 [2] : vector<2x512x128xf32> to vector<2x512xf32>
      %25 = vector.shape_cast %24 : vector<2x512xf32> to vector<1x2x512xf32>
      %c0_16 = arith.constant 0 : index
      %c0_17 = arith.constant 0 : index
      %c0_18 = arith.constant 0 : index
      %26 = vector.load %arg3[%c0_16, %c0_17, %c0_18] : memref<1x2x512xf32, #tpu.memory_space<vmem>>, vector<1x2x512xf32>
      tpu.vector_store %arg3[%c0_16, %c0_17, %c0_18], %25 {strides = array<i32>} : memref<1x2x512xf32, #tpu.memory_space<vmem>>, vector<1x2x512xf32>,
    } else {
    }
    return
  }
  func.func @transform_0(%arg0: i32, %arg1: i32) -> (i32, i32, i32) {
    %c1_i32 = arith.constant 1 : i32
    %0 = arith.muli %arg0, %c1_i32 : i32
    %1 = arith.addi %0, %arg1 : i32
    %c0_i32 = arith.constant 0 : i32
    %2 = arith.minsi %1, %c0_i32 : i32
    %c0_i32_0 = arith.constant 0 : i32
    %c0_i32_1 = arith.constant 0 : i32
    %c0_i32_2 = arith.constant 0 : i32
    return %c0_i32_0, %c0_i32_1, %2 : i32, i32, i32
  }
  func.func @transform_1(%arg0: i32, %arg1: i32) -> (i32, i32, i32) {
    %c0_i32 = arith.constant 0 : i32
    %c0_i32_0 = arith.constant 0 : i32
    %c0_i32_1 = arith.constant 0 : i32
    return %arg0, %c0_i32, %c0_i32_0 : i32, i32, i32
  }
}

</mosaic_0001>

<llo_original>
// kernel: tpu_custom_call.1
$region0: #{tpu_custom_call.1}
  #allocation0 [shape = 'u32[]', space=smem, size = 0x4, offset = 0x4, fixed_abs, tag = 'smem constant byte address 0x4 - core index']
  #allocation1 [shape = 'u32[72,128]{1,0:T(1,128)}', space=vmem, size = 0x9000, scoped, tag = 'internal scratch']
  #allocation2 [shape = 'f32[2,512,128]{2,1,0:T(8,128)}', space=vmem, size = 0x80000, scoped, tag = 'scratch operand']
  %s0 = inlined_call_operand.vmem [shape: f32[2,512,64], index: 0, kind: input, shape index: {}]
  %s1 = inlined_call_operand.hbm [shape: f32[1,2,512], index: 1, kind: output, shape index: {}]
  %s2 = sld [smem:[#allocation0]]
  $region22: #{tpu_custom_call.1} parent=0
    _
  %s4 = ssub.s32 1, %s2
  %s5 = scalar_select 0, %s4, %s2
  $region1: #{tpu_custom_call.1} parent=0
    #allocation3 [shape = 'u8[4096]{0}', space=vmem, size = 0x1000, scoped, tag = 'output window, operand 0, single buffered']
    #allocation4 [shape = 's32[1]{0}', space=sflag, size = 0x4, scoped, tag = 'scoped memory for tpu_custom_call.1']
    %6 = vsyncpa [#allocation4], 0
    // Predicated region
    $region2: #{tpu_custom_call.1} parent=1 // pred_check
      _
    $region3: #{tpu_custom_call.1} parent=1 // pred_check_branch
      %8 = sbr.rel (0) target = $region5
    $region4: #{tpu_custom_call.1} parent=1 // pred_region
      %s9 = sadd.s32 0, 0
      %p10 = scmp.lt.s32.totalorder %s9, 0
      %s11 = scalar_select %p10, %s9, 0
      %p12 = scmp.lt.s32.totalorder %s11, 0
      %s13 = scalar_select %p12, %s11, 0
      %s14 = smul.addr %s13, 8
      %s15 = scalar_lea.vmem %s0, %s14
      %s16 = sadd.s32 0, 0
      %p17 = scmp.lt.s32.totalorder %s16, 0
      %s18 = scalar_select %p17, %s16, 0
    $region5: #{tpu_custom_call.1} parent=1 // pred_fallthru
      _
    %s19 = sadd.s32 0, 0
    %p20 = scmp.lt.s32.totalorder %s19, 0
    %s21 = scalar_select %p20, %s19, 0
    %p22 = scmp.lt.s32.totalorder %s21, 0
    %s23 = scalar_select %p22, %s21, 0
    %s24 = smul.addr %s23, 8
    %s25 = scalar_lea.vmem %s0, %s24
    %s26 = sadd.s32 0, 0
    %p27 = scmp.lt.s32.totalorder %s26, 0
    %s28 = scalar_select %p27, %s26, 0
    %p29 = scmp.lt.s32.totalorder %s28, 0
    %s30 = scalar_select %p29, %s28, 0
    %s31 = smul.addr %s30, 8
    %s32 = scalar_lea.vmem %s0, %s31
    %s33 = sadd.s32 0, 0
    %p34 = scmp.lt.s32.totalorder %s33, 0
    %s35 = scalar_select %p34, %s33, 0
    %p36 = scmp.eq.s32.totalorder 0, 0
    // Predicated region
    $region6: #{tpu_custom_call.1} parent=1 // pred_check
      %p37 = pneg %p36
    $region7: #{tpu_custom_call.1} parent=1 // pred_check_branch
      %39 = sbr.rel (%p37) target = $region9
    $region8: #{tpu_custom_call.1} parent=1 // pred_region
      %40 = vst [vmem:[#allocation2] sm:$0xff] 0.0
      %41 = vst [vmem:[#allocation2 + $0x8] sm:$0xff] 0.0
      %42 = vst [vmem:[#allocation2 + $0x10] sm:$0xff] 0.0
      %43 = vst [vmem:[#allocation2 + $0x18] sm:$0xff] 0.0
      %44 = vst [vmem:[#allocation2 + $0x20] sm:$0xff] 0.0
      %45 = vst [vmem:[#allocation2 + $0x28] sm:$0xff] 0.0
      %46 = vst [vmem:[#allocation2 + $0x30] sm:$0xff] 0.0
      %47 = vst [vmem:[#allocation2 + $0x38] sm:$0xff] 0.0
      %48 = vst [vmem:[#allocation2 + $0x40] sm:$0xff] 0.0
      %49 = vst [vmem:[#allocation2 + $0x48] sm:$0xff] 0.0
      %50 = vst [vmem:[#allocation2 + $0x50] sm:$0xff] 0.0
      %51 = vst [vmem:[#allocation2 + $0x58] sm:$0xff] 0.0
      %52 = vst [vmem:[#allocation2 + $0x60] sm:$0xff] 0.0
      %53 = vst [vmem:[#allocation2 + $0x68] sm:$0xff] 0.0
      %54 = vst [vmem:[#allocation2 + $0x70] sm:$0xff] 0.0
      %55 = vst [vmem:[#allocation2 + $0x78] sm:$0xff] 0.0
      %56 = vst [vmem:[#allocation2 + $0x80] sm:$0xff] 0.0
      %57 = vst [vmem:[#allocation2 + $0x88] sm:$0xff] 0.0
      %58 = vst [vmem:[#allocation2 + $0x90] sm:$0xff] 0.0
      %59 = vst [vmem:[#allocation2 + $0x98] sm:$0xff] 0.0
      %60 = vst [vmem:[#allocation2 + $0xa0] sm:$0xff] 0.0
      %61 = vst [vmem:[#allocation2 + $0xa8] sm:$0xff] 0.0
      %62 = vst [vmem:[#allocation2 + $0xb0] sm:$0xff] 0.0
      %63 = vst [vmem:[#allocation2 + $0xb8] sm:$0xff] 0.0
      %64 = vst [vmem:[#allocation2 + $0xc0] sm:$0xff] 0.0
      %65 = vst [vmem:[#allocation2 + $0xc8] sm:$0xff] 0.0
      %66 = vst [vmem:[#allocation2 + $0xd0] sm:$0xff] 0.0
      %67 = vst [vmem:[#allocation2 + $0xd8] sm:$0xff] 0.0
      %68 = vst [vmem:[#allocation2 + $0xe0] sm:$0xff] 0.0
      %69 = vst [vmem:[#allocation2 + $0xe8] sm:$0xff] 0.0
      %70 = vst [vmem:[#allocation2 + $0xf0] sm:$0xff] 0.0
      %71 = vst [vmem:[#allocation2 + $0xf8] sm:$0xff] 0.0
      %72 = vst [vmem:[#allocation2 + $0x100] sm:$0xff] 0.0
      %73 = vst [vmem:[#allocation2 + $0x108] sm:$0xff] 0.0
      %74 = vst [vmem:[#allocation2 + $0x110] sm:$0xff] 0.0
      %75 = vst [vmem:[#allocation2 + $0x118] sm:$0xff] 0.0
      %76 = vst [vmem:[#allocation2 + $0x120] sm:$0xff] 0.0
      %77 = vst [vmem:[#allocation2 + $0x128] sm:$0xff] 0.0
      %78 = vst [vmem:[#allocation2 + $0x130] sm:$0xff] 0.0
      %79 = vst [vmem:[#allocation2 + $0x138] sm:$0xff] 0.0
      %80 = vst [vmem:[#allocation2 + $0x140] sm:$0xff] 0.0
      %81 = vst [vmem:[#allocation2 + $0x148] sm:$0xff] 0.0
      %82 = vst [vmem:[#allocation2 + $0x150] sm:$0xff] 0.0
      %83 = vst [vmem:[#allocation2 + $0x158] sm:$0xff] 0.0
      %84 = vst [vmem:[#allocation2 + $0x160] sm:$0xff] 0.0
      %85 = vst [vmem:[#allocation2 + $0x168] sm:$0xff] 0.0
      %86 = vst [vmem:[#allocation2 + $0x170] sm:$0xff] 0.0
      %87 = vst [vmem:[#allocation2 + $0x178] sm:$0xff] 0.0
      %88 = vst [vmem:[#allocation2 + $0x180] sm:$0xff] 0.0
      %89 = vst [vmem:[#allocation2 + $0x188] sm:$0xff] 0.0
      %90 = vst [vmem:[#allocation2 + $0x190] sm:$0xff] 0.0
      %91 = vst [vmem:[#allocation2 + $0x198] sm:$0xff] 0.0
      %92 = vst [vmem:[#allocation2 + $0x1a0] sm:$0xff] 0.0
      %93 = vst [vmem:[#allocation2 + $0x1a8] sm:$0xff] 0.0
      %94 = vst [vmem:[#allocation2 + $0x1b0] sm:$0xff] 0.0
      %95 = vst [vmem:[#allocation2 + $0x1b8] sm:$0xff] 0.0
      %96 = vst [vmem:[#allocation2 + $0x1c0] sm:$0xff] 0.0
      %97 = vst [vmem:[#allocation2 + $0x1c8] sm:$0xff] 0.0
      %98 = vst [vmem:[#allocation2 + $0x1d0] sm:$0xff] 0.0
      %99 = vst [vmem:[#allocation2 + $0x1d8] sm:$0xff] 0.0
      %100 = vst [vmem:[#allocation2 + $0x1e0] sm:$0xff] 0.0
      %101 = vst [vmem:[#allocation2 + $0x1e8] sm:$0xff] 0.0
      %102 = vst [vmem:[#allocation2 + $0x1f0] sm:$0xff] 0.0
      %103 = vst [vmem:[#allocation2 + $0x1f8] sm:$0xff] 0.0
      %104 = vst [vmem:[#allocation2 + $0x200] sm:$0xff] 0.0
      %105 = vst [vmem:[#allocation2 + $0x208] sm:$0xff] 0.0
      %106 = vst [vmem:[#allocation2 + $0x210] sm:$0xff] 0.0
      %107 = vst [vmem:[#allocation2 + $0x218] sm:$0xff] 0.0
      %108 = vst [vmem:[#allocation2 + $0x220] sm:$0xff] 0.0
      %109 = vst [vmem:[#allocation2 + $0x228] sm:$0xff] 0.0
      %110 = vst [vmem:[#allocation2 + $0x230] sm:$0xff] 0.0
      %111 = vst [vmem:[#allocation2 + $0x238] sm:$0xff] 0.0
      %112 = vst [vmem:[#allocation2 + $0x240] sm:$0xff] 0.0
      %113 = vst [vmem:[#allocation2 + $0x248] sm:$0xff] 0.0
      %114 = vst [vmem:[#allocation2 + $0x250] sm:$0xff] 0.0
      %115 = vst [vmem:[#allocation2 + $0x258] sm:$0xff] 0.0
      %116 = vst [vmem:[#allocation2 + $0x260] sm:$0xff] 0.0
      %117 = vst [vmem:[#allocation2 + $0x268] sm:$0xff] 0.0
      %118 = vst [vmem:[#allocation2 + $0x270] sm:$0xff] 0.0
      %119 = vst [vmem:[#allocation2 + $0x278] sm:$0xff] 0.0
      %120 = vst [vmem:[#allocation2 + $0x280] sm:$0xff] 0.0
      %121 = vst [vmem:[#allocation2 + $0x288] sm:$0xff] 0.0
      %122 = vst [vmem:[#allocation2 + $0x290] sm:$0xff] 0.0
      %123 = vst [vmem:[#allocation2 + $0x298] sm:$0xff] 0.0
      %124 = vst [vmem:[#allocation2 + $0x2a0] sm:$0xff] 0.0
      %125 = vst [vmem:[#allocation2 + $0x2a8] sm:$0xff] 0.0
      %126 = vst [vmem:[#allocation2 + $0x2b0] sm:$0xff] 0.0
      %127 = vst [vmem:[#allocation2 + $0x2b8] sm:$0xff] 0.0
      %128 = vst [vmem:[#allocation2 + $0x2c0] sm:$0xff] 0.0
      %129 = vst [vmem:[#allocation2 + $0x2c8] sm:$0xff] 0.0
      %130 = vst [vmem:[#allocation2 + $0x2d0] sm:$0xff] 0.0
      %131 = vst [vmem:[#allocation2 + $0x2d8] sm:$0xff] 0.0
      %132 = vst [vmem:[#allocation2 + $0x2e0] sm:$0xff] 0.0
      %133 = vst [vmem:[#allocation2 + $0x2e8] sm:$0xff] 0.0
      %134 = vst [vmem:[#allocation2 + $0x2f0] sm:$0xff] 0.0
      %135 = vst [vmem:[#allocation2 + $0x2f8] sm:$0xff] 0.0
      %136 = vst [vmem:[#allocation2 + $0x300] sm:$0xff] 0.0
      %137 = vst [vmem:[#allocation2 + $0x308] sm:$0xff] 0.0
      %138 = vst [vmem:[#allocation2 + $0x310] sm:$0xff] 0.0
      %139 = vst [vmem:[#allocation2 + $0x318] sm:$0xff] 0.0
      %140 = vst [vmem:[#allocation2 + $0x320] sm:$0xff] 0.0
      %141 = vst [vmem:[#allocation2 + $0x328] sm:$0xff] 0.0
      %142 = vst [vmem:[#allocation2 + $0x330] sm:$0xff] 0.0
      %143 = vst [vmem:[#allocation2 + $0x338] sm:$0xff] 0.0
      %144 = vst [vmem:[#allocation2 + $0x340] sm:$0xff] 0.0
      %145 = vst [vmem:[#allocation2 + $0x348] sm:$0xff] 0.0
      %146 = vst [vmem:[#allocation2 + $0x350] sm:$0xff] 0.0
      %147 = vst [vmem:[#allocation2 + $0x358] sm:$0xff] 0.0
      %148 = vst [vmem:[#allocation2 + $0x360] sm:$0xff] 0.0
      %149 = vst [vmem:[#allocation2 + $0x368] sm:$0xff] 0.0
      %150 = vst [vmem:[#allocation2 + $0x370] sm:$0xff] 0.0
      %151 = vst [vmem:[#allocation2 + $0x378] sm:$0xff] 0.0
      %152 = vst [vmem:[#allocation2 + $0x380] sm:$0xff] 0.0
      %153 = vst [vmem:[#allocation2 + $0x388] sm:$0xff] 0.0
      %154 = vst [vmem:[#allocation2 + $0x390] sm:$0xff] 0.0
      %155 = vst [vmem:[#allocation2 + $0x398] sm:$0xff] 0.0
      %156 = vst [vmem:[#allocation2 + $0x3a0] sm:$0xff] 0.0
      %157 = vst [vmem:[#allocation2 + $0x3a8] sm:$0xff] 0.0
      %158 = vst [vmem:[#allocation2 + $0x3b0] sm:$0xff] 0.0
      %159 = vst [vmem:[#allocation2 + $0x3b8] sm:$0xff] 0.0
      %160 = vst [vmem:[#allocation2 + $0x3c0] sm:$0xff] 0.0
      %161 = vst [vmem:[#allocation2 + $0x3c8] sm:$0xff] 0.0
      %162 = vst [vmem:[#allocation2 + $0x3d0] sm:$0xff] 0.0
      %163 = vst [vmem:[#allocation2 + $0x3d8] sm:$0xff] 0.0
      %164 = vst [vmem:[#allocation2 + $0x3e0] sm:$0xff] 0.0
      %165 = vst [vmem:[#allocation2 + $0x3e8] sm:$0xff] 0.0
      %166 = vst [vmem:[#allocation2 + $0x3f0] sm:$0xff] 0.0
      %167 = vst [vmem:[#allocation2 + $0x3f8] sm:$0xff] 0.0
    $region9: #{tpu_custom_call.1} parent=1 // pred_fallthru
      _
    %s168 = sadd.s32 0, 0
    %s169 = smul.u32 %s168, 128
    %s170 = ssub.s32 64, %s169
    %v171 = vlaneseq
    %v172 = vand.u32 %v171, 127
    %v173 = vld [vmem:[%s32] sm:$0xff]
    %v174 = vld [vmem:[%s32 + $0x8] sm:$0xff]
    %v175 = vld [vmem:[%s32 + $0x10] sm:$0xff]
    %v176 = vld [vmem:[%s32 + $0x18] sm:$0xff]
    %v177 = vld [vmem:[%s32 + $0x20] sm:$0xff]
    %v178 = vld [vmem:[%s32 + $0x28] sm:$0xff]
    %v179 = vld [vmem:[%s32 + $0x30] sm:$0xff]
    %v180 = vld [vmem:[%s32 + $0x38] sm:$0xff]
    %v181 = vld [vmem:[%s32 + $0x40] sm:$0xff]
    %v182 = vld [vmem:[%s32 + $0x48] sm:$0xff]
    %v183 = vld [vmem:[%s32 + $0x50] sm:$0xff]
    %v184 = vld [vmem:[%s32 + $0x58] sm:$0xff]
    %v185 = vld [vmem:[%s32 + $0x60] sm:$0xff]
    %v186 = vld [vmem:[%s32 + $0x68] sm:$0xff]
    %v187 = vld [vmem:[%s32 + $0x70] sm:$0xff]
    %v188 = vld [vmem:[%s32 + $0x78] sm:$0xff]
    %v189 = vld [vmem:[%s32 + $0x80] sm:$0xff]
    %v190 = vld [vmem:[%s32 + $0x88] sm:$0xff]
    %v191 = vld [vmem:[%s32 + $0x90] sm:$0xff]
    %v192 = vld [vmem:[%s32 + $0x98] sm:$0xff]
    %v193 = vld [vmem:[%s32 + $0xa0] sm:$0xff]
    %v194 = vld [vmem:[%s32 + $0xa8] sm:$0xff]
    %v195 = vld [vmem:[%s32 + $0xb0] sm:$0xff]
    %v196 = vld [vmem:[%s32 + $0xb8] sm:$0xff]
    %v197 = vld [vmem:[%s32 + $0xc0] sm:$0xff]
    %v198 = vld [vmem:[%s32 + $0xc8] sm:$0xff]
    %v199 = vld [vmem:[%s32 + $0xd0] sm:$0xff]
    %v200 = vld [vmem:[%s32 + $0xd8] sm:$0xff]
    %v201 = vld [vmem:[%s32 + $0xe0] sm:$0xff]
    %v202 = vld [vmem:[%s32 + $0xe8] sm:$0xff]
    %v203 = vld [vmem:[%s32 + $0xf0] sm:$0xff]
    %v204 = vld [vmem:[%s32 + $0xf8] sm:$0xff]
    %v205 = vld [vmem:[%s32 + $0x100] sm:$0xff]
    %v206 = vld [vmem:[%s32 + $0x108] sm:$0xff]
    %v207 = vld [vmem:[%s32 + $0x110] sm:$0xff]
    %v208 = vld [vmem:[%s32 + $0x118] sm:$0xff]
    %v209 = vld [vmem:[%s32 + $0x120] sm:$0xff]
    %v210 = vld [vmem:[%s32 + $0x128] sm:$0xff]
    %v211 = vld [vmem:[%s32 + $0x130] sm:$0xff]
    %v212 = vld [vmem:[%s32 + $0x138] sm:$0xff]
    %v213 = vld [vmem:[%s32 + $0x140] sm:$0xff]
    %v214 = vld [vmem:[%s32 + $0x148] sm:$0xff]
    %v215 = vld [vmem:[%s32 + $0x150] sm:$0xff]
    %v216 = vld [vmem:[%s32 + $0x158] sm:$0xff]
    %v217 = vld [vmem:[%s32 + $0x160] sm:$0xff]
    %v218 = vld [vmem:[%s32 + $0x168] sm:$0xff]
    %v219 = vld [vmem:[%s32 + $0x170] sm:$0xff]
    %v220 = vld [vmem:[%s32 + $0x178] sm:$0xff]
    %v221 = vld [vmem:[%s32 + $0x180] sm:$0xff]
    %v222 = vld [vmem:[%s32 + $0x188] sm:$0xff]
    %v223 = vld [vmem:[%s32 + $0x190] sm:$0xff]
    %v224 = vld [vmem:[%s32 + $0x198] sm:$0xff]
    %v225 = vld [vmem:[%s32 + $0x1a0] sm:$0xff]
    %v226 = vld [vmem:[%s32 + $0x1a8] sm:$0xff]
    %v227 = vld [vmem:[%s32 + $0x1b0] sm:$0xff]
    %v228 = vld [vmem:[%s32 + $0x1b8] sm:$0xff]
    %v229 = vld [vmem:[%s32 + $0x1c0] sm:$0xff]
    %v230 = vld [vmem:[%s32 + $0x1c8] sm:$0xff]
    %v231 = vld [vmem:[%s32 + $0x1d0] sm:$0xff]
    %v232 = vld [vmem:[%s32 + $0x1d8] sm:$0xff]
    %v233 = vld [vmem:[%s32 + $0x1e0] sm:$0xff]
    %v234 = vld [vmem:[%s32 + $0x1e8] sm:$0xff]
    %v235 = vld [vmem:[%s32 + $0x1f0] sm:$0xff]
    %v236 = vld [vmem:[%s32 + $0x1f8] sm:$0xff]
    %v237 = vld [vmem:[%s32 + $0x200] sm:$0xff]
    %v238 = vld [vmem:[%s32 + $0x208] sm:$0xff]
    %v239 = vld [vmem:[%s32 + $0x210] sm:$0xff]
    %v240 = vld [vmem:[%s32 + $0x218] sm:$0xff]
    %v241 = vld [vmem:[%s32 + $0x220] sm:$0xff]
    %v242 = vld [vmem:[%s32 + $0x228] sm:$0xff]
    %v243 = vld [vmem:[%s32 + $0x230] sm:$0xff]
    %v244 = vld [vmem:[%s32 + $0x238] sm:$0xff]
    %v245 = vld [vmem:[%s32 + $0x240] sm:$0xff]
    %v246 = vld [vmem:[%s32 + $0x248] sm:$0xff]
    %v247 = vld [vmem:[%s32 + $0x250] sm:$0xff]
    %v248 = vld [vmem:[%s32 + $0x258] sm:$0xff]
    %v249 = vld [vmem:[%s32 + $0x260] sm:$0xff]
    %v250 = vld [vmem:[%s32 + $0x268] sm:$0xff]
    %v251 = vld [vmem:[%s32 + $0x270] sm:$0xff]
    %v252 = vld [vmem:[%s32 + $0x278] sm:$0xff]
    %v253 = vld [vmem:[%s32 + $0x280] sm:$0xff]
    %v254 = vld [vmem:[%s32 + $0x288] sm:$0xff]
    %v255 = vld [vmem:[%s32 + $0x290] sm:$0xff]
    %v256 = vld [vmem:[%s32 + $0x298] sm:$0xff]
    %v257 = vld [vmem:[%s32 + $0x2a0] sm:$0xff]
    %v258 = vld [vmem:[%s32 + $0x2a8] sm:$0xff]
    %v259 = vld [vmem:[%s32 + $0x2b0] sm:$0xff]
    %v260 = vld [vmem:[%s32 + $0x2b8] sm:$0xff]
    %v261 = vld [vmem:[%s32 + $0x2c0] sm:$0xff]
    %v262 = vld [vmem:[%s32 + $0x2c8] sm:$0xff]
    %v263 = vld [vmem:[%s32 + $0x2d0] sm:$0xff]
    %v264 = vld [vmem:[%s32 + $0x2d8] sm:$0xff]
    %v265 = vld [vmem:[%s32 + $0x2e0] sm:$0xff]
    %v266 = vld [vmem:[%s32 + $0x2e8] sm:$0xff]
    %v267 = vld [vmem:[%s32 + $0x2f0] sm:$0xff]
    %v268 = vld [vmem:[%s32 + $0x2f8] sm:$0xff]
    %v269 = vld [vmem:[%s32 + $0x300] sm:$0xff]
    %v270 = vld [vmem:[%s32 + $0x308] sm:$0xff]
    %v271 = vld [vmem:[%s32 + $0x310] sm:$0xff]
    %v272 = vld [vmem:[%s32 + $0x318] sm:$0xff]
    %v273 = vld [vmem:[%s32 + $0x320] sm:$0xff]
    %v274 = vld [vmem:[%s32 + $0x328] sm:$0xff]
    %v275 = vld [vmem:[%s32 + $0x330] sm:$0xff]
    %v276 = vld [vmem:[%s32 + $0x338] sm:$0xff]
    %v277 = vld [vmem:[%s32 + $0x340] sm:$0xff]
    %v278 = vld [vmem:[%s32 + $0x348] sm:$0xff]
    %v279 = vld [vmem:[%s32 + $0x350] sm:$0xff]
    %v280 = vld [vmem:[%s32 + $0x358] sm:$0xff]
    %v281 = vld [vmem:[%s32 + $0x360] sm:$0xff]
    %v282 = vld [vmem:[%s32 + $0x368] sm:$0xff]
    %v283 = vld [vmem:[%s32 + $0x370] sm:$0xff]
    %v284 = vld [vmem:[%s32 + $0x378] sm:$0xff]
    %v285 = vld [vmem:[%s32 + $0x380] sm:$0xff]
    %v286 = vld [vmem:[%s32 + $0x388] sm:$0xff]
    %v287 = vld [vmem:[%s32 + $0x390] sm:$0xff]
    %v288 = vld [vmem:[%s32 + $0x398] sm:$0xff]
    %v289 = vld [vmem:[%s32 + $0x3a0] sm:$0xff]
    %v290 = vld [vmem:[%s32 + $0x3a8] sm:$0xff]
    %v291 = vld [vmem:[%s32 + $0x3b0] sm:$0xff]
    %v292 = vld [vmem:[%s32 + $0x3b8] sm:$0xff]
    %v293 = vld [vmem:[%s32 + $0x3c0] sm:$0xff]
    %v294 = vld [vmem:[%s32 + $0x3c8] sm:$0xff]
    %v295 = vld [vmem:[%s32 + $0x3d0] sm:$0xff]
    %v296 = vld [vmem:[%s32 + $0x3d8] sm:$0xff]
    %v297 = vld [vmem:[%s32 + $0x3e0] sm:$0xff]
    %v298 = vld [vmem:[%s32 + $0x3e8] sm:$0xff]
    %v299 = vld [vmem:[%s32 + $0x3f0] sm:$0xff]
    %v300 = vld [vmem:[%s32 + $0x3f8] sm:$0xff]
    %v301 = vstv %s170
    %vm302 = vcmp.lt.s32.totalorder %v172, %v301
    %v303 = vsel %vm302, 1, 0
    %vm304 = vcmp.eq.s32.totalorder %v303, 1
    %v305 = vsel %vm304, %v173, 0.0
    %v306 = vsel %vm304, %v174, 0.0
    %v307 = vsel %vm304, %v175, 0.0
    %v308 = vsel %vm304, %v176, 0.0
    %v309 = vsel %vm304, %v177, 0.0
    %v310 = vsel %vm304, %v178, 0.0
    %v311 = vsel %vm304, %v179, 0.0
    %v312 = vsel %vm304, %v180, 0.0
    %v313 = vsel %vm304, %v181, 0.0
    %v314 = vsel %vm304, %v182, 0.0
    %v315 = vsel %vm304, %v183, 0.0
    %v316 = vsel %vm304, %v184, 0.0
    %v317 = vsel %vm304, %v185, 0.0
    %v318 = vsel %vm304, %v186, 0.0
    %v319 = vsel %vm304, %v187, 0.0
    %v320 = vsel %vm304, %v188, 0.0
    %v321 = vsel %vm304, %v189, 0.0
    %v322 = vsel %vm304, %v190, 0.0
    %v323 = vsel %vm304, %v191, 0.0
    %v324 = vsel %vm304, %v192, 0.0
    %v325 = vsel %vm304, %v193, 0.0
    %v326 = vsel %vm304, %v194, 0.0
    %v327 = vsel %vm304, %v195, 0.0
    %v328 = vsel %vm304, %v196, 0.0
    %v329 = vsel %vm304, %v197, 0.0
    %v330 = vsel %vm304, %v198, 0.0
    %v331 = vsel %vm304, %v199, 0.0
    %v332 = vsel %vm304, %v200, 0.0
    %v333 = vsel %vm304, %v201, 0.0
    %v334 = vsel %vm304, %v202, 0.0
    %v335 = vsel %vm304, %v203, 0.0
    %v336 = vsel %vm304, %v204, 0.0
    %v337 = vsel %vm304, %v205, 0.0
    %v338 = vsel %vm304, %v206, 0.0
    %v339 = vsel %vm304, %v207, 0.0
    %v340 = vsel %vm304, %v208, 0.0
    %v341 = vsel %vm304, %v209, 0.0
    %v342 = vsel %vm304, %v210, 0.0
    %v343 = vsel %vm304, %v211, 0.0
    %v344 = vsel %vm304, %v212, 0.0
    %v345 = vsel %vm304, %v213, 0.0
    %v346 = vsel %vm304, %v214, 0.0
    %v347 = vsel %vm304, %v215, 0.0
    %v348 = vsel %vm304, %v216, 0.0
    %v349 = vsel %vm304, %v217, 0.0
    %v350 = vsel %vm304, %v218, 0.0
    %v351 = vsel %vm304, %v219, 0.0
    %v352 = vsel %vm304, %v220, 0.0
    %v353 = vsel %vm304, %v221, 0.0
    %v354 = vsel %vm304, %v222, 0.0
    %v355 = vsel %vm304, %v223, 0.0
    %v356 = vsel %vm304, %v224, 0.0
    %v357 = vsel %vm304, %v225, 0.0
    %v358 = vsel %vm304, %v226, 0.0
    %v359 = vsel %vm304, %v227, 0.0
    %v360 = vsel %vm304, %v228, 0.0
    %v361 = vsel %vm304, %v229, 0.0
    %v362 = vsel %vm304, %v230, 0.0
    %v363 = vsel %vm304, %v231, 0.0
    %v364 = vsel %vm304, %v232, 0.0
    %v365 = vsel %vm304, %v233, 0.0
    %v366 = vsel %vm304, %v234, 0.0
    %v367 = vsel %vm304, %v235, 0.0
    %v368 = vsel %vm304, %v236, 0.0
    %v369 = vsel %vm304, %v237, 0.0
    %v370 = vsel %vm304, %v238, 0.0
    %v371 = vsel %vm304, %v239, 0.0
    %v372 = vsel %vm304, %v240, 0.0
    %v373 = vsel %vm304, %v241, 0.0
    %v374 = vsel %vm304, %v242, 0.0
    %v375 = vsel %vm304, %v243, 0.0
    %v376 = vsel %vm304, %v244, 0.0
    %v377 = vsel %vm304, %v245, 0.0
    %v378 = vsel %vm304, %v246, 0.0
    %v379 = vsel %vm304, %v247, 0.0
    %v380 = vsel %vm304, %v248, 0.0
    %v381 = vsel %vm304, %v249, 0.0
    %v382 = vsel %vm304, %v250, 0.0
    %v383 = vsel %vm304, %v251, 0.0
    %v384 = vsel %vm304, %v252, 0.0
    %v385 = vsel %vm304, %v253, 0.0
    %v386 = vsel %vm304, %v254, 0.0
    %v387 = vsel %vm304, %v255, 0.0
    %v388 = vsel %vm304, %v256, 0.0
    %v389 = vsel %vm304, %v257, 0.0
    %v390 = vsel %vm304, %v258, 0.0
    %v391 = vsel %vm304, %v259, 0.0
    %v392 = vsel %vm304, %v260, 0.0
    %v393 = vsel %vm304, %v261, 0.0
    %v394 = vsel %vm304, %v262, 0.0
    %v395 = vsel %vm304, %v263, 0.0
    %v396 = vsel %vm304, %v264, 0.0
    %v397 = vsel %vm304, %v265, 0.0
    %v398 = vsel %vm304, %v266, 0.0
    %v399 = vsel %vm304, %v267, 0.0
    %v400 = vsel %vm304, %v268, 0.0
    %v401 = vsel %vm304, %v269, 0.0
    %v402 = vsel %vm304, %v270, 0.0
    %v403 = vsel %vm304, %v271, 0.0
    %v404 = vsel %vm304, %v272, 0.0
    %v405 = vsel %vm304, %v273, 0.0
    %v406 = vsel %vm304, %v274, 0.0
    %v407 = vsel %vm304, %v275, 0.0
    %v408 = vsel %vm304, %v276, 0.0
    %v409 = vsel %vm304, %v277, 0.0
    %v410 = vsel %vm304, %v278, 0.0
    %v411 = vsel %vm304, %v279, 0.0
    %v412 = vsel %vm304, %v280, 0.0
    %v413 = vsel %vm304, %v281, 0.0
    %v414 = vsel %vm304, %v282, 0.0
    %v415 = vsel %vm304, %v283, 0.0
    %v416 = vsel %vm304, %v284, 0.0
    %v417 = vsel %vm304, %v285, 0.0
    %v418 = vsel %vm304, %v286, 0.0
    %v419 = vsel %vm304, %v287, 0.0
    %v420 = vsel %vm304, %v288, 0.0
    %v421 = vsel %vm304, %v289, 0.0
    %v422 = vsel %vm304, %v290, 0.0
    %v423 = vsel %vm304, %v291, 0.0
    %v424 = vsel %vm304, %v292, 0.0
    %v425 = vsel %vm304, %v293, 0.0
    %v426 = vsel %vm304, %v294, 0.0
    %v427 = vsel %vm304, %v295, 0.0
    %v428 = vsel %vm304, %v296, 0.0
    %v429 = vsel %vm304, %v297, 0.0
    %v430 = vsel %vm304, %v298, 0.0
    %v431 = vsel %vm304, %v299, 0.0
    %v432 = vsel %vm304, %v300, 0.0
    %v433 = vld [vmem:[#allocation2] sm:$0xff]
    %v434 = vld [vmem:[#allocation2 + $0x8] sm:$0xff]
    %v435 = vld [vmem:[#allocation2 + $0x10] sm:$0xff]
    %v436 = vld [vmem:[#allocation2 + $0x18] sm:$0xff]
    %v437 = vld [vmem:[#allocation2 + $0x20] sm:$0xff]
    %v438 = vld [vmem:[#allocation2 + $0x28] sm:$0xff]
    %v439 = vld [vmem:[#allocation2 + $0x30] sm:$0xff]
    %v440 = vld [vmem:[#allocation2 + $0x38] sm:$0xff]
    %v441 = vld [vmem:[#allocation2 + $0x40] sm:$0xff]
    %v442 = vld [vmem:[#allocation2 + $0x48] sm:$0xff]
    %v443 = vld [vmem:[#allocation2 + $0x50] sm:$0xff]
    %v444 = vld [vmem:[#allocation2 + $0x58] sm:$0xff]
    %v445 = vld [vmem:[#allocation2 + $0x60] sm:$0xff]
    %v446 = vld [vmem:[#allocation2 + $0x68] sm:$0xff]
    %v447 = vld [vmem:[#allocation2 + $0x70] sm:$0xff]
    %v448 = vld [vmem:[#allocation2 + $0x78] sm:$0xff]
    %v449 = vld [vmem:[#allocation2 + $0x80] sm:$0xff]
    %v450 = vld [vmem:[#allocation2 + $0x88] sm:$0xff]
    %v451 = vld [vmem:[#allocation2 + $0x90] sm:$0xff]
    %v452 = vld [vmem:[#allocation2 + $0x98] sm:$0xff]
    %v453 = vld [vmem:[#allocation2 + $0xa0] sm:$0xff]
    %v454 = vld [vmem:[#allocation2 + $0xa8] sm:$0xff]
    %v455 = vld [vmem:[#allocation2 + $0xb0] sm:$0xff]
    %v456 = vld [vmem:[#allocation2 + $0xb8] sm:$0xff]
    %v457 = vld [vmem:[#allocation2 + $0xc0] sm:$0xff]
    %v458 = vld [vmem:[#allocation2 + $0xc8] sm:$0xff]
    %v459 = vld [vmem:[#allocation2 + $0xd0] sm:$0xff]
    %v460 = vld [vmem:[#allocation2 + $0xd8] sm:$0xff]
    %v461 = vld [vmem:[#allocation2 + $0xe0] sm:$0xff]
    %v462 = vld [vmem:[#allocation2 + $0xe8] sm:$0xff]
    %v463 = vld [vmem:[#allocation2 + $0xf0] sm:$0xff]
    %v464 = vld [vmem:[#allocation2 + $0xf8] sm:$0xff]
    %v465 = vld [vmem:[#allocation2 + $0x100] sm:$0xff]
    %v466 = vld [vmem:[#allocation2 + $0x108] sm:$0xff]
    %v467 = vld [vmem:[#allocation2 + $0x110] sm:$0xff]
    %v468 = vld [vmem:[#allocation2 + $0x118] sm:$0xff]
    %v469 = vld [vmem:[#allocation2 + $0x120] sm:$0xff]
    %v470 = vld [vmem:[#allocation2 + $0x128] sm:$0xff]
    %v471 = vld [vmem:[#allocation2 + $0x130] sm:$0xff]
    %v472 = vld [vmem:[#allocation2 + $0x138] sm:$0xff]
    %v473 = vld [vmem:[#allocation2 + $0x140] sm:$0xff]
    %v474 = vld [vmem:[#allocation2 + $0x148] sm:$0xff]
    %v475 = vld [vmem:[#allocation2 + $0x150] sm:$0xff]
    %v476 = vld [vmem:[#allocation2 + $0x158] sm:$0xff]
    %v477 = vld [vmem:[#allocation2 + $0x160] sm:$0xff]
    %v478 = vld [vmem:[#allocation2 + $0x168] sm:$0xff]
    %v479 = vld [vmem:[#allocation2 + $0x170] sm:$0xff]
    %v480 = vld [vmem:[#allocation2 + $0x178] sm:$0xff]
    %v481 = vld [vmem:[#allocation2 + $0x180] sm:$0xff]
    %v482 = vld [vmem:[#allocation2 + $0x188] sm:$0xff]
    %v483 = vld [vmem:[#allocation2 + $0x190] sm:$0xff]
    %v484 = vld [vmem:[#allocation2 + $0x198] sm:$0xff]
    %v485 = vld [vmem:[#allocation2 + $0x1a0] sm:$0xff]
    %v486 = vld [vmem:[#allocation2 + $0x1a8] sm:$0xff]
    %v487 = vld [vmem:[#allocation2 + $0x1b0] sm:$0xff]
    %v488 = vld [vmem:[#allocation2 + $0x1b8] sm:$0xff]
    %v489 = vld [vmem:[#allocation2 + $0x1c0] sm:$0xff]
    %v490 = vld [vmem:[#allocation2 + $0x1c8] sm:$0xff]
    %v491 = vld [vmem:[#allocation2 + $0x1d0] sm:$0xff]
    %v492 = vld [vmem:[#allocation2 + $0x1d8] sm:$0xff]
    %v493 = vld [vmem:[#allocation2 + $0x1e0] sm:$0xff]
    %v494 = vld [vmem:[#allocation2 + $0x1e8] sm:$0xff]
    %v495 = vld [vmem:[#allocation2 + $0x1f0] sm:$0xff]
    %v496 = vld [vmem:[#allocation2 + $0x1f8] sm:$0xff]
    %v497 = vld [vmem:[#allocation2 + $0x200] sm:$0xff]
    %v498 = vld [vmem:[#allocation2 + $0x208] sm:$0xff]
    %v499 = vld [vmem:[#allocation2 + $0x210] sm:$0xff]
    %v500 = vld [vmem:[#allocation2 + $0x218] sm:$0xff]
    %v501 = vld [vmem:[#allocation2 + $0x220] sm:$0xff]
    %v502 = vld [vmem:[#allocation2 + $0x228] sm:$0xff]
    %v503 = vld [vmem:[#allocation2 + $0x230] sm:$0xff]
    %v504 = vld [vmem:[#allocation2 + $0x238] sm:$0xff]
    %v505 = vld [vmem:[#allocation2 + $0x240] sm:$0xff]
    %v506 = vld [vmem:[#allocation2 + $0x248] sm:$0xff]
    %v507 = vld [vmem:[#allocation2 + $0x250] sm:$0xff]
    %v508 = vld [vmem:[#allocation2 + $0x258] sm:$0xff]
    %v509 = vld [vmem:[#allocation2 + $0x260] sm:$0xff]
    %v510 = vld [vmem:[#allocation2 + $0x268] sm:$0xff]
    %v511 = vld [vmem:[#allocation2 + $0x270] sm:$0xff]
    %v512 = vld [vmem:[#allocation2 + $0x278] sm:$0xff]
    %v513 = vld [vmem:[#allocation2 + $0x280] sm:$0xff]
    %v514 = vld [vmem:[#allocation2 + $0x288] sm:$0xff]
    %v515 = vld [vmem:[#allocation2 + $0x290] sm:$0xff]
    %v516 = vld [vmem:[#allocation2 + $0x298] sm:$0xff]
    %v517 = vld [vmem:[#allocation2 + $0x2a0] sm:$0xff]
    %v518 = vld [vmem:[#allocation2 + $0x2a8] sm:$0xff]
    %v519 = vld [vmem:[#allocation2 + $0x2b0] sm:$0xff]
    %v520 = vld [vmem:[#allocation2 + $0x2b8] sm:$0xff]
    %v521 = vld [vmem:[#allocation2 + $0x2c0] sm:$0xff]
    %v522 = vld [vmem:[#allocation2 + $0x2c8] sm:$0xff]
    %v523 = vld [vmem:[#allocation2 + $0x2d0] sm:$0xff]
    %v524 = vld [vmem:[#allocation2 + $0x2d8] sm:$0xff]
    %v525 = vld [vmem:[#allocation2 + $0x2e0] sm:$0xff]
    %v526 = vld [vmem:[#allocation2 + $0x2e8] sm:$0xff]
    %v527 = vld [vmem:[#allocation2 + $0x2f0] sm:$0xff]
    %v528 = vld [vmem:[#allocation2 + $0x2f8] sm:$0xff]
    %v529 = vld [vmem:[#allocation2 + $0x300] sm:$0xff]
    %v530 = vld [vmem:[#allocation2 + $0x308] sm:$0xff]
    %v531 = vld [vmem:[#allocation2 + $0x310] sm:$0xff]
    %v532 = vld [vmem:[#allocation2 + $0x318] sm:$0xff]
    %v533 = vld [vmem:[#allocation2 + $0x320] sm:$0xff]
    %v534 = vld [vmem:[#allocation2 + $0x328] sm:$0xff]
    %v535 = vld [vmem:[#allocation2 + $0x330] sm:$0xff]
    %v536 = vld [vmem:[#allocation2 + $0x338] sm:$0xff]
    %v537 = vld [vmem:[#allocation2 + $0x340] sm:$0xff]
    %v538 = vld [vmem:[#allocation2 + $0x348] sm:$0xff]
    %v539 = vld [vmem:[#allocation2 + $0x350] sm:$0xff]
    %v540 = vld [vmem:[#allocation2 + $0x358] sm:$0xff]
    %v541 = vld [vmem:[#allocation2 + $0x360] sm:$0xff]
    %v542 = vld [vmem:[#allocation2 + $0x368] sm:$0xff]
    %v543 = vld [vmem:[#allocation2 + $0x370] sm:$0xff]
    %v544 = vld [vmem:[#allocation2 + $0x378] sm:$0xff]
    %v545 = vld [vmem:[#allocation2 + $0x380] sm:$0xff]
    %v546 = vld [vmem:[#allocation2 + $0x388] sm:$0xff]
    %v547 = vld [vmem:[#allocation2 + $0x390] sm:$0xff]
    %v548 = vld [vmem:[#allocation2 + $0x398] sm:$0xff]
    %v549 = vld [vmem:[#allocation2 + $0x3a0] sm:$0xff]
    %v550 = vld [vmem:[#allocation2 + $0x3a8] sm:$0xff]
    %v551 = vld [vmem:[#allocation2 + $0x3b0] sm:$0xff]
    %v552 = vld [vmem:[#allocation2 + $0x3b8] sm:$0xff]
    %v553 = vld [vmem:[#allocation2 + $0x3c0] sm:$0xff]
    %v554 = vld [vmem:[#allocation2 + $0x3c8] sm:$0xff]
    %v555 = vld [vmem:[#allocation2 + $0x3d0] sm:$0xff]
    %v556 = vld [vmem:[#allocation2 + $0x3d8] sm:$0xff]
    %v557 = vld [vmem:[#allocation2 + $0x3e0] sm:$0xff]
    %v558 = vld [vmem:[#allocation2 + $0x3e8] sm:$0xff]
    %v559 = vld [vmem:[#allocation2 + $0x3f0] sm:$0xff]
    %v560 = vld [vmem:[#allocation2 + $0x3f8] sm:$0xff]
    %v561 = vadd.f32 %v433, %v305
    %v562 = vadd.f32 %v434, %v306
    %v563 = vadd.f32 %v435, %v307
    %v564 = vadd.f32 %v436, %v308
    %v565 = vadd.f32 %v437, %v309
    %v566 = vadd.f32 %v438, %v310
    %v567 = vadd.f32 %v439, %v311
    %v568 = vadd.f32 %v440, %v312
    %v569 = vadd.f32 %v441, %v313
    %v570 = vadd.f32 %v442, %v314
    %v571 = vadd.f32 %v443, %v315
    %v572 = vadd.f32 %v444, %v316
    %v573 = vadd.f32 %v445, %v317
    %v574 = vadd.f32 %v446, %v318
    %v575 = vadd.f32 %v447, %v319
    %v576 = vadd.f32 %v448, %v320
    %v577 = vadd.f32 %v449, %v321
    %v578 = vadd.f32 %v450, %v322
    %v579 = vadd.f32 %v451, %v323
    %v580 = vadd.f32 %v452, %v324
    %v581 = vadd.f32 %v453, %v325
    %v582 = vadd.f32 %v454, %v326
    %v583 = vadd.f32 %v455, %v327
    %v584 = vadd.f32 %v456, %v328
    %v585 = vadd.f32 %v457, %v329
    %v586 = vadd.f32 %v458, %v330
    %v587 = vadd.f32 %v459, %v331
    %v588 = vadd.f32 %v460, %v332
    %v589 = vadd.f32 %v461, %v333
    %v590 = vadd.f32 %v462, %v334
    %v591 = vadd.f32 %v463, %v335
    %v592 = vadd.f32 %v464, %v336
    %v593 = vadd.f32 %v465, %v337
    %v594 = vadd.f32 %v466, %v338
    %v595 = vadd.f32 %v467, %v339
    %v596 = vadd.f32 %v468, %v340
    %v597 = vadd.f32 %v469, %v341
    %v598 = vadd.f32 %v470, %v342
    %v599 = vadd.f32 %v471, %v343
    %v600 = vadd.f32 %v472, %v344
    %v601 = vadd.f32 %v473, %v345
    %v602 = vadd.f32 %v474, %v346
    %v603 = vadd.f32 %v475, %v347
    %v604 = vadd.f32 %v476, %v348
    %v605 = vadd.f32 %v477, %v349
    %v606 = vadd.f32 %v478, %v350
    %v607 = vadd.f32 %v479, %v351
    %v608 = vadd.f32 %v480, %v352
    %v609 = vadd.f32 %v481, %v353
    %v610 = vadd.f32 %v482, %v354
    %v611 = vadd.f32 %v483, %v355
    %v612 = vadd.f32 %v484, %v356
    %v613 = vadd.f32 %v485, %v357
    %v614 = vadd.f32 %v486, %v358
    %v615 = vadd.f32 %v487, %v359
    %v616 = vadd.f32 %v488, %v360
    %v617 = vadd.f32 %v489, %v361
    %v618 = vadd.f32 %v490, %v362
    %v619 = vadd.f32 %v491, %v363
    %v620 = vadd.f32 %v492, %v364
    %v621 = vadd.f32 %v493, %v365
    %v622 = vadd.f32 %v494, %v366
    %v623 = vadd.f32 %v495, %v367
    %v624 = vadd.f32 %v496, %v368
    %v625 = vadd.f32 %v497, %v369
    %v626 = vadd.f32 %v498, %v370
    %v627 = vadd.f32 %v499, %v371
    %v628 = vadd.f32 %v500, %v372
    %v629 = vadd.f32 %v501, %v373
    %v630 = vadd.f32 %v502, %v374
    %v631 = vadd.f32 %v503, %v375
    %v632 = vadd.f32 %v504, %v376
    %v633 = vadd.f32 %v505, %v377
    %v634 = vadd.f32 %v506, %v378
    %v635 = vadd.f32 %v507, %v379
    %v636 = vadd.f32 %v508, %v380
    %v637 = vadd.f32 %v509, %v381
    %v638 = vadd.f32 %v510, %v382
    %v639 = vadd.f32 %v511, %v383
    %v640 = vadd.f32 %v512, %v384
    %v641 = vadd.f32 %v513, %v385
    %v642 = vadd.f32 %v514, %v386
    %v643 = vadd.f32 %v515, %v387
    %v644 = vadd.f32 %v516, %v388
    %v645 = vadd.f32 %v517, %v389
    %v646 = vadd.f32 %v518, %v390
    %v647 = vadd.f32 %v519, %v391
    %v648 = vadd.f32 %v520, %v392
    %v649 = vadd.f32 %v521, %v393
    %v650 = vadd.f32 %v522, %v394
    %v651 = vadd.f32 %v523, %v395
    %v652 = vadd.f32 %v524, %v396
    %v653 = vadd.f32 %v525, %v397
    %v654 = vadd.f32 %v526, %v398
    %v655 = vadd.f32 %v527, %v399
    %v656 = vadd.f32 %v528, %v400
    %v657 = vadd.f32 %v529, %v401
    %v658 = vadd.f32 %v530, %v402
    %v659 = vadd.f32 %v531, %v403
    %v660 = vadd.f32 %v532, %v404
    %v661 = vadd.f32 %v533, %v405
    %v662 = vadd.f32 %v534, %v406
    %v663 = vadd.f32 %v535, %v407
    %v664 = vadd.f32 %v536, %v408
    %v665 = vadd.f32 %v537, %v409
    %v666 = vadd.f32 %v538, %v410
    %v667 = vadd.f32 %v539, %v411
    %v668 = vadd.f32 %v540, %v412
    %v669 = vadd.f32 %v541, %v413
    %v670 = vadd.f32 %v542, %v414
    %v671 = vadd.f32 %v543, %v415
    %v672 = vadd.f32 %v544, %v416
    %v673 = vadd.f32 %v545, %v417
    %v674 = vadd.f32 %v546, %v418
    %v675 = vadd.f32 %v547, %v419
    %v676 = vadd.f32 %v548, %v420
    %v677 = vadd.f32 %v549, %v421
    %v678 = vadd.f32 %v550, %v422
    %v679 = vadd.f32 %v551, %v423
    %v680 = vadd.f32 %v552, %v424
    %v681 = vadd.f32 %v553, %v425
    %v682 = vadd.f32 %v554, %v426
    %v683 = vadd.f32 %v555, %v427
    %v684 = vadd.f32 %v556, %v428
    %v685 = vadd.f32 %v557, %v429
    %v686 = vadd.f32 %v558, %v430
    %v687 = vadd.f32 %v559, %v431
    %v688 = vadd.f32 %v560, %v432
    %689 = vst [vmem:[#allocation2] sm:$0xff] %v561
    %690 = vst [vmem:[#allocation2 + $0x8] sm:$0xff] %v562
    %691 = vst [vmem:[#allocation2 + $0x10] sm:$0xff] %v563
    %692 = vst [vmem:[#allocation2 + $0x18] sm:$0xff] %v564
    %693 = vst [vmem:[#allocation2 + $0x20] sm:$0xff] %v565
    %694 = vst [vmem:[#allocation2 + $0x28] sm:$0xff] %v566
    %695 = vst [vmem:[#allocation2 + $0x30] sm:$0xff] %v567
    %696 = vst [vmem:[#allocation2 + $0x38] sm:$0xff] %v568
    %697 = vst [vmem:[#allocation2 + $0x40] sm:$0xff] %v569
    %698 = vst [vmem:[#allocation2 + $0x48] sm:$0xff] %v570
    %699 = vst [vmem:[#allocation2 + $0x50] sm:$0xff] %v571
    %700 = vst [vmem:[#allocation2 + $0x58] sm:$0xff] %v572
    %701 = vst [vmem:[#allocation2 + $0x60] sm:$0xff] %v573
    %702 = vst [vmem:[#allocation2 + $0x68] sm:$0xff] %v574
    %703 = vst [vmem:[#allocation2 + $0x70] sm:$0xff] %v575
    %704 = vst [vmem:[#allocation2 + $0x78] sm:$0xff] %v576
    %705 = vst [vmem:[#allocation2 + $0x80] sm:$0xff] %v577
    %706 = vst [vmem:[#allocation2 + $0x88] sm:$0xff] %v578
    %707 = vst [vmem:[#allocation2 + $0x90] sm:$0xff] %v579
    %708 = vst [vmem:[#allocation2 + $0x98] sm:$0xff] %v580
    %709 = vst [vmem:[#allocation2 + $0xa0] sm:$0xff] %v581
    %710 = vst [vmem:[#allocation2 + $0xa8] sm:$0xff] %v582
    %711 = vst [vmem:[#allocation2 + $0xb0] sm:$0xff] %v583
    %712 = vst [vmem:[#allocation2 + $0xb8] sm:$0xff] %v584
    %713 = vst [vmem:[#allocation2 + $0xc0] sm:$0xff] %v585
    %714 = vst [vmem:[#allocation2 + $0xc8] sm:$0xff] %v586
    %715 = vst [vmem:[#allocation2 + $0xd0] sm:$0xff] %v587
    %716 = vst [vmem:[#allocation2 + $0xd8] sm:$0xff] %v588
    %717 = vst [vmem:[#allocation2 + $0xe0] sm:$0xff] %v589
    %718 = vst [vmem:[#allocation2 + $0xe8] sm:$0xff] %v590
    %719 = vst [vmem:[#allocation2 + $0xf0] sm:$0xff] %v591
    %720 = vst [vmem:[#allocation2 + $0xf8] sm:$0xff] %v592
    %721 = vst [vmem:[#allocation2 + $0x100] sm:$0xff] %v593
    %722 = vst [vmem:[#allocation2 + $0x108] sm:$0xff] %v594
    %723 = vst [vmem:[#allocation2 + $0x110] sm:$0xff] %v595
    %724 = vst [vmem:[#allocation2 + $0x118] sm:$0xff] %v596
    %725 = vst [vmem:[#allocation2 + $0x120] sm:$0xff] %v597
    %726 = vst [vmem:[#allocation2 + $0x128] sm:$0xff] %v598
    %727 = vst [vmem:[#allocation2 + $0x130] sm:$0xff] %v599
    %728 = vst [vmem:[#allocation2 + $0x138] sm:$0xff] %v600
    %729 = vst [vmem:[#allocation2 + $0x140] sm:$0xff] %v601
    %730 = vst [vmem:[#allocation2 + $0x148] sm:$0xff] %v602
    %731 = vst [vmem:[#allocation2 + $0x150] sm:$0xff] %v603
    %732 = vst [vmem:[#allocation2 + $0x158] sm:$0xff] %v604
    %733 = vst [vmem:[#allocation2 + $0x160] sm:$0xff] %v605
    %734 = vst [vmem:[#allocation2 + $0x168] sm:$0xff] %v606
    %735 = vst [vmem:[#allocation2 + $0x170] sm:$0xff] %v607
    %736 = vst [vmem:[#allocation2 + $0x178] sm:$0xff] %v608
    %737 = vst [vmem:[#allocation2 + $0x180] sm:$0xff] %v609
    %738 = vst [vmem:[#allocation2 + $0x188] sm:$0xff] %v610
    %739 = vst [vmem:[#allocation2 + $0x190] sm:$0xff] %v611
    %740 = vst [vmem:[#allocation2 + $0x198] sm:$0xff] %v612
    %741 = vst [vmem:[#allocation2 + $0x1a0] sm:$0xff] %v613
    %742 = vst [vmem:[#allocation2 + $0x1a8] sm:$0xff] %v614
    %743 = vst [vmem:[#allocation2 + $0x1b0] sm:$0xff] %v615
    %744 = vst [vmem:[#allocation2 + $0x1b8] sm:$0xff] %v616
    %745 = vst [vmem:[#allocation2 + $0x1c0] sm:$0xff] %v617
    %746 = vst [vmem:[#allocation2 + $0x1c8] sm:$0xff] %v618
    %747 = vst [vmem:[#allocation2 + $0x1d0] sm:$0xff] %v619
    %748 = vst [vmem:[#allocation2 + $0x1d8] sm:$0xff] %v620
    %749 = vst [vmem:[#allocation2 + $0x1e0] sm:$0xff] %v621
    %750 = vst [vmem:[#allocation2 + $0x1e8] sm:$0xff] %v622
    %751 = vst [vmem:[#allocation2 + $0x1f0] sm:$0xff] %v623
    %752 = vst [vmem:[#allocation2 + $0x1f8] sm:$0xff] %v624
    %753 = vst [vmem:[#allocation2 + $0x200] sm:$0xff] %v625
    %754 = vst [vmem:[#allocation2 + $0x208] sm:$0xff] %v626
    %755 = vst [vmem:[#allocation2 + $0x210] sm:$0xff] %v627
    %756 = vst [vmem:[#allocation2 + $0x218] sm:$0xff] %v628
    %757 = vst [vmem:[#allocation2 + $0x220] sm:$0xff] %v629
    %758 = vst [vmem:[#allocation2 + $0x228] sm:$0xff] %v630
    %759 = vst [vmem:[#allocation2 + $0x230] sm:$0xff] %v631
    %760 = vst [vmem:[#allocation2 + $0x238] sm:$0xff] %v632
    %761 = vst [vmem:[#allocation2 + $0x240] sm:$0xff] %v633
    %762 = vst [vmem:[#allocation2 + $0x248] sm:$0xff] %v634
    %763 = vst [vmem:[#allocation2 + $0x250] sm:$0xff] %v635
    %764 = vst [vmem:[#allocation2 + $0x258] sm:$0xff] %v636
    %765 = vst [vmem:[#allocation2 + $0x260] sm:$0xff] %v637
    %766 = vst [vmem:[#allocation2 + $0x268] sm:$0xff] %v638
    %767 = vst [vmem:[#allocation2 + $0x270] sm:$0xff] %v639
    %768 = vst [vmem:[#allocation2 + $0x278] sm:$0xff] %v640
    %769 = vst [vmem:[#allocation2 + $0x280] sm:$0xff] %v641
    %770 = vst [vmem:[#allocation2 + $0x288] sm:$0xff] %v642
    %771 = vst [vmem:[#allocation2 + $0x290] sm:$0xff] %v643
    %772 = vst [vmem:[#allocation2 + $0x298] sm:$0xff] %v644
    %773 = vst [vmem:[#allocation2 + $0x2a0] sm:$0xff] %v645
    %774 = vst [vmem:[#allocation2 + $0x2a8] sm:$0xff] %v646
    %775 = vst [vmem:[#allocation2 + $0x2b0] sm:$0xff] %v647
    %776 = vst [vmem:[#allocation2 + $0x2b8] sm:$0xff] %v648
    %777 = vst [vmem:[#allocation2 + $0x2c0] sm:$0xff] %v649
    %778 = vst [vmem:[#allocation2 + $0x2c8] sm:$0xff] %v650
    %779 = vst [vmem:[#allocation2 + $0x2d0] sm:$0xff] %v651
    %780 = vst [vmem:[#allocation2 + $0x2d8] sm:$0xff] %v652
    %781 = vst [vmem:[#allocation2 + $0x2e0] sm:$0xff] %v653
    %782 = vst [vmem:[#allocation2 + $0x2e8] sm:$0xff] %v654
    %783 = vst [vmem:[#allocation2 + $0x2f0] sm:$0xff] %v655
    %784 = vst [vmem:[#allocation2 + $0x2f8] sm:$0xff] %v656
    %785 = vst [vmem:[#allocation2 + $0x300] sm:$0xff] %v657
    %786 = vst [vmem:[#allocation2 + $0x308] sm:$0xff] %v658
    %787 = vst [vmem:[#allocation2 + $0x310] sm:$0xff] %v659
    %788 = vst [vmem:[#allocation2 + $0x318] sm:$0xff] %v660
    %789 = vst [vmem:[#allocation2 + $0x320] sm:$0xff] %v661
    %790 = vst [vmem:[#allocation2 + $0x328] sm:$0xff] %v662
    %791 = vst [vmem:[#allocation2 + $0x330] sm:$0xff] %v663
    %792 = vst [vmem:[#allocation2 + $0x338] sm:$0xff] %v664
    %793 = vst [vmem:[#allocation2 + $0x340] sm:$0xff] %v665
    %794 = vst [vmem:[#allocation2 + $0x348] sm:$0xff] %v666
    %795 = vst [vmem:[#allocation2 + $0x350] sm:$0xff] %v667
    %796 = vst [vmem:[#allocation2 + $0x358] sm:$0xff] %v668
    %797 = vst [vmem:[#allocation2 + $0x360] sm:$0xff] %v669
    %798 = vst [vmem:[#allocation2 + $0x368] sm:$0xff] %v670
    %799 = vst [vmem:[#allocation2 + $0x370] sm:$0xff] %v671
    %800 = vst [vmem:[#allocation2 + $0x378] sm:$0xff] %v672
    %801 = vst [vmem:[#allocation2 + $0x380] sm:$0xff] %v673
    %802 = vst [vmem:[#allocation2 + $0x388] sm:$0xff] %v674
    %803 = vst [vmem:[#allocation2 + $0x390] sm:$0xff] %v675
    %804 = vst [vmem:[#allocation2 + $0x398] sm:$0xff] %v676
    %805 = vst [vmem:[#allocation2 + $0x3a0] sm:$0xff] %v677
    %806 = vst [vmem:[#allocation2 + $0x3a8] sm:$0xff] %v678
    %807 = vst [vmem:[#allocation2 + $0x3b0] sm:$0xff] %v679
    %808 = vst [vmem:[#allocation2 + $0x3b8] sm:$0xff] %v680
    %809 = vst [vmem:[#allocation2 + $0x3c0] sm:$0xff] %v681
    %810 = vst [vmem:[#allocation2 + $0x3c8] sm:$0xff] %v682
    %811 = vst [vmem:[#allocation2 + $0x3d0] sm:$0xff] %v683
    %812 = vst [vmem:[#allocation2 + $0x3d8] sm:$0xff] %v684
    %813 = vst [vmem:[#allocation2 + $0x3e0] sm:$0xff] %v685
    %814 = vst [vmem:[#allocation2 + $0x3e8] sm:$0xff] %v686
    %815 = vst [vmem:[#allocation2 + $0x3f0] sm:$0xff] %v687
    %816 = vst [vmem:[#allocation2 + $0x3f8] sm:$0xff] %v688
    // Predicated region
    $region10: #{tpu_custom_call.1} parent=1 // pred_check
      %p817 = pneg %p36
    $region11: #{tpu_custom_call.1} parent=1 // pred_check_branch
      %819 = sbr.rel (%p817) target = $region13
    $region12: #{tpu_custom_call.1} parent=1 // pred_region
      %v820 = vld [vmem:[#allocation2] sm:$0xff]
      %v821 = vld [vmem:[#allocation2 + $0x8] sm:$0xff]
      %v822 = vld [vmem:[#allocation2 + $0x10] sm:$0xff]
      %v823 = vld [vmem:[#allocation2 + $0x18] sm:$0xff]
      %v824 = vld [vmem:[#allocation2 + $0x20] sm:$0xff]
      %v825 = vld [vmem:[#allocation2 + $0x28] sm:$0xff]
      %v826 = vld [vmem:[#allocation2 + $0x30] sm:$0xff]
      %v827 = vld [vmem:[#allocation2 + $0x38] sm:$0xff]
      %v828 = vld [vmem:[#allocation2 + $0x40] sm:$0xff]
      %v829 = vld [vmem:[#allocation2 + $0x48] sm:$0xff]
      %v830 = vld [vmem:[#allocation2 + $0x50] sm:$0xff]
      %v831 = vld [vmem:[#allocation2 + $0x58] sm:$0xff]
      %v832 = vld [vmem:[#allocation2 + $0x60] sm:$0xff]
      %v833 = vld [vmem:[#allocation2 + $0x68] sm:$0xff]
      %v834 = vld [vmem:[#allocation2 + $0x70] sm:$0xff]
      %v835 = vld [vmem:[#allocation2 + $0x78] sm:$0xff]
      %v836 = vld [vmem:[#allocation2 + $0x80] sm:$0xff]
      %v837 = vld [vmem:[#allocation2 + $0x88] sm:$0xff]
      %v838 = vld [vmem:[#allocation2 + $0x90] sm:$0xff]
      %v839 = vld [vmem:[#allocation2 + $0x98] sm:$0xff]
      %v840 = vld [vmem:[#allocation2 + $0xa0] sm:$0xff]
      %v841 = vld [vmem:[#allocation2 + $0xa8] sm:$0xff]
      %v842 = vld [vmem:[#allocation2 + $0xb0] sm:$0xff]
      %v843 = vld [vmem:[#allocation2 + $0xb8] sm:$0xff]
      %v844 = vld [vmem:[#allocation2 + $0xc0] sm:$0xff]
      %v845 = vld [vmem:[#allocation2 + $0xc8] sm:$0xff]
      %v846 = vld [vmem:[#allocation2 + $0xd0] sm:$0xff]
      %v847 = vld [vmem:[#allocation2 + $0xd8] sm:$0xff]
      %v848 = vld [vmem:[#allocation2 + $0xe0] sm:$0xff]
      %v849 = vld [vmem:[#allocation2 + $0xe8] sm:$0xff]
      %v850 = vld [vmem:[#allocation2 + $0xf0] sm:$0xff]
      %v851 = vld [vmem:[#allocation2 + $0xf8] sm:$0xff]
      %v852 = vld [vmem:[#allocation2 + $0x100] sm:$0xff]
      %v853 = vld [vmem:[#allocation2 + $0x108] sm:$0xff]
      %v854 = vld [vmem:[#allocation2 + $0x110] sm:$0xff]
      %v855 = vld [vmem:[#allocation2 + $0x118] sm:$0xff]
      %v856 = vld [vmem:[#allocation2 + $0x120] sm:$0xff]
      %v857 = vld [vmem:[#allocation2 + $0x128] sm:$0xff]
      %v858 = vld [vmem:[#allocation2 + $0x130] sm:$0xff]
      %v859 = vld [vmem:[#allocation2 + $0x138] sm:$0xff]
      %v860 = vld [vmem:[#allocation2 + $0x140] sm:$0xff]
      %v861 = vld [vmem:[#allocation2 + $0x148] sm:$0xff]
      %v862 = vld [vmem:[#allocation2 + $0x150] sm:$0xff]
      %v863 = vld [vmem:[#allocation2 + $0x158] sm:$0xff]
      %v864 = vld [vmem:[#allocation2 + $0x160] sm:$0xff]
      %v865 = vld [vmem:[#allocation2 + $0x168] sm:$0xff]
      %v866 = vld [vmem:[#allocation2 + $0x170] sm:$0xff]
      %v867 = vld [vmem:[#allocation2 + $0x178] sm:$0xff]
      %v868 = vld [vmem:[#allocation2 + $0x180] sm:$0xff]
      %v869 = vld [vmem:[#allocation2 + $0x188] sm:$0xff]
      %v870 = vld [vmem:[#allocation2 + $0x190] sm:$0xff]
      %v871 = vld [vmem:[#allocation2 + $0x198] sm:$0xff]
      %v872 = vld [vmem:[#allocation2 + $0x1a0] sm:$0xff]
      %v873 = vld [vmem:[#allocation2 + $0x1a8] sm:$0xff]
      %v874 = vld [vmem:[#allocation2 + $0x1b0] sm:$0xff]
      %v875 = vld [vmem:[#allocation2 + $0x1b8] sm:$0xff]
      %v876 = vld [vmem:[#allocation2 + $0x1c0] sm:$0xff]
      %v877 = vld [vmem:[#allocation2 + $0x1c8] sm:$0xff]
      %v878 = vld [vmem:[#allocation2 + $0x1d0] sm:$0xff]
      %v879 = vld [vmem:[#allocation2 + $0x1d8] sm:$0xff]
      %v880 = vld [vmem:[#allocation2 + $0x1e0] sm:$0xff]
      %v881 = vld [vmem:[#allocation2 + $0x1e8] sm:$0xff]
      %v882 = vld [vmem:[#allocation2 + $0x1f0] sm:$0xff]
      %v883 = vld [vmem:[#allocation2 + $0x1f8] sm:$0xff]
      %v884 = vld [vmem:[#allocation2 + $0x200] sm:$0xff]
      %v885 = vld [vmem:[#allocation2 + $0x208] sm:$0xff]
      %v886 = vld [vmem:[#allocation2 + $0x210] sm:$0xff]
      %v887 = vld [vmem:[#allocation2 + $0x218] sm:$0xff]
      %v888 = vld [vmem:[#allocation2 + $0x220] sm:$0xff]
      %v889 = vld [vmem:[#allocation2 + $0x228] sm:$0xff]
      %v890 = vld [vmem:[#allocation2 + $0x230] sm:$0xff]
      %v891 = vld [vmem:[#allocation2 + $0x238] sm:$0xff]
      %v892 = vld [vmem:[#allocation2 + $0x240] sm:$0xff]
      %v893 = vld [vmem:[#allocation2 + $0x248] sm:$0xff]
      %v894 = vld [vmem:[#allocation2 + $0x250] sm:$0xff]
      %v895 = vld [vmem:[#allocation2 + $0x258] sm:$0xff]
      %v896 = vld [vmem:[#allocation2 + $0x260] sm:$0xff]
      %v897 = vld [vmem:[#allocation2 + $0x268] sm:$0xff]
      %v898 = vld [vmem:[#allocation2 + $0x270] sm:$0xff]
      %v899 = vld [vmem:[#allocation2 + $0x278] sm:$0xff]
      %v900 = vld [vmem:[#allocation2 + $0x280] sm:$0xff]
      %v901 = vld [vmem:[#allocation2 + $0x288] sm:$0xff]
      %v902 = vld [vmem:[#allocation2 + $0x290] sm:$0xff]
      %v903 = vld [vmem:[#allocation2 + $0x298] sm:$0xff]
      %v904 = vld [vmem:[#allocation2 + $0x2a0] sm:$0xff]
      %v905 = vld [vmem:[#allocation2 + $0x2a8] sm:$0xff]
      %v906 = vld [vmem:[#allocation2 + $0x2b0] sm:$0xff]
      %v907 = vld [vmem:[#allocation2 + $0x2b8] sm:$0xff]
      %v908 = vld [vmem:[#allocation2 + $0x2c0] sm:$0xff]
      %v909 = vld [vmem:[#allocation2 + $0x2c8] sm:$0xff]
      %v910 = vld [vmem:[#allocation2 + $0x2d0] sm:$0xff]
      %v911 = vld [vmem:[#allocation2 + $0x2d8] sm:$0xff]
      %v912 = vld [vmem:[#allocation2 + $0x2e0] sm:$0xff]
      %v913 = vld [vmem:[#allocation2 + $0x2e8] sm:$0xff]
      %v914 = vld [vmem:[#allocation2 + $0x2f0] sm:$0xff]
      %v915 = vld [vmem:[#allocation2 + $0x2f8] sm:$0xff]
      %v916 = vld [vmem:[#allocation2 + $0x300] sm:$0xff]
      %v917 = vld [vmem:[#allocation2 + $0x308] sm:$0xff]
      %v918 = vld [vmem:[#allocation2 + $0x310] sm:$0xff]
      %v919 = vld [vmem:[#allocation2 + $0x318] sm:$0xff]
      %v920 = vld [vmem:[#allocation2 + $0x320] sm:$0xff]
      %v921 = vld [vmem:[#allocation2 + $0x328] sm:$0xff]
      %v922 = vld [vmem:[#allocation2 + $0x330] sm:$0xff]
      %v923 = vld [vmem:[#allocation2 + $0x338] sm:$0xff]
      %v924 = vld [vmem:[#allocation2 + $0x340] sm:$0xff]
      %v925 = vld [vmem:[#allocation2 + $0x348] sm:$0xff]
      %v926 = vld [vmem:[#allocation2 + $0x350] sm:$0xff]
      %v927 = vld [vmem:[#allocation2 + $0x358] sm:$0xff]
      %v928 = vld [vmem:[#allocation2 + $0x360] sm:$0xff]
      %v929 = vld [vmem:[#allocation2 + $0x368] sm:$0xff]
      %v930 = vld [vmem:[#allocation2 + $0x370] sm:$0xff]
      %v931 = vld [vmem:[#allocation2 + $0x378] sm:$0xff]
      %v932 = vld [vmem:[#allocation2 + $0x380] sm:$0xff]
      %v933 = vld [vmem:[#allocation2 + $0x388] sm:$0xff]
      %v934 = vld [vmem:[#allocation2 + $0x390] sm:$0xff]
      %v935 = vld [vmem:[#allocation2 + $0x398] sm:$0xff]
      %v936 = vld [vmem:[#allocation2 + $0x3a0] sm:$0xff]
      %v937 = vld [vmem:[#allocation2 + $0x3a8] sm:$0xff]
      %v938 = vld [vmem:[#allocation2 + $0x3b0] sm:$0xff]
      %v939 = vld [vmem:[#allocation2 + $0x3b8] sm:$0xff]
      %v940 = vld [vmem:[#allocation2 + $0x3c0] sm:$0xff]
      %v941 = vld [vmem:[#allocation2 + $0x3c8] sm:$0xff]
      %v942 = vld [vmem:[#allocation2 + $0x3d0] sm:$0xff]
      %v943 = vld [vmem:[#allocation2 + $0x3d8] sm:$0xff]
      %v944 = vld [vmem:[#allocation2 + $0x3e0] sm:$0xff]
      %v945 = vld [vmem:[#allocation2 + $0x3e8] sm:$0xff]
      %v946 = vld [vmem:[#allocation2 + $0x3f0] sm:$0xff]
      %v947 = vld [vmem:[#allocation2 + $0x3f8] sm:$0xff]
      %948 = vadd.xlane.f32.xlu0 %v820
      %v949 = vpop.xlane.xlu0 %948
      %950 = vadd.xlane.f32.xlu0 %v821
      %v951 = vpop.xlane.xlu0 %950
      %952 = vadd.xlane.f32.xlu0 %v822
      %v953 = vpop.xlane.xlu0 %952
      %954 = vadd.xlane.f32.xlu0 %v823
      %v955 = vpop.xlane.xlu0 %954
      %956 = vadd.xlane.f32.xlu0 %v824
      %v957 = vpop.xlane.xlu0 %956
      %958 = vadd.xlane.f32.xlu0 %v825
      %v959 = vpop.xlane.xlu0 %958
      %960 = vadd.xlane.f32.xlu0 %v826
      %v961 = vpop.xlane.xlu0 %960
      %962 = vadd.xlane.f32.xlu0 %v827
      %v963 = vpop.xlane.xlu0 %962
      %964 = vadd.xlane.f32.xlu0 %v828
      %v965 = vpop.xlane.xlu0 %964
      %966 = vadd.xlane.f32.xlu0 %v829
      %v967 = vpop.xlane.xlu0 %966
      %968 = vadd.xlane.f32.xlu0 %v830
      %v969 = vpop.xlane.xlu0 %968
      %970 = vadd.xlane.f32.xlu0 %v831
      %v971 = vpop.xlane.xlu0 %970
      %972 = vadd.xlane.f32.xlu0 %v832
      %v973 = vpop.xlane.xlu0 %972
      %974 = vadd.xlane.f32.xlu0 %v833
      %v975 = vpop.xlane.xlu0 %974
      %976 = vadd.xlane.f32.xlu0 %v834
      %v977 = vpop.xlane.xlu0 %976
      %978 = vadd.xlane.f32.xlu0 %v835
      %v979 = vpop.xlane.xlu0 %978
      %980 = vadd.xlane.f32.xlu0 %v836
      %v981 = vpop.xlane.xlu0 %980
      %982 = vadd.xlane.f32.xlu0 %v837
      %v983 = vpop.xlane.xlu0 %982
      %984 = vadd.xlane.f32.xlu0 %v838
      %v985 = vpop.xlane.xlu0 %984
      %986 = vadd.xlane.f32.xlu0 %v839
      %v987 = vpop.xlane.xlu0 %986
      %988 = vadd.xlane.f32.xlu0 %v840
      %v989 = vpop.xlane.xlu0 %988
      %990 = vadd.xlane.f32.xlu0 %v841
      %v991 = vpop.xlane.xlu0 %990
      %992 = vadd.xlane.f32.xlu0 %v842
      %v993 = vpop.xlane.xlu0 %992
      %994 = vadd.xlane.f32.xlu0 %v843
      %v995 = vpop.xlane.xlu0 %994
      %996 = vadd.xlane.f32.xlu0 %v844
      %v997 = vpop.xlane.xlu0 %996
      %998 = vadd.xlane.f32.xlu0 %v845
      %v999 = vpop.xlane.xlu0 %998
      %1000 = vadd.xlane.f32.xlu0 %v846
      %v1001 = vpop.xlane.xlu0 %1000
      %1002 = vadd.xlane.f32.xlu0 %v847
      %v1003 = vpop.xlane.xlu0 %1002
      %1004 = vadd.xlane.f32.xlu0 %v848
      %v1005 = vpop.xlane.xlu0 %1004
      %1006 = vadd.xlane.f32.xlu0 %v849
      %v1007 = vpop.xlane.xlu0 %1006
      %1008 = vadd.xlane.f32.xlu0 %v850
      %v1009 = vpop.xlane.xlu0 %1008
      %1010 = vadd.xlane.f32.xlu0 %v851
      %v1011 = vpop.xlane.xlu0 %1010
      %1012 = vadd.xlane.f32.xlu0 %v852
      %v1013 = vpop.xlane.xlu0 %1012
      %1014 = vadd.xlane.f32.xlu0 %v853
      %v1015 = vpop.xlane.xlu0 %1014
      %1016 = vadd.xlane.f32.xlu0 %v854
      %v1017 = vpop.xlane.xlu0 %1016
      %1018 = vadd.xlane.f32.xlu0 %v855
      %v1019 = vpop.xlane.xlu0 %1018
      %1020 = vadd.xlane.f32.xlu0 %v856
      %v1021 = vpop.xlane.xlu0 %1020
      %1022 = vadd.xlane.f32.xlu0 %v857
      %v1023 = vpop.xlane.xlu0 %1022
      %1024 = vadd.xlane.f32.xlu0 %v858
      %v1025 = vpop.xlane.xlu0 %1024
      %1026 = vadd.xlane.f32.xlu0 %v859
      %v1027 = vpop.xlane.xlu0 %1026
      %1028 = vadd.xlane.f32.xlu0 %v860
      %v1029 = vpop.xlane.xlu0 %1028
      %1030 = vadd.xlane.f32.xlu0 %v861
      %v1031 = vpop.xlane.xlu0 %1030
      %1032 = vadd.xlane.f32.xlu0 %v862
      %v1033 = vpop.xlane.xlu0 %1032
      %1034 = vadd.xlane.f32.xlu0 %v863
      %v1035 = vpop.xlane.xlu0 %1034
      %1036 = vadd.xlane.f32.xlu0 %v864
      %v1037 = vpop.xlane.xlu0 %1036
      %1038 = vadd.xlane.f32.xlu0 %v865
      %v1039 = vpop.xlane.xlu0 %1038
      %1040 = vadd.xlane.f32.xlu0 %v866
      %v1041 = vpop.xlane.xlu0 %1040
      %1042 = vadd.xlane.f32.xlu0 %v867
      %v1043 = vpop.xlane.xlu0 %1042
      %1044 = vadd.xlane.f32.xlu0 %v868
      %v1045 = vpop.xlane.xlu0 %1044
      %1046 = vadd.xlane.f32.xlu0 %v869
      %v1047 = vpop.xlane.xlu0 %1046
      %1048 = vadd.xlane.f32.xlu0 %v870
      %v1049 = vpop.xlane.xlu0 %1048
      %1050 = vadd.xlane.f32.xlu0 %v871
      %v1051 = vpop.xlane.xlu0 %1050
      %1052 = vadd.xlane.f32.xlu0 %v872
      %v1053 = vpop.xlane.xlu0 %1052
      %1054 = vadd.xlane.f32.xlu0 %v873
      %v1055 = vpop.xlane.xlu0 %1054
      %1056 = vadd.xlane.f32.xlu0 %v874
      %v1057 = vpop.xlane.xlu0 %1056
      %1058 = vadd.xlane.f32.xlu0 %v875
      %v1059 = vpop.xlane.xlu0 %1058
      %1060 = vadd.xlane.f32.xlu0 %v876
      %v1061 = vpop.xlane.xlu0 %1060
      %1062 = vadd.xlane.f32.xlu0 %v877
      %v1063 = vpop.xlane.xlu0 %1062
      %1064 = vadd.xlane.f32.xlu0 %v878
      %v1065 = vpop.xlane.xlu0 %1064
      %1066 = vadd.xlane.f32.xlu0 %v879
      %v1067 = vpop.xlane.xlu0 %1066
      %1068 = vadd.xlane.f32.xlu0 %v880
      %v1069 = vpop.xlane.xlu0 %1068
      %1070 = vadd.xlane.f32.xlu0 %v881
      %v1071 = vpop.xlane.xlu0 %1070
      %1072 = vadd.xlane.f32.xlu0 %v882
      %v1073 = vpop.xlane.xlu0 %1072
      %1074 = vadd.xlane.f32.xlu0 %v883
      %v1075 = vpop.xlane.xlu0 %1074
      %1076 = vadd.xlane.f32.xlu0 %v884
      %v1077 = vpop.xlane.xlu0 %1076
      %1078 = vadd.xlane.f32.xlu0 %v885
      %v1079 = vpop.xlane.xlu0 %1078
      %1080 = vadd.xlane.f32.xlu0 %v886
      %v1081 = vpop.xlane.xlu0 %1080
      %1082 = vadd.xlane.f32.xlu0 %v887
      %v1083 = vpop.xlane.xlu0 %1082
      %1084 = vadd.xlane.f32.xlu0 %v888
      %v1085 = vpop.xlane.xlu0 %1084
      %1086 = vadd.xlane.f32.xlu0 %v889
      %v1087 = vpop.xlane.xlu0 %1086
      %1088 = vadd.xlane.f32.xlu0 %v890
      %v1089 = vpop.xlane.xlu0 %1088
      %1090 = vadd.xlane.f32.xlu0 %v891
      %v1091 = vpop.xlane.xlu0 %1090
      %1092 = vadd.xlane.f32.xlu0 %v892
      %v1093 = vpop.xlane.xlu0 %1092
      %1094 = vadd.xlane.f32.xlu0 %v893
      %v1095 = vpop.xlane.xlu0 %1094
      %1096 = vadd.xlane.f32.xlu0 %v894
      %v1097 = vpop.xlane.xlu0 %1096
      %1098 = vadd.xlane.f32.xlu0 %v895
      %v1099 = vpop.xlane.xlu0 %1098
      %1100 = vadd.xlane.f32.xlu0 %v896
      %v1101 = vpop.xlane.xlu0 %1100
      %1102 = vadd.xlane.f32.xlu0 %v897
      %v1103 = vpop.xlane.xlu0 %1102
      %1104 = vadd.xlane.f32.xlu0 %v898
      %v1105 = vpop.xlane.xlu0 %1104
      %1106 = vadd.xlane.f32.xlu0 %v899
      %v1107 = vpop.xlane.xlu0 %1106
      %1108 = vadd.xlane.f32.xlu0 %v900
      %v1109 = vpop.xlane.xlu0 %1108
      %1110 = vadd.xlane.f32.xlu0 %v901
      %v1111 = vpop.xlane.xlu0 %1110
      %1112 = vadd.xlane.f32.xlu0 %v902
      %v1113 = vpop.xlane.xlu0 %1112
      %1114 = vadd.xlane.f32.xlu0 %v903
      %v1115 = vpop.xlane.xlu0 %1114
      %1116 = vadd.xlane.f32.xlu0 %v904
      %v1117 = vpop.xlane.xlu0 %1116
      %1118 = vadd.xlane.f32.xlu0 %v905
      %v1119 = vpop.xlane.xlu0 %1118
      %1120 = vadd.xlane.f32.xlu0 %v906
      %v1121 = vpop.xlane.xlu0 %1120
      %1122 = vadd.xlane.f32.xlu0 %v907
      %v1123 = vpop.xlane.xlu0 %1122
      %1124 = vadd.xlane.f32.xlu0 %v908
      %v1125 = vpop.xlane.xlu0 %1124
      %1126 = vadd.xlane.f32.xlu0 %v909
      %v1127 = vpop.xlane.xlu0 %1126
      %1128 = vadd.xlane.f32.xlu0 %v910
      %v1129 = vpop.xlane.xlu0 %1128
      %1130 = vadd.xlane.f32.xlu0 %v911
      %v1131 = vpop.xlane.xlu0 %1130
      %1132 = vadd.xlane.f32.xlu0 %v912
      %v1133 = vpop.xlane.xlu0 %1132
      %1134 = vadd.xlane.f32.xlu0 %v913
      %v1135 = vpop.xlane.xlu0 %1134
      %1136 = vadd.xlane.f32.xlu0 %v914
      %v1137 = vpop.xlane.xlu0 %1136
      %1138 = vadd.xlane.f32.xlu0 %v915
      %v1139 = vpop.xlane.xlu0 %1138
      %1140 = vadd.xlane.f32.xlu0 %v916
      %v1141 = vpop.xlane.xlu0 %1140
      %1142 = vadd.xlane.f32.xlu0 %v917
      %v1143 = vpop.xlane.xlu0 %1142
      %1144 = vadd.xlane.f32.xlu0 %v918
      %v1145 = vpop.xlane.xlu0 %1144
      %1146 = vadd.xlane.f32.xlu0 %v919
      %v1147 = vpop.xlane.xlu0 %1146
      %1148 = vadd.xlane.f32.xlu0 %v920
      %v1149 = vpop.xlane.xlu0 %1148
      %1150 = vadd.xlane.f32.xlu0 %v921
      %v1151 = vpop.xlane.xlu0 %1150
      %1152 = vadd.xlane.f32.xlu0 %v922
      %v1153 = vpop.xlane.xlu0 %1152
      %1154 = vadd.xlane.f32.xlu0 %v923
      %v1155 = vpop.xlane.xlu0 %1154
      %1156 = vadd.xlane.f32.xlu0 %v924
      %v1157 = vpop.xlane.xlu0 %1156
      %1158 = vadd.xlane.f32.xlu0 %v925
      %v1159 = vpop.xlane.xlu0 %1158
      %1160 = vadd.xlane.f32.xlu0 %v926
      %v1161 = vpop.xlane.xlu0 %1160
      %1162 = vadd.xlane.f32.xlu0 %v927
      %v1163 = vpop.xlane.xlu0 %1162
      %1164 = vadd.xlane.f32.xlu0 %v928
      %v1165 = vpop.xlane.xlu0 %1164
      %1166 = vadd.xlane.f32.xlu0 %v929
      %v1167 = vpop.xlane.xlu0 %1166
      %1168 = vadd.xlane.f32.xlu0 %v930
      %v1169 = vpop.xlane.xlu0 %1168
      %1170 = vadd.xlane.f32.xlu0 %v931
      %v1171 = vpop.xlane.xlu0 %1170
      %1172 = vadd.xlane.f32.xlu0 %v932
      %v1173 = vpop.xlane.xlu0 %1172
      %1174 = vadd.xlane.f32.xlu0 %v933
      %v1175 = vpop.xlane.xlu0 %1174
      %1176 = vadd.xlane.f32.xlu0 %v934
      %v1177 = vpop.xlane.xlu0 %1176
      %1178 = vadd.xlane.f32.xlu0 %v935
      %v1179 = vpop.xlane.xlu0 %1178
      %1180 = vadd.xlane.f32.xlu0 %v936
      %v1181 = vpop.xlane.xlu0 %1180
      %1182 = vadd.xlane.f32.xlu0 %v937
      %v1183 = vpop.xlane.xlu0 %1182
      %1184 = vadd.xlane.f32.xlu0 %v938
      %v1185 = vpop.xlane.xlu0 %1184
      %1186 = vadd.xlane.f32.xlu0 %v939
      %v1187 = vpop.xlane.xlu0 %1186
      %1188 = vadd.xlane.f32.xlu0 %v940
      %v1189 = vpop.xlane.xlu0 %1188
      %1190 = vadd.xlane.f32.xlu0 %v941
      %v1191 = vpop.xlane.xlu0 %1190
      %1192 = vadd.xlane.f32.xlu0 %v942
      %v1193 = vpop.xlane.xlu0 %1192
      %1194 = vadd.xlane.f32.xlu0 %v943
      %v1195 = vpop.xlane.xlu0 %1194
      %1196 = vadd.xlane.f32.xlu0 %v944
      %v1197 = vpop.xlane.xlu0 %1196
      %1198 = vadd.xlane.f32.xlu0 %v945
      %v1199 = vpop.xlane.xlu0 %1198
      %1200 = vadd.xlane.f32.xlu0 %v946
      %v1201 = vpop.xlane.xlu0 %1200
      %1202 = vadd.xlane.f32.xlu0 %v947
      %v1203 = vpop.xlane.xlu0 %1202
      %v1333 = vunpack.c.l.s4 269488144
      %v1334 = vunpack.c.0.s8 %v1333
      %v1335 = vperm.slane %v949, %v1334
      %v1337 = vunpack.c.l.s4 842150450
      %v1338 = vunpack.c.0.s8 %v1337
      %v1339 = vperm.slane %v949, %v1338
      %v1341 = vunpack.c.l.s4 1414812756
      %v1342 = vunpack.c.0.s8 %v1341
      %v1343 = vperm.slane %v949, %v1342
      %v1345 = vunpack.c.l.s4 1987475062
      %v1346 = vunpack.c.0.s8 %v1345
      %v1347 = vperm.slane %v949, %v1346
      %v1349 = vunpack.c.l.s4 269488144
      %v1350 = vunpack.c.0.s8 %v1349
      %v1351 = vperm.slane %v951, %v1350
      %v1353 = vunpack.c.l.s4 842150450
      %v1354 = vunpack.c.0.s8 %v1353
      %v1355 = vperm.slane %v951, %v1354
      %v1357 = vunpack.c.l.s4 1414812756
      %v1358 = vunpack.c.0.s8 %v1357
      %v1359 = vperm.slane %v951, %v1358
      %v1361 = vunpack.c.l.s4 1987475062
      %v1362 = vunpack.c.0.s8 %v1361
      %v1363 = vperm.slane %v951, %v1362
      %v1365 = vunpack.c.l.s4 269488144
      %v1366 = vunpack.c.0.s8 %v1365
      %v1367 = vperm.slane %v953, %v1366
      %v1369 = vunpack.c.l.s4 842150450
      %v1370 = vunpack.c.0.s8 %v1369
      %v1371 = vperm.slane %v953, %v1370
      %v1373 = vunpack.c.l.s4 1414812756
      %v1374 = vunpack.c.0.s8 %v1373
      %v1375 = vperm.slane %v953, %v1374
      %v1377 = vunpack.c.l.s4 1987475062
      %v1378 = vunpack.c.0.s8 %v1377
      %v1379 = vperm.slane %v953, %v1378
      %v1381 = vunpack.c.l.s4 269488144
      %v1382 = vunpack.c.0.s8 %v1381
      %v1383 = vperm.slane %v955, %v1382
      %v1385 = vunpack.c.l.s4 842150450
      %v1386 = vunpack.c.0.s8 %v1385
      %v1387 = vperm.slane %v955, %v1386
      %v1389 = vunpack.c.l.s4 1414812756
      %v1390 = vunpack.c.0.s8 %v1389
      %v1391 = vperm.slane %v955, %v1390
      %v1393 = vunpack.c.l.s4 1987475062
      %v1394 = vunpack.c.0.s8 %v1393
      %v1395 = vperm.slane %v955, %v1394
      %v1397 = vunpack.c.l.s4 269488144
      %v1398 = vunpack.c.0.s8 %v1397
      %v1399 = vperm.slane %v957, %v1398
      %v1401 = vunpack.c.l.s4 842150450
      %v1402 = vunpack.c.0.s8 %v1401
      %v1403 = vperm.slane %v957, %v1402
      %v1405 = vunpack.c.l.s4 1414812756
      %v1406 = vunpack.c.0.s8 %v1405
      %v1407 = vperm.slane %v957, %v1406
      %v1409 = vunpack.c.l.s4 1987475062
      %v1410 = vunpack.c.0.s8 %v1409
      %v1411 = vperm.slane %v957, %v1410
      %v1413 = vunpack.c.l.s4 269488144
      %v1414 = vunpack.c.0.s8 %v1413
      %v1415 = vperm.slane %v959, %v1414
      %v1417 = vunpack.c.l.s4 842150450
      %v1418 = vunpack.c.0.s8 %v1417
      %v1419 = vperm.slane %v959, %v1418
      %v1421 = vunpack.c.l.s4 1414812756
      %v1422 = vunpack.c.0.s8 %v1421
      %v1423 = vperm.slane %v959, %v1422
      %v1425 = vunpack.c.l.s4 1987475062
      %v1426 = vunpack.c.0.s8 %v1425
      %v1427 = vperm.slane %v959, %v1426
      %v1429 = vunpack.c.l.s4 269488144
      %v1430 = vunpack.c.0.s8 %v1429
      %v1431 = vperm.slane %v961, %v1430
      %v1433 = vunpack.c.l.s4 842150450
      %v1434 = vunpack.c.0.s8 %v1433
      %v1435 = vperm.slane %v961, %v1434
      %v1437 = vunpack.c.l.s4 1414812756
      %v1438 = vunpack.c.0.s8 %v1437
      %v1439 = vperm.slane %v961, %v1438
      %v1441 = vunpack.c.l.s4 1987475062
      %v1442 = vunpack.c.0.s8 %v1441
      %v1443 = vperm.slane %v961, %v1442
      %v1445 = vunpack.c.l.s4 269488144
      %v1446 = vunpack.c.0.s8 %v1445
      %v1447 = vperm.slane %v963, %v1446
      %v1449 = vunpack.c.l.s4 842150450
      %v1450 = vunpack.c.0.s8 %v1449
      %v1451 = vperm.slane %v963, %v1450
      %v1453 = vunpack.c.l.s4 1414812756
      %v1454 = vunpack.c.0.s8 %v1453
      %v1455 = vperm.slane %v963, %v1454
      %v1457 = vunpack.c.l.s4 1987475062
      %v1458 = vunpack.c.0.s8 %v1457
      %v1459 = vperm.slane %v963, %v1458
      %v1461 = vunpack.c.l.s4 269488144
      %v1462 = vunpack.c.0.s8 %v1461
      %v1463 = vperm.slane %v965, %v1462
      %v1465 = vunpack.c.l.s4 842150450
      %v1466 = vunpack.c.0.s8 %v1465
      %v1467 = vperm.slane %v965, %v1466
      %v1469 = vunpack.c.l.s4 1414812756
      %v1470 = vunpack.c.0.s8 %v1469
      %v1471 = vperm.slane %v965, %v1470
      %v1473 = vunpack.c.l.s4 1987475062
      %v1474 = vunpack.c.0.s8 %v1473
      %v1475 = vperm.slane %v965, %v1474
      %v1477 = vunpack.c.l.s4 269488144
      %v1478 = vunpack.c.0.s8 %v1477
      %v1479 = vperm.slane %v967, %v1478
      %v1481 = vunpack.c.l.s4 842150450
      %v1482 = vunpack.c.0.s8 %v1481
      %v1483 = vperm.slane %v967, %v1482
      %v1485 = vunpack.c.l.s4 1414812756
      %v1486 = vunpack.c.0.s8 %v1485
      %v1487 = vperm.slane %v967, %v1486
      %v1489 = vunpack.c.l.s4 1987475062
      %v1490 = vunpack.c.0.s8 %v1489
      %v1491 = vperm.slane %v967, %v1490
      %v1493 = vunpack.c.l.s4 269488144
      %v1494 = vunpack.c.0.s8 %v1493
      %v1495 = vperm.slane %v969, %v1494
      %v1497 = vunpack.c.l.s4 842150450
      %v1498 = vunpack.c.0.s8 %v1497
      %v1499 = vperm.slane %v969, %v1498
      %v1501 = vunpack.c.l.s4 1414812756
      %v1502 = vunpack.c.0.s8 %v1501
      %v1503 = vperm.slane %v969, %v1502
      %v1505 = vunpack.c.l.s4 1987475062
      %v1506 = vunpack.c.0.s8 %v1505
      %v1507 = vperm.slane %v969, %v1506
      %v1509 = vunpack.c.l.s4 269488144
      %v1510 = vunpack.c.0.s8 %v1509
      %v1511 = vperm.slane %v971, %v1510
      %v1513 = vunpack.c.l.s4 842150450
      %v1514 = vunpack.c.0.s8 %v1513
      %v1515 = vperm.slane %v971, %v1514
      %v1517 = vunpack.c.l.s4 1414812756
      %v1518 = vunpack.c.0.s8 %v1517
      %v1519 = vperm.slane %v971, %v1518
      %v1521 = vunpack.c.l.s4 1987475062
      %v1522 = vunpack.c.0.s8 %v1521
      %v1523 = vperm.slane %v971, %v1522
      %v1525 = vunpack.c.l.s4 269488144
      %v1526 = vunpack.c.0.s8 %v1525
      %v1527 = vperm.slane %v973, %v1526
      %v1529 = vunpack.c.l.s4 842150450
      %v1530 = vunpack.c.0.s8 %v1529
      %v1531 = vperm.slane %v973, %v1530
      %v1533 = vunpack.c.l.s4 1414812756
      %v1534 = vunpack.c.0.s8 %v1533
      %v1535 = vperm.slane %v973, %v1534
      %v1537 = vunpack.c.l.s4 1987475062
      %v1538 = vunpack.c.0.s8 %v1537
      %v1539 = vperm.slane %v973, %v1538
      %v1541 = vunpack.c.l.s4 269488144
      %v1542 = vunpack.c.0.s8 %v1541
      %v1543 = vperm.slane %v975, %v1542
      %v1545 = vunpack.c.l.s4 842150450
      %v1546 = vunpack.c.0.s8 %v1545
      %v1547 = vperm.slane %v975, %v1546
      %v1549 = vunpack.c.l.s4 1414812756
      %v1550 = vunpack.c.0.s8 %v1549
      %v1551 = vperm.slane %v975, %v1550
      %v1553 = vunpack.c.l.s4 1987475062
      %v1554 = vunpack.c.0.s8 %v1553
      %v1555 = vperm.slane %v975, %v1554
      %v1557 = vunpack.c.l.s4 269488144
      %v1558 = vunpack.c.0.s8 %v1557
      %v1559 = vperm.slane %v977, %v1558
      %v1561 = vunpack.c.l.s4 842150450
      %v1562 = vunpack.c.0.s8 %v1561
      %v1563 = vperm.slane %v977, %v1562
      %v1565 = vunpack.c.l.s4 1414812756
      %v1566 = vunpack.c.0.s8 %v1565
      %v1567 = vperm.slane %v977, %v1566
      %v1569 = vunpack.c.l.s4 1987475062
      %v1570 = vunpack.c.0.s8 %v1569
      %v1571 = vperm.slane %v977, %v1570
      %v1573 = vunpack.c.l.s4 269488144
      %v1574 = vunpack.c.0.s8 %v1573
      %v1575 = vperm.slane %v979, %v1574
      %v1577 = vunpack.c.l.s4 842150450
      %v1578 = vunpack.c.0.s8 %v1577
      %v1579 = vperm.slane %v979, %v1578
      %v1581 = vunpack.c.l.s4 1414812756
      %v1582 = vunpack.c.0.s8 %v1581
      %v1583 = vperm.slane %v979, %v1582
      %v1585 = vunpack.c.l.s4 1987475062
      %v1586 = vunpack.c.0.s8 %v1585
      %v1587 = vperm.slane %v979, %v1586
      %v1589 = vunpack.c.l.s4 269488144
      %v1590 = vunpack.c.0.s8 %v1589
      %v1591 = vperm.slane %v981, %v1590
      %v1593 = vunpack.c.l.s4 842150450
      %v1594 = vunpack.c.0.s8 %v1593
      %v1595 = vperm.slane %v981, %v1594
      %v1597 = vunpack.c.l.s4 1414812756
      %v1598 = vunpack.c.0.s8 %v1597
      %v1599 = vperm.slane %v981, %v1598
      %v1601 = vunpack.c.l.s4 1987475062
      %v1602 = vunpack.c.0.s8 %v1601
      %v1603 = vperm.slane %v981, %v1602
      %v1605 = vunpack.c.l.s4 269488144
      %v1606 = vunpack.c.0.s8 %v1605
      %v1607 = vperm.slane %v983, %v1606
      %v1609 = vunpack.c.l.s4 842150450
      %v1610 = vunpack.c.0.s8 %v1609
      %v1611 = vperm.slane %v983, %v1610
      %v1613 = vunpack.c.l.s4 1414812756
      %v1614 = vunpack.c.0.s8 %v1613
      %v1615 = vperm.slane %v983, %v1614
      %v1617 = vunpack.c.l.s4 1987475062
      %v1618 = vunpack.c.0.s8 %v1617
      %v1619 = vperm.slane %v983, %v1618
      %v1621 = vunpack.c.l.s4 269488144
      %v1622 = vunpack.c.0.s8 %v1621
      %v1623 = vperm.slane %v985, %v1622
      %v1625 = vunpack.c.l.s4 842150450
      %v1626 = vunpack.c.0.s8 %v1625
      %v1627 = vperm.slane %v985, %v1626
      %v1629 = vunpack.c.l.s4 1414812756
      %v1630 = vunpack.c.0.s8 %v1629
      %v1631 = vperm.slane %v985, %v1630
      %v1633 = vunpack.c.l.s4 1987475062
      %v1634 = vunpack.c.0.s8 %v1633
      %v1635 = vperm.slane %v985, %v1634
      %v1637 = vunpack.c.l.s4 269488144
      %v1638 = vunpack.c.0.s8 %v1637
      %v1639 = vperm.slane %v987, %v1638
      %v1641 = vunpack.c.l.s4 842150450
      %v1642 = vunpack.c.0.s8 %v1641
      %v1643 = vperm.slane %v987, %v1642
      %v1645 = vunpack.c.l.s4 1414812756
      %v1646 = vunpack.c.0.s8 %v1645
      %v1647 = vperm.slane %v987, %v1646
      %v1649 = vunpack.c.l.s4 1987475062
      %v1650 = vunpack.c.0.s8 %v1649
      %v1651 = vperm.slane %v987, %v1650
      %v1653 = vunpack.c.l.s4 269488144
      %v1654 = vunpack.c.0.s8 %v1653
      %v1655 = vperm.slane %v989, %v1654
      %v1657 = vunpack.c.l.s4 842150450
      %v1658 = vunpack.c.0.s8 %v1657
      %v1659 = vperm.slane %v989, %v1658
      %v1661 = vunpack.c.l.s4 1414812756
      %v1662 = vunpack.c.0.s8 %v1661
      %v1663 = vperm.slane %v989, %v1662
      %v1665 = vunpack.c.l.s4 1987475062
      %v1666 = vunpack.c.0.s8 %v1665
      %v1667 = vperm.slane %v989, %v1666
      %v1669 = vunpack.c.l.s4 269488144
      %v1670 = vunpack.c.0.s8 %v1669
      %v1671 = vperm.slane %v991, %v1670
      %v1673 = vunpack.c.l.s4 842150450
      %v1674 = vunpack.c.0.s8 %v1673
      %v1675 = vperm.slane %v991, %v1674
      %v1677 = vunpack.c.l.s4 1414812756
      %v1678 = vunpack.c.0.s8 %v1677
      %v1679 = vperm.slane %v991, %v1678
      %v1681 = vunpack.c.l.s4 1987475062
      %v1682 = vunpack.c.0.s8 %v1681
      %v1683 = vperm.slane %v991, %v1682
      %v1685 = vunpack.c.l.s4 269488144
      %v1686 = vunpack.c.0.s8 %v1685
      %v1687 = vperm.slane %v993, %v1686
      %v1689 = vunpack.c.l.s4 842150450
      %v1690 = vunpack.c.0.s8 %v1689
      %v1691 = vperm.slane %v993, %v1690
      %v1693 = vunpack.c.l.s4 1414812756
      %v1694 = vunpack.c.0.s8 %v1693
      %v1695 = vperm.slane %v993, %v1694
      %v1697 = vunpack.c.l.s4 1987475062
      %v1698 = vunpack.c.0.s8 %v1697
      %v1699 = vperm.slane %v993, %v1698
      %v1701 = vunpack.c.l.s4 269488144
      %v1702 = vunpack.c.0.s8 %v1701
      %v1703 = vperm.slane %v995, %v1702
      %v1705 = vunpack.c.l.s4 842150450
      %v1706 = vunpack.c.0.s8 %v1705
      %v1707 = vperm.slane %v995, %v1706
      %v1709 = vunpack.c.l.s4 1414812756
      %v1710 = vunpack.c.0.s8 %v1709
      %v1711 = vperm.slane %v995, %v1710
      %v1713 = vunpack.c.l.s4 1987475062
      %v1714 = vunpack.c.0.s8 %v1713
      %v1715 = vperm.slane %v995, %v1714
      %v1717 = vunpack.c.l.s4 269488144
      %v1718 = vunpack.c.0.s8 %v1717
      %v1719 = vperm.slane %v997, %v1718
      %v1721 = vunpack.c.l.s4 842150450
      %v1722 = vunpack.c.0.s8 %v1721
      %v1723 = vperm.slane %v997, %v1722
      %v1725 = vunpack.c.l.s4 1414812756
      %v1726 = vunpack.c.0.s8 %v1725
      %v1727 = vperm.slane %v997, %v1726
      %v1729 = vunpack.c.l.s4 1987475062
      %v1730 = vunpack.c.0.s8 %v1729
      %v1731 = vperm.slane %v997, %v1730
      %v1733 = vunpack.c.l.s4 269488144
      %v1734 = vunpack.c.0.s8 %v1733
      %v1735 = vperm.slane %v999, %v1734
      %v1737 = vunpack.c.l.s4 842150450
      %v1738 = vunpack.c.0.s8 %v1737
      %v1739 = vperm.slane %v999, %v1738
      %v1741 = vunpack.c.l.s4 1414812756
      %v1742 = vunpack.c.0.s8 %v1741
      %v1743 = vperm.slane %v999, %v1742
      %v1745 = vunpack.c.l.s4 1987475062
      %v1746 = vunpack.c.0.s8 %v1745
      %v1747 = vperm.slane %v999, %v1746
      %v1749 = vunpack.c.l.s4 269488144
      %v1750 = vunpack.c.0.s8 %v1749
      %v1751 = vperm.slane %v1001, %v1750
      %v1753 = vunpack.c.l.s4 842150450
      %v1754 = vunpack.c.0.s8 %v1753
      %v1755 = vperm.slane %v1001, %v1754
      %v1757 = vunpack.c.l.s4 1414812756
      %v1758 = vunpack.c.0.s8 %v1757
      %v1759 = vperm.slane %v1001, %v1758
      %v1761 = vunpack.c.l.s4 1987475062
      %v1762 = vunpack.c.0.s8 %v1761
      %v1763 = vperm.slane %v1001, %v1762
      %v1765 = vunpack.c.l.s4 269488144
      %v1766 = vunpack.c.0.s8 %v1765
      %v1767 = vperm.slane %v1003, %v1766
      %v1769 = vunpack.c.l.s4 842150450
      %v1770 = vunpack.c.0.s8 %v1769
      %v1771 = vperm.slane %v1003, %v1770
      %v1773 = vunpack.c.l.s4 1414812756
      %v1774 = vunpack.c.0.s8 %v1773
      %v1775 = vperm.slane %v1003, %v1774
      %v1777 = vunpack.c.l.s4 1987475062
      %v1778 = vunpack.c.0.s8 %v1777
      %v1779 = vperm.slane %v1003, %v1778
      %v1781 = vunpack.c.l.s4 269488144
      %v1782 = vunpack.c.0.s8 %v1781
      %v1783 = vperm.slane %v1005, %v1782
      %v1785 = vunpack.c.l.s4 842150450
      %v1786 = vunpack.c.0.s8 %v1785
      %v1787 = vperm.slane %v1005, %v1786
      %v1789 = vunpack.c.l.s4 1414812756
      %v1790 = vunpack.c.0.s8 %v1789
      %v1791 = vperm.slane %v1005, %v1790
      %v1793 = vunpack.c.l.s4 1987475062
      %v1794 = vunpack.c.0.s8 %v1793
      %v1795 = vperm.slane %v1005, %v1794
      %v1797 = vunpack.c.l.s4 269488144
      %v1798 = vunpack.c.0.s8 %v1797
      %v1799 = vperm.slane %v1007, %v1798
      %v1801 = vunpack.c.l.s4 842150450
      %v1802 = vunpack.c.0.s8 %v1801
      %v1803 = vperm.slane %v1007, %v1802
      %v1805 = vunpack.c.l.s4 1414812756
      %v1806 = vunpack.c.0.s8 %v1805
      %v1807 = vperm.slane %v1007, %v1806
      %v1809 = vunpack.c.l.s4 1987475062
      %v1810 = vunpack.c.0.s8 %v1809
      %v1811 = vperm.slane %v1007, %v1810
      %v1813 = vunpack.c.l.s4 269488144
      %v1814 = vunpack.c.0.s8 %v1813
      %v1815 = vperm.slane %v1009, %v1814
      %v1817 = vunpack.c.l.s4 842150450
      %v1818 = vunpack.c.0.s8 %v1817
      %v1819 = vperm.slane %v1009, %v1818
      %v1821 = vunpack.c.l.s4 1414812756
      %v1822 = vunpack.c.0.s8 %v1821
      %v1823 = vperm.slane %v1009, %v1822
      %v1825 = vunpack.c.l.s4 1987475062
      %v1826 = vunpack.c.0.s8 %v1825
      %v1827 = vperm.slane %v1009, %v1826
      %v1829 = vunpack.c.l.s4 269488144
      %v1830 = vunpack.c.0.s8 %v1829
      %v1831 = vperm.slane %v1011, %v1830
      %v1833 = vunpack.c.l.s4 842150450
      %v1834 = vunpack.c.0.s8 %v1833
      %v1835 = vperm.slane %v1011, %v1834
      %v1837 = vunpack.c.l.s4 1414812756
      %v1838 = vunpack.c.0.s8 %v1837
      %v1839 = vperm.slane %v1011, %v1838
      %v1841 = vunpack.c.l.s4 1987475062
      %v1842 = vunpack.c.0.s8 %v1841
      %v1843 = vperm.slane %v1011, %v1842
      %v1845 = vunpack.c.l.s4 269488144
      %v1846 = vunpack.c.0.s8 %v1845
      %v1847 = vperm.slane %v1013, %v1846
      %v1849 = vunpack.c.l.s4 842150450
      %v1850 = vunpack.c.0.s8 %v1849
      %v1851 = vperm.slane %v1013, %v1850
      %v1853 = vunpack.c.l.s4 1414812756
      %v1854 = vunpack.c.0.s8 %v1853
      %v1855 = vperm.slane %v1013, %v1854
      %v1857 = vunpack.c.l.s4 1987475062
      %v1858 = vunpack.c.0.s8 %v1857
      %v1859 = vperm.slane %v1013, %v1858
      %v1861 = vunpack.c.l.s4 269488144
      %v1862 = vunpack.c.0.s8 %v1861
      %v1863 = vperm.slane %v1015, %v1862
      %v1865 = vunpack.c.l.s4 842150450
      %v1866 = vunpack.c.0.s8 %v1865
      %v1867 = vperm.slane %v1015, %v1866
      %v1869 = vunpack.c.l.s4 1414812756
      %v1870 = vunpack.c.0.s8 %v1869
      %v1871 = vperm.slane %v1015, %v1870
      %v1873 = vunpack.c.l.s4 1987475062
      %v1874 = vunpack.c.0.s8 %v1873
      %v1875 = vperm.slane %v1015, %v1874
      %v1877 = vunpack.c.l.s4 269488144
      %v1878 = vunpack.c.0.s8 %v1877
      %v1879 = vperm.slane %v1017, %v1878
      %v1881 = vunpack.c.l.s4 842150450
      %v1882 = vunpack.c.0.s8 %v1881
      %v1883 = vperm.slane %v1017, %v1882
      %v1885 = vunpack.c.l.s4 1414812756
      %v1886 = vunpack.c.0.s8 %v1885
      %v1887 = vperm.slane %v1017, %v1886
      %v1889 = vunpack.c.l.s4 1987475062
      %v1890 = vunpack.c.0.s8 %v1889
      %v1891 = vperm.slane %v1017, %v1890
      %v1893 = vunpack.c.l.s4 269488144
      %v1894 = vunpack.c.0.s8 %v1893
      %v1895 = vperm.slane %v1019, %v1894
      %v1897 = vunpack.c.l.s4 842150450
      %v1898 = vunpack.c.0.s8 %v1897
      %v1899 = vperm.slane %v1019, %v1898
      %v1901 = vunpack.c.l.s4 1414812756
      %v1902 = vunpack.c.0.s8 %v1901
      %v1903 = vperm.slane %v1019, %v1902
      %v1905 = vunpack.c.l.s4 1987475062
      %v1906 = vunpack.c.0.s8 %v1905
      %v1907 = vperm.slane %v1019, %v1906
      %v1909 = vunpack.c.l.s4 269488144
      %v1910 = vunpack.c.0.s8 %v1909
      %v1911 = vperm.slane %v1021, %v1910
      %v1913 = vunpack.c.l.s4 842150450
      %v1914 = vunpack.c.0.s8 %v1913
      %v1915 = vperm.slane %v1021, %v1914
      %v1917 = vunpack.c.l.s4 1414812756
      %v1918 = vunpack.c.0.s8 %v1917
      %v1919 = vperm.slane %v1021, %v1918
      %v1921 = vunpack.c.l.s4 1987475062
      %v1922 = vunpack.c.0.s8 %v1921
      %v1923 = vperm.slane %v1021, %v1922
      %v1925 = vunpack.c.l.s4 269488144
      %v1926 = vunpack.c.0.s8 %v1925
      %v1927 = vperm.slane %v1023, %v1926
      %v1929 = vunpack.c.l.s4 842150450
      %v1930 = vunpack.c.0.s8 %v1929
      %v1931 = vperm.slane %v1023, %v1930
      %v1933 = vunpack.c.l.s4 1414812756
      %v1934 = vunpack.c.0.s8 %v1933
      %v1935 = vperm.slane %v1023, %v1934
      %v1937 = vunpack.c.l.s4 1987475062
      %v1938 = vunpack.c.0.s8 %v1937
      %v1939 = vperm.slane %v1023, %v1938
      %v1941 = vunpack.c.l.s4 269488144
      %v1942 = vunpack.c.0.s8 %v1941
      %v1943 = vperm.slane %v1025, %v1942
      %v1945 = vunpack.c.l.s4 842150450
      %v1946 = vunpack.c.0.s8 %v1945
      %v1947 = vperm.slane %v1025, %v1946
      %v1949 = vunpack.c.l.s4 1414812756
      %v1950 = vunpack.c.0.s8 %v1949
      %v1951 = vperm.slane %v1025, %v1950
      %v1953 = vunpack.c.l.s4 1987475062
      %v1954 = vunpack.c.0.s8 %v1953
      %v1955 = vperm.slane %v1025, %v1954
      %v1957 = vunpack.c.l.s4 269488144
      %v1958 = vunpack.c.0.s8 %v1957
      %v1959 = vperm.slane %v1027, %v1958
      %v1961 = vunpack.c.l.s4 842150450
      %v1962 = vunpack.c.0.s8 %v1961
      %v1963 = vperm.slane %v1027, %v1962
      %v1965 = vunpack.c.l.s4 1414812756
      %v1966 = vunpack.c.0.s8 %v1965
      %v1967 = vperm.slane %v1027, %v1966
      %v1969 = vunpack.c.l.s4 1987475062
      %v1970 = vunpack.c.0.s8 %v1969
      %v1971 = vperm.slane %v1027, %v1970
      %v1973 = vunpack.c.l.s4 269488144
      %v1974 = vunpack.c.0.s8 %v1973
      %v1975 = vperm.slane %v1029, %v1974
      %v1977 = vunpack.c.l.s4 842150450
      %v1978 = vunpack.c.0.s8 %v1977
      %v1979 = vperm.slane %v1029, %v1978
      %v1981 = vunpack.c.l.s4 1414812756
      %v1982 = vunpack.c.0.s8 %v1981
      %v1983 = vperm.slane %v1029, %v1982
      %v1985 = vunpack.c.l.s4 1987475062
      %v1986 = vunpack.c.0.s8 %v1985
      %v1987 = vperm.slane %v1029, %v1986
      %v1989 = vunpack.c.l.s4 269488144
      %v1990 = vunpack.c.0.s8 %v1989
      %v1991 = vperm.slane %v1031, %v1990
      %v1993 = vunpack.c.l.s4 842150450
      %v1994 = vunpack.c.0.s8 %v1993
      %v1995 = vperm.slane %v1031, %v1994
      %v1997 = vunpack.c.l.s4 1414812756
      %v1998 = vunpack.c.0.s8 %v1997
      %v1999 = vperm.slane %v1031, %v1998
      %v2001 = vunpack.c.l.s4 1987475062
      %v2002 = vunpack.c.0.s8 %v2001
      %v2003 = vperm.slane %v1031, %v2002
      %v2005 = vunpack.c.l.s4 269488144
      %v2006 = vunpack.c.0.s8 %v2005
      %v2007 = vperm.slane %v1033, %v2006
      %v2009 = vunpack.c.l.s4 842150450
      %v2010 = vunpack.c.0.s8 %v2009
      %v2011 = vperm.slane %v1033, %v2010
      %v2013 = vunpack.c.l.s4 1414812756
      %v2014 = vunpack.c.0.s8 %v2013
      %v2015 = vperm.slane %v1033, %v2014
      %v2017 = vunpack.c.l.s4 1987475062
      %v2018 = vunpack.c.0.s8 %v2017
      %v2019 = vperm.slane %v1033, %v2018
      %v2021 = vunpack.c.l.s4 269488144
      %v2022 = vunpack.c.0.s8 %v2021
      %v2023 = vperm.slane %v1035, %v2022
      %v2025 = vunpack.c.l.s4 842150450
      %v2026 = vunpack.c.0.s8 %v2025
      %v2027 = vperm.slane %v1035, %v2026
      %v2029 = vunpack.c.l.s4 1414812756
      %v2030 = vunpack.c.0.s8 %v2029
      %v2031 = vperm.slane %v1035, %v2030
      %v2033 = vunpack.c.l.s4 1987475062
      %v2034 = vunpack.c.0.s8 %v2033
      %v2035 = vperm.slane %v1035, %v2034
      %v2037 = vunpack.c.l.s4 269488144
      %v2038 = vunpack.c.0.s8 %v2037
      %v2039 = vperm.slane %v1037, %v2038
      %v2041 = vunpack.c.l.s4 842150450
      %v2042 = vunpack.c.0.s8 %v2041
      %v2043 = vperm.slane %v1037, %v2042
      %v2045 = vunpack.c.l.s4 1414812756
      %v2046 = vunpack.c.0.s8 %v2045
      %v2047 = vperm.slane %v1037, %v2046
      %v2049 = vunpack.c.l.s4 1987475062
      %v2050 = vunpack.c.0.s8 %v2049
      %v2051 = vperm.slane %v1037, %v2050
      %v2053 = vunpack.c.l.s4 269488144
      %v2054 = vunpack.c.0.s8 %v2053
      %v2055 = vperm.slane %v1039, %v2054
      %v2057 = vunpack.c.l.s4 842150450
      %v2058 = vunpack.c.0.s8 %v2057
      %v2059 = vperm.slane %v1039, %v2058
      %v2061 = vunpack.c.l.s4 1414812756
      %v2062 = vunpack.c.0.s8 %v2061
      %v2063 = vperm.slane %v1039, %v2062
      %v2065 = vunpack.c.l.s4 1987475062
      %v2066 = vunpack.c.0.s8 %v2065
      %v2067 = vperm.slane %v1039, %v2066
      %v2069 = vunpack.c.l.s4 269488144
      %v2070 = vunpack.c.0.s8 %v2069
      %v2071 = vperm.slane %v1041, %v2070
      %v2073 = vunpack.c.l.s4 842150450
      %v2074 = vunpack.c.0.s8 %v2073
      %v2075 = vperm.slane %v1041, %v2074
      %v2077 = vunpack.c.l.s4 1414812756
      %v2078 = vunpack.c.0.s8 %v2077
      %v2079 = vperm.slane %v1041, %v2078
      %v2081 = vunpack.c.l.s4 1987475062
      %v2082 = vunpack.c.0.s8 %v2081
      %v2083 = vperm.slane %v1041, %v2082
      %v2085 = vunpack.c.l.s4 269488144
      %v2086 = vunpack.c.0.s8 %v2085
      %v2087 = vperm.slane %v1043, %v2086
      %v2089 = vunpack.c.l.s4 842150450
      %v2090 = vunpack.c.0.s8 %v2089
      %v2091 = vperm.slane %v1043, %v2090
      %v2093 = vunpack.c.l.s4 1414812756
      %v2094 = vunpack.c.0.s8 %v2093
      %v2095 = vperm.slane %v1043, %v2094
      %v2097 = vunpack.c.l.s4 1987475062
      %v2098 = vunpack.c.0.s8 %v2097
      %v2099 = vperm.slane %v1043, %v2098
      %v2101 = vunpack.c.l.s4 269488144
      %v2102 = vunpack.c.0.s8 %v2101
      %v2103 = vperm.slane %v1045, %v2102
      %v2105 = vunpack.c.l.s4 842150450
      %v2106 = vunpack.c.0.s8 %v2105
      %v2107 = vperm.slane %v1045, %v2106
      %v2109 = vunpack.c.l.s4 1414812756
      %v2110 = vunpack.c.0.s8 %v2109
      %v2111 = vperm.slane %v1045, %v2110
      %v2113 = vunpack.c.l.s4 1987475062
      %v2114 = vunpack.c.0.s8 %v2113
      %v2115 = vperm.slane %v1045, %v2114
      %v2117 = vunpack.c.l.s4 269488144
      %v2118 = vunpack.c.0.s8 %v2117
      %v2119 = vperm.slane %v1047, %v2118
      %v2121 = vunpack.c.l.s4 842150450
      %v2122 = vunpack.c.0.s8 %v2121
      %v2123 = vperm.slane %v1047, %v2122
      %v2125 = vunpack.c.l.s4 1414812756
      %v2126 = vunpack.c.0.s8 %v2125
      %v2127 = vperm.slane %v1047, %v2126
      %v2129 = vunpack.c.l.s4 1987475062
      %v2130 = vunpack.c.0.s8 %v2129
      %v2131 = vperm.slane %v1047, %v2130
      %v2133 = vunpack.c.l.s4 269488144
      %v2134 = vunpack.c.0.s8 %v2133
      %v2135 = vperm.slane %v1049, %v2134
      %v2137 = vunpack.c.l.s4 842150450
      %v2138 = vunpack.c.0.s8 %v2137
      %v2139 = vperm.slane %v1049, %v2138
      %v2141 = vunpack.c.l.s4 1414812756
      %v2142 = vunpack.c.0.s8 %v2141
      %v2143 = vperm.slane %v1049, %v2142
      %v2145 = vunpack.c.l.s4 1987475062
      %v2146 = vunpack.c.0.s8 %v2145
      %v2147 = vperm.slane %v1049, %v2146
      %v2149 = vunpack.c.l.s4 269488144
      %v2150 = vunpack.c.0.s8 %v2149
      %v2151 = vperm.slane %v1051, %v2150
      %v2153 = vunpack.c.l.s4 842150450
      %v2154 = vunpack.c.0.s8 %v2153
      %v2155 = vperm.slane %v1051, %v2154
      %v2157 = vunpack.c.l.s4 1414812756
      %v2158 = vunpack.c.0.s8 %v2157
      %v2159 = vperm.slane %v1051, %v2158
      %v2161 = vunpack.c.l.s4 1987475062
      %v2162 = vunpack.c.0.s8 %v2161
      %v2163 = vperm.slane %v1051, %v2162
      %v2165 = vunpack.c.l.s4 269488144
      %v2166 = vunpack.c.0.s8 %v2165
      %v2167 = vperm.slane %v1053, %v2166
      %v2169 = vunpack.c.l.s4 842150450
      %v2170 = vunpack.c.0.s8 %v2169
      %v2171 = vperm.slane %v1053, %v2170
      %v2173 = vunpack.c.l.s4 1414812756
      %v2174 = vunpack.c.0.s8 %v2173
      %v2175 = vperm.slane %v1053, %v2174
      %v2177 = vunpack.c.l.s4 1987475062
      %v2178 = vunpack.c.0.s8 %v2177
      %v2179 = vperm.slane %v1053, %v2178
      %v2181 = vunpack.c.l.s4 269488144
      %v2182 = vunpack.c.0.s8 %v2181
      %v2183 = vperm.slane %v1055, %v2182
      %v2185 = vunpack.c.l.s4 842150450
      %v2186 = vunpack.c.0.s8 %v2185
      %v2187 = vperm.slane %v1055, %v2186
      %v2189 = vunpack.c.l.s4 1414812756
      %v2190 = vunpack.c.0.s8 %v2189
      %v2191 = vperm.slane %v1055, %v2190
      %v2193 = vunpack.c.l.s4 1987475062
      %v2194 = vunpack.c.0.s8 %v2193
      %v2195 = vperm.slane %v1055, %v2194
      %v2197 = vunpack.c.l.s4 269488144
      %v2198 = vunpack.c.0.s8 %v2197
      %v2199 = vperm.slane %v1057, %v2198
      %v2201 = vunpack.c.l.s4 842150450
      %v2202 = vunpack.c.0.s8 %v2201
      %v2203 = vperm.slane %v1057, %v2202
      %v2205 = vunpack.c.l.s4 1414812756
      %v2206 = vunpack.c.0.s8 %v2205
      %v2207 = vperm.slane %v1057, %v2206
      %v2209 = vunpack.c.l.s4 1987475062
      %v2210 = vunpack.c.0.s8 %v2209
      %v2211 = vperm.slane %v1057, %v2210
      %v2213 = vunpack.c.l.s4 269488144
      %v2214 = vunpack.c.0.s8 %v2213
      %v2215 = vperm.slane %v1059, %v2214
      %v2217 = vunpack.c.l.s4 842150450
      %v2218 = vunpack.c.0.s8 %v2217
      %v2219 = vperm.slane %v1059, %v2218
      %v2221 = vunpack.c.l.s4 1414812756
      %v2222 = vunpack.c.0.s8 %v2221
      %v2223 = vperm.slane %v1059, %v2222
      %v2225 = vunpack.c.l.s4 1987475062
      %v2226 = vunpack.c.0.s8 %v2225
      %v2227 = vperm.slane %v1059, %v2226
      %v2229 = vunpack.c.l.s4 269488144
      %v2230 = vunpack.c.0.s8 %v2229
      %v2231 = vperm.slane %v1061, %v2230
      %v2233 = vunpack.c.l.s4 842150450
      %v2234 = vunpack.c.0.s8 %v2233
      %v2235 = vperm.slane %v1061, %v2234
      %v2237 = vunpack.c.l.s4 1414812756
      %v2238 = vunpack.c.0.s8 %v2237
      %v2239 = vperm.slane %v1061, %v2238
      %v2241 = vunpack.c.l.s4 1987475062
      %v2242 = vunpack.c.0.s8 %v2241
      %v2243 = vperm.slane %v1061, %v2242
      %v2245 = vunpack.c.l.s4 269488144
      %v2246 = vunpack.c.0.s8 %v2245
      %v2247 = vperm.slane %v1063, %v2246
      %v2249 = vunpack.c.l.s4 842150450
      %v2250 = vunpack.c.0.s8 %v2249
      %v2251 = vperm.slane %v1063, %v2250
      %v2253 = vunpack.c.l.s4 1414812756
      %v2254 = vunpack.c.0.s8 %v2253
      %v2255 = vperm.slane %v1063, %v2254
      %v2257 = vunpack.c.l.s4 1987475062
      %v2258 = vunpack.c.0.s8 %v2257
      %v2259 = vperm.slane %v1063, %v2258
      %v2261 = vunpack.c.l.s4 269488144
      %v2262 = vunpack.c.0.s8 %v2261
      %v2263 = vperm.slane %v1065, %v2262
      %v2265 = vunpack.c.l.s4 842150450
      %v2266 = vunpack.c.0.s8 %v2265
      %v2267 = vperm.slane %v1065, %v2266
      %v2269 = vunpack.c.l.s4 1414812756
      %v2270 = vunpack.c.0.s8 %v2269
      %v2271 = vperm.slane %v1065, %v2270
      %v2273 = vunpack.c.l.s4 1987475062
      %v2274 = vunpack.c.0.s8 %v2273
      %v2275 = vperm.slane %v1065, %v2274
      %v2277 = vunpack.c.l.s4 269488144
      %v2278 = vunpack.c.0.s8 %v2277
      %v2279 = vperm.slane %v1067, %v2278
      %v2281 = vunpack.c.l.s4 842150450
      %v2282 = vunpack.c.0.s8 %v2281
      %v2283 = vperm.slane %v1067, %v2282
      %v2285 = vunpack.c.l.s4 1414812756
      %v2286 = vunpack.c.0.s8 %v2285
      %v2287 = vperm.slane %v1067, %v2286
      %v2289 = vunpack.c.l.s4 1987475062
      %v2290 = vunpack.c.0.s8 %v2289
      %v2291 = vperm.slane %v1067, %v2290
      %v2293 = vunpack.c.l.s4 269488144
      %v2294 = vunpack.c.0.s8 %v2293
      %v2295 = vperm.slane %v1069, %v2294
      %v2297 = vunpack.c.l.s4 842150450
      %v2298 = vunpack.c.0.s8 %v2297
      %v2299 = vperm.slane %v1069, %v2298
      %v2301 = vunpack.c.l.s4 1414812756
      %v2302 = vunpack.c.0.s8 %v2301
      %v2303 = vperm.slane %v1069, %v2302
      %v2305 = vunpack.c.l.s4 1987475062
      %v2306 = vunpack.c.0.s8 %v2305
      %v2307 = vperm.slane %v1069, %v2306
      %v2309 = vunpack.c.l.s4 269488144
      %v2310 = vunpack.c.0.s8 %v2309
      %v2311 = vperm.slane %v1071, %v2310
      %v2313 = vunpack.c.l.s4 842150450
      %v2314 = vunpack.c.0.s8 %v2313
      %v2315 = vperm.slane %v1071, %v2314
      %v2317 = vunpack.c.l.s4 1414812756
      %v2318 = vunpack.c.0.s8 %v2317
      %v2319 = vperm.slane %v1071, %v2318
      %v2321 = vunpack.c.l.s4 1987475062
      %v2322 = vunpack.c.0.s8 %v2321
      %v2323 = vperm.slane %v1071, %v2322
      %v2325 = vunpack.c.l.s4 269488144
      %v2326 = vunpack.c.0.s8 %v2325
      %v2327 = vperm.slane %v1073, %v2326
      %v2329 = vunpack.c.l.s4 842150450
      %v2330 = vunpack.c.0.s8 %v2329
      %v2331 = vperm.slane %v1073, %v2330
      %v2333 = vunpack.c.l.s4 1414812756
      %v2334 = vunpack.c.0.s8 %v2333
      %v2335 = vperm.slane %v1073, %v2334
      %v2337 = vunpack.c.l.s4 1987475062
      %v2338 = vunpack.c.0.s8 %v2337
      %v2339 = vperm.slane %v1073, %v2338
      %v2341 = vunpack.c.l.s4 269488144
      %v2342 = vunpack.c.0.s8 %v2341
      %v2343 = vperm.slane %v1075, %v2342
      %v2345 = vunpack.c.l.s4 842150450
      %v2346 = vunpack.c.0.s8 %v2345
      %v2347 = vperm.slane %v1075, %v2346
      %v2349 = vunpack.c.l.s4 1414812756
      %v2350 = vunpack.c.0.s8 %v2349
      %v2351 = vperm.slane %v1075, %v2350
      %v2353 = vunpack.c.l.s4 1987475062
      %v2354 = vunpack.c.0.s8 %v2353
      %v2355 = vperm.slane %v1075, %v2354
      %v2357 = vunpack.c.l.s4 269488144
      %v2358 = vunpack.c.0.s8 %v2357
      %v2359 = vperm.slane %v1077, %v2358
      %v2361 = vunpack.c.l.s4 842150450
      %v2362 = vunpack.c.0.s8 %v2361
      %v2363 = vperm.slane %v1077, %v2362
      %v2365 = vunpack.c.l.s4 1414812756
      %v2366 = vunpack.c.0.s8 %v2365
      %v2367 = vperm.slane %v1077, %v2366
      %v2369 = vunpack.c.l.s4 1987475062
      %v2370 = vunpack.c.0.s8 %v2369
      %v2371 = vperm.slane %v1077, %v2370
      %v2373 = vunpack.c.l.s4 269488144
      %v2374 = vunpack.c.0.s8 %v2373
      %v2375 = vperm.slane %v1079, %v2374
      %v2377 = vunpack.c.l.s4 842150450
      %v2378 = vunpack.c.0.s8 %v2377
      %v2379 = vperm.slane %v1079, %v2378
      %v2381 = vunpack.c.l.s4 1414812756
      %v2382 = vunpack.c.0.s8 %v2381
      %v2383 = vperm.slane %v1079, %v2382
      %v2385 = vunpack.c.l.s4 1987475062
      %v2386 = vunpack.c.0.s8 %v2385
      %v2387 = vperm.slane %v1079, %v2386
      %v2389 = vunpack.c.l.s4 269488144
      %v2390 = vunpack.c.0.s8 %v2389
      %v2391 = vperm.slane %v1081, %v2390
      %v2393 = vunpack.c.l.s4 842150450
      %v2394 = vunpack.c.0.s8 %v2393
      %v2395 = vperm.slane %v1081, %v2394
      %v2397 = vunpack.c.l.s4 1414812756
      %v2398 = vunpack.c.0.s8 %v2397
      %v2399 = vperm.slane %v1081, %v2398
      %v2401 = vunpack.c.l.s4 1987475062
      %v2402 = vunpack.c.0.s8 %v2401
      %v2403 = vperm.slane %v1081, %v2402
      %v2405 = vunpack.c.l.s4 269488144
      %v2406 = vunpack.c.0.s8 %v2405
      %v2407 = vperm.slane %v1083, %v2406
      %v2409 = vunpack.c.l.s4 842150450
      %v2410 = vunpack.c.0.s8 %v2409
      %v2411 = vperm.slane %v1083, %v2410
      %v2413 = vunpack.c.l.s4 1414812756
      %v2414 = vunpack.c.0.s8 %v2413
      %v2415 = vperm.slane %v1083, %v2414
      %v2417 = vunpack.c.l.s4 1987475062
      %v2418 = vunpack.c.0.s8 %v2417
      %v2419 = vperm.slane %v1083, %v2418
      %v2421 = vunpack.c.l.s4 269488144
      %v2422 = vunpack.c.0.s8 %v2421
      %v2423 = vperm.slane %v1085, %v2422
      %v2425 = vunpack.c.l.s4 842150450
      %v2426 = vunpack.c.0.s8 %v2425
      %v2427 = vperm.slane %v1085, %v2426
      %v2429 = vunpack.c.l.s4 1414812756
      %v2430 = vunpack.c.0.s8 %v2429
      %v2431 = vperm.slane %v1085, %v2430
      %v2433 = vunpack.c.l.s4 1987475062
      %v2434 = vunpack.c.0.s8 %v2433
      %v2435 = vperm.slane %v1085, %v2434
      %v2437 = vunpack.c.l.s4 269488144
      %v2438 = vunpack.c.0.s8 %v2437
      %v2439 = vperm.slane %v1087, %v2438
      %v2441 = vunpack.c.l.s4 842150450
      %v2442 = vunpack.c.0.s8 %v2441
      %v2443 = vperm.slane %v1087, %v2442
      %v2445 = vunpack.c.l.s4 1414812756
      %v2446 = vunpack.c.0.s8 %v2445
      %v2447 = vperm.slane %v1087, %v2446
      %v2449 = vunpack.c.l.s4 1987475062
      %v2450 = vunpack.c.0.s8 %v2449
      %v2451 = vperm.slane %v1087, %v2450
      %v2453 = vunpack.c.l.s4 269488144
      %v2454 = vunpack.c.0.s8 %v2453
      %v2455 = vperm.slane %v1089, %v2454
      %v2457 = vunpack.c.l.s4 842150450
      %v2458 = vunpack.c.0.s8 %v2457
      %v2459 = vperm.slane %v1089, %v2458
      %v2461 = vunpack.c.l.s4 1414812756
      %v2462 = vunpack.c.0.s8 %v2461
      %v2463 = vperm.slane %v1089, %v2462
      %v2465 = vunpack.c.l.s4 1987475062
      %v2466 = vunpack.c.0.s8 %v2465
      %v2467 = vperm.slane %v1089, %v2466
      %v2469 = vunpack.c.l.s4 269488144
      %v2470 = vunpack.c.0.s8 %v2469
      %v2471 = vperm.slane %v1091, %v2470
      %v2473 = vunpack.c.l.s4 842150450
      %v2474 = vunpack.c.0.s8 %v2473
      %v2475 = vperm.slane %v1091, %v2474
      %v2477 = vunpack.c.l.s4 1414812756
      %v2478 = vunpack.c.0.s8 %v2477
      %v2479 = vperm.slane %v1091, %v2478
      %v2481 = vunpack.c.l.s4 1987475062
      %v2482 = vunpack.c.0.s8 %v2481
      %v2483 = vperm.slane %v1091, %v2482
      %v2485 = vunpack.c.l.s4 269488144
      %v2486 = vunpack.c.0.s8 %v2485
      %v2487 = vperm.slane %v1093, %v2486
      %v2489 = vunpack.c.l.s4 842150450
      %v2490 = vunpack.c.0.s8 %v2489
      %v2491 = vperm.slane %v1093, %v2490
      %v2493 = vunpack.c.l.s4 1414812756
      %v2494 = vunpack.c.0.s8 %v2493
      %v2495 = vperm.slane %v1093, %v2494
      %v2497 = vunpack.c.l.s4 1987475062
      %v2498 = vunpack.c.0.s8 %v2497
      %v2499 = vperm.slane %v1093, %v2498
      %v2501 = vunpack.c.l.s4 269488144
      %v2502 = vunpack.c.0.s8 %v2501
      %v2503 = vperm.slane %v1095, %v2502
      %v2505 = vunpack.c.l.s4 842150450
      %v2506 = vunpack.c.0.s8 %v2505
      %v2507 = vperm.slane %v1095, %v2506
      %v2509 = vunpack.c.l.s4 1414812756
      %v2510 = vunpack.c.0.s8 %v2509
      %v2511 = vperm.slane %v1095, %v2510
      %v2513 = vunpack.c.l.s4 1987475062
      %v2514 = vunpack.c.0.s8 %v2513
      %v2515 = vperm.slane %v1095, %v2514
      %v2517 = vunpack.c.l.s4 269488144
      %v2518 = vunpack.c.0.s8 %v2517
      %v2519 = vperm.slane %v1097, %v2518
      %v2521 = vunpack.c.l.s4 842150450
      %v2522 = vunpack.c.0.s8 %v2521
      %v2523 = vperm.slane %v1097, %v2522
      %v2525 = vunpack.c.l.s4 1414812756
      %v2526 = vunpack.c.0.s8 %v2525
      %v2527 = vperm.slane %v1097, %v2526
      %v2529 = vunpack.c.l.s4 1987475062
      %v2530 = vunpack.c.0.s8 %v2529
      %v2531 = vperm.slane %v1097, %v2530
      %v2533 = vunpack.c.l.s4 269488144
      %v2534 = vunpack.c.0.s8 %v2533
      %v2535 = vperm.slane %v1099, %v2534
      %v2537 = vunpack.c.l.s4 842150450
      %v2538 = vunpack.c.0.s8 %v2537
      %v2539 = vperm.slane %v1099, %v2538
      %v2541 = vunpack.c.l.s4 1414812756
      %v2542 = vunpack.c.0.s8 %v2541
      %v2543 = vperm.slane %v1099, %v2542
      %v2545 = vunpack.c.l.s4 1987475062
      %v2546 = vunpack.c.0.s8 %v2545
      %v2547 = vperm.slane %v1099, %v2546
      %v2549 = vunpack.c.l.s4 269488144
      %v2550 = vunpack.c.0.s8 %v2549
      %v2551 = vperm.slane %v1101, %v2550
      %v2553 = vunpack.c.l.s4 842150450
      %v2554 = vunpack.c.0.s8 %v2553
      %v2555 = vperm.slane %v1101, %v2554
      %v2557 = vunpack.c.l.s4 1414812756
      %v2558 = vunpack.c.0.s8 %v2557
      %v2559 = vperm.slane %v1101, %v2558
      %v2561 = vunpack.c.l.s4 1987475062
      %v2562 = vunpack.c.0.s8 %v2561
      %v2563 = vperm.slane %v1101, %v2562
      %v2565 = vunpack.c.l.s4 269488144
      %v2566 = vunpack.c.0.s8 %v2565
      %v2567 = vperm.slane %v1103, %v2566
      %v2569 = vunpack.c.l.s4 842150450
      %v2570 = vunpack.c.0.s8 %v2569
      %v2571 = vperm.slane %v1103, %v2570
      %v2573 = vunpack.c.l.s4 1414812756
      %v2574 = vunpack.c.0.s8 %v2573
      %v2575 = vperm.slane %v1103, %v2574
      %v2577 = vunpack.c.l.s4 1987475062
      %v2578 = vunpack.c.0.s8 %v2577
      %v2579 = vperm.slane %v1103, %v2578
      %v2581 = vunpack.c.l.s4 269488144
      %v2582 = vunpack.c.0.s8 %v2581
      %v2583 = vperm.slane %v1105, %v2582
      %v2585 = vunpack.c.l.s4 842150450
      %v2586 = vunpack.c.0.s8 %v2585
      %v2587 = vperm.slane %v1105, %v2586
      %v2589 = vunpack.c.l.s4 1414812756
      %v2590 = vunpack.c.0.s8 %v2589
      %v2591 = vperm.slane %v1105, %v2590
      %v2593 = vunpack.c.l.s4 1987475062
      %v2594 = vunpack.c.0.s8 %v2593
      %v2595 = vperm.slane %v1105, %v2594
      %v2597 = vunpack.c.l.s4 269488144
      %v2598 = vunpack.c.0.s8 %v2597
      %v2599 = vperm.slane %v1107, %v2598
      %v2601 = vunpack.c.l.s4 842150450
      %v2602 = vunpack.c.0.s8 %v2601
      %v2603 = vperm.slane %v1107, %v2602
      %v2605 = vunpack.c.l.s4 1414812756
      %v2606 = vunpack.c.0.s8 %v2605
      %v2607 = vperm.slane %v1107, %v2606
      %v2609 = vunpack.c.l.s4 1987475062
      %v2610 = vunpack.c.0.s8 %v2609
      %v2611 = vperm.slane %v1107, %v2610
      %v2613 = vunpack.c.l.s4 269488144
      %v2614 = vunpack.c.0.s8 %v2613
      %v2615 = vperm.slane %v1109, %v2614
      %v2617 = vunpack.c.l.s4 842150450
      %v2618 = vunpack.c.0.s8 %v2617
      %v2619 = vperm.slane %v1109, %v2618
      %v2621 = vunpack.c.l.s4 1414812756
      %v2622 = vunpack.c.0.s8 %v2621
      %v2623 = vperm.slane %v1109, %v2622
      %v2625 = vunpack.c.l.s4 1987475062
      %v2626 = vunpack.c.0.s8 %v2625
      %v2627 = vperm.slane %v1109, %v2626
      %v2629 = vunpack.c.l.s4 269488144
      %v2630 = vunpack.c.0.s8 %v2629
      %v2631 = vperm.slane %v1111, %v2630
      %v2633 = vunpack.c.l.s4 842150450
      %v2634 = vunpack.c.0.s8 %v2633
      %v2635 = vperm.slane %v1111, %v2634
      %v2637 = vunpack.c.l.s4 1414812756
      %v2638 = vunpack.c.0.s8 %v2637
      %v2639 = vperm.slane %v1111, %v2638
      %v2641 = vunpack.c.l.s4 1987475062
      %v2642 = vunpack.c.0.s8 %v2641
      %v2643 = vperm.slane %v1111, %v2642
      %v2645 = vunpack.c.l.s4 269488144
      %v2646 = vunpack.c.0.s8 %v2645
      %v2647 = vperm.slane %v1113, %v2646
      %v2649 = vunpack.c.l.s4 842150450
      %v2650 = vunpack.c.0.s8 %v2649
      %v2651 = vperm.slane %v1113, %v2650
      %v2653 = vunpack.c.l.s4 1414812756
      %v2654 = vunpack.c.0.s8 %v2653
      %v2655 = vperm.slane %v1113, %v2654
      %v2657 = vunpack.c.l.s4 1987475062
      %v2658 = vunpack.c.0.s8 %v2657
      %v2659 = vperm.slane %v1113, %v2658
      %v2661 = vunpack.c.l.s4 269488144
      %v2662 = vunpack.c.0.s8 %v2661
      %v2663 = vperm.slane %v1115, %v2662
      %v2665 = vunpack.c.l.s4 842150450
      %v2666 = vunpack.c.0.s8 %v2665
      %v2667 = vperm.slane %v1115, %v2666
      %v2669 = vunpack.c.l.s4 1414812756
      %v2670 = vunpack.c.0.s8 %v2669
      %v2671 = vperm.slane %v1115, %v2670
      %v2673 = vunpack.c.l.s4 1987475062
      %v2674 = vunpack.c.0.s8 %v2673
      %v2675 = vperm.slane %v1115, %v2674
      %v2677 = vunpack.c.l.s4 269488144
      %v2678 = vunpack.c.0.s8 %v2677
      %v2679 = vperm.slane %v1117, %v2678
      %v2681 = vunpack.c.l.s4 842150450
      %v2682 = vunpack.c.0.s8 %v2681
      %v2683 = vperm.slane %v1117, %v2682
      %v2685 = vunpack.c.l.s4 1414812756
      %v2686 = vunpack.c.0.s8 %v2685
      %v2687 = vperm.slane %v1117, %v2686
      %v2689 = vunpack.c.l.s4 1987475062
      %v2690 = vunpack.c.0.s8 %v2689
      %v2691 = vperm.slane %v1117, %v2690
      %v2693 = vunpack.c.l.s4 269488144
      %v2694 = vunpack.c.0.s8 %v2693
      %v2695 = vperm.slane %v1119, %v2694
      %v2697 = vunpack.c.l.s4 842150450
      %v2698 = vunpack.c.0.s8 %v2697
      %v2699 = vperm.slane %v1119, %v2698
      %v2701 = vunpack.c.l.s4 1414812756
      %v2702 = vunpack.c.0.s8 %v2701
      %v2703 = vperm.slane %v1119, %v2702
      %v2705 = vunpack.c.l.s4 1987475062
      %v2706 = vunpack.c.0.s8 %v2705
      %v2707 = vperm.slane %v1119, %v2706
      %v2709 = vunpack.c.l.s4 269488144
      %v2710 = vunpack.c.0.s8 %v2709
      %v2711 = vperm.slane %v1121, %v2710
      %v2713 = vunpack.c.l.s4 842150450
      %v2714 = vunpack.c.0.s8 %v2713
      %v2715 = vperm.slane %v1121, %v2714
      %v2717 = vunpack.c.l.s4 1414812756
      %v2718 = vunpack.c.0.s8 %v2717
      %v2719 = vperm.slane %v1121, %v2718
      %v2721 = vunpack.c.l.s4 1987475062
      %v2722 = vunpack.c.0.s8 %v2721
      %v2723 = vperm.slane %v1121, %v2722
      %v2725 = vunpack.c.l.s4 269488144
      %v2726 = vunpack.c.0.s8 %v2725
      %v2727 = vperm.slane %v1123, %v2726
      %v2729 = vunpack.c.l.s4 842150450
      %v2730 = vunpack.c.0.s8 %v2729
      %v2731 = vperm.slane %v1123, %v2730
      %v2733 = vunpack.c.l.s4 1414812756
      %v2734 = vunpack.c.0.s8 %v2733
      %v2735 = vperm.slane %v1123, %v2734
      %v2737 = vunpack.c.l.s4 1987475062
      %v2738 = vunpack.c.0.s8 %v2737
      %v2739 = vperm.slane %v1123, %v2738
      %v2741 = vunpack.c.l.s4 269488144
      %v2742 = vunpack.c.0.s8 %v2741
      %v2743 = vperm.slane %v1125, %v2742
      %v2745 = vunpack.c.l.s4 842150450
      %v2746 = vunpack.c.0.s8 %v2745
      %v2747 = vperm.slane %v1125, %v2746
      %v2749 = vunpack.c.l.s4 1414812756
      %v2750 = vunpack.c.0.s8 %v2749
      %v2751 = vperm.slane %v1125, %v2750
      %v2753 = vunpack.c.l.s4 1987475062
      %v2754 = vunpack.c.0.s8 %v2753
      %v2755 = vperm.slane %v1125, %v2754
      %v2757 = vunpack.c.l.s4 269488144
      %v2758 = vunpack.c.0.s8 %v2757
      %v2759 = vperm.slane %v1127, %v2758
      %v2761 = vunpack.c.l.s4 842150450
      %v2762 = vunpack.c.0.s8 %v2761
      %v2763 = vperm.slane %v1127, %v2762
      %v2765 = vunpack.c.l.s4 1414812756
      %v2766 = vunpack.c.0.s8 %v2765
      %v2767 = vperm.slane %v1127, %v2766
      %v2769 = vunpack.c.l.s4 1987475062
      %v2770 = vunpack.c.0.s8 %v2769
      %v2771 = vperm.slane %v1127, %v2770
      %v2773 = vunpack.c.l.s4 269488144
      %v2774 = vunpack.c.0.s8 %v2773
      %v2775 = vperm.slane %v1129, %v2774
      %v2777 = vunpack.c.l.s4 842150450
      %v2778 = vunpack.c.0.s8 %v2777
      %v2779 = vperm.slane %v1129, %v2778
      %v2781 = vunpack.c.l.s4 1414812756
      %v2782 = vunpack.c.0.s8 %v2781
      %v2783 = vperm.slane %v1129, %v2782
      %v2785 = vunpack.c.l.s4 1987475062
      %v2786 = vunpack.c.0.s8 %v2785
      %v2787 = vperm.slane %v1129, %v2786
      %v2789 = vunpack.c.l.s4 269488144
      %v2790 = vunpack.c.0.s8 %v2789
      %v2791 = vperm.slane %v1131, %v2790
      %v2793 = vunpack.c.l.s4 842150450
      %v2794 = vunpack.c.0.s8 %v2793
      %v2795 = vperm.slane %v1131, %v2794
      %v2797 = vunpack.c.l.s4 1414812756
      %v2798 = vunpack.c.0.s8 %v2797
      %v2799 = vperm.slane %v1131, %v2798
      %v2801 = vunpack.c.l.s4 1987475062
      %v2802 = vunpack.c.0.s8 %v2801
      %v2803 = vperm.slane %v1131, %v2802
      %v2805 = vunpack.c.l.s4 269488144
      %v2806 = vunpack.c.0.s8 %v2805
      %v2807 = vperm.slane %v1133, %v2806
      %v2809 = vunpack.c.l.s4 842150450
      %v2810 = vunpack.c.0.s8 %v2809
      %v2811 = vperm.slane %v1133, %v2810
      %v2813 = vunpack.c.l.s4 1414812756
      %v2814 = vunpack.c.0.s8 %v2813
      %v2815 = vperm.slane %v1133, %v2814
      %v2817 = vunpack.c.l.s4 1987475062
      %v2818 = vunpack.c.0.s8 %v2817
      %v2819 = vperm.slane %v1133, %v2818
      %v2821 = vunpack.c.l.s4 269488144
      %v2822 = vunpack.c.0.s8 %v2821
      %v2823 = vperm.slane %v1135, %v2822
      %v2825 = vunpack.c.l.s4 842150450
      %v2826 = vunpack.c.0.s8 %v2825
      %v2827 = vperm.slane %v1135, %v2826
      %v2829 = vunpack.c.l.s4 1414812756
      %v2830 = vunpack.c.0.s8 %v2829
      %v2831 = vperm.slane %v1135, %v2830
      %v2833 = vunpack.c.l.s4 1987475062
      %v2834 = vunpack.c.0.s8 %v2833
      %v2835 = vperm.slane %v1135, %v2834
      %v2837 = vunpack.c.l.s4 269488144
      %v2838 = vunpack.c.0.s8 %v2837
      %v2839 = vperm.slane %v1137, %v2838
      %v2841 = vunpack.c.l.s4 842150450
      %v2842 = vunpack.c.0.s8 %v2841
      %v2843 = vperm.slane %v1137, %v2842
      %v2845 = vunpack.c.l.s4 1414812756
      %v2846 = vunpack.c.0.s8 %v2845
      %v2847 = vperm.slane %v1137, %v2846
      %v2849 = vunpack.c.l.s4 1987475062
      %v2850 = vunpack.c.0.s8 %v2849
      %v2851 = vperm.slane %v1137, %v2850
      %v2853 = vunpack.c.l.s4 269488144
      %v2854 = vunpack.c.0.s8 %v2853
      %v2855 = vperm.slane %v1139, %v2854
      %v2857 = vunpack.c.l.s4 842150450
      %v2858 = vunpack.c.0.s8 %v2857
      %v2859 = vperm.slane %v1139, %v2858
      %v2861 = vunpack.c.l.s4 1414812756
      %v2862 = vunpack.c.0.s8 %v2861
      %v2863 = vperm.slane %v1139, %v2862
      %v2865 = vunpack.c.l.s4 1987475062
      %v2866 = vunpack.c.0.s8 %v2865
      %v2867 = vperm.slane %v1139, %v2866
      %v2869 = vunpack.c.l.s4 269488144
      %v2870 = vunpack.c.0.s8 %v2869
      %v2871 = vperm.slane %v1141, %v2870
      %v2873 = vunpack.c.l.s4 842150450
      %v2874 = vunpack.c.0.s8 %v2873
      %v2875 = vperm.slane %v1141, %v2874
      %v2877 = vunpack.c.l.s4 1414812756
      %v2878 = vunpack.c.0.s8 %v2877
      %v2879 = vperm.slane %v1141, %v2878
      %v2881 = vunpack.c.l.s4 1987475062
      %v2882 = vunpack.c.0.s8 %v2881
      %v2883 = vperm.slane %v1141, %v2882
      %v2885 = vunpack.c.l.s4 269488144
      %v2886 = vunpack.c.0.s8 %v2885
      %v2887 = vperm.slane %v1143, %v2886
      %v2889 = vunpack.c.l.s4 842150450
      %v2890 = vunpack.c.0.s8 %v2889
      %v2891 = vperm.slane %v1143, %v2890
      %v2893 = vunpack.c.l.s4 1414812756
      %v2894 = vunpack.c.0.s8 %v2893
      %v2895 = vperm.slane %v1143, %v2894
      %v2897 = vunpack.c.l.s4 1987475062
      %v2898 = vunpack.c.0.s8 %v2897
      %v2899 = vperm.slane %v1143, %v2898
      %v2901 = vunpack.c.l.s4 269488144
      %v2902 = vunpack.c.0.s8 %v2901
      %v2903 = vperm.slane %v1145, %v2902
      %v2905 = vunpack.c.l.s4 842150450
      %v2906 = vunpack.c.0.s8 %v2905
      %v2907 = vperm.slane %v1145, %v2906
      %v2909 = vunpack.c.l.s4 1414812756
      %v2910 = vunpack.c.0.s8 %v2909
      %v2911 = vperm.slane %v1145, %v2910
      %v2913 = vunpack.c.l.s4 1987475062
      %v2914 = vunpack.c.0.s8 %v2913
      %v2915 = vperm.slane %v1145, %v2914
      %v2917 = vunpack.c.l.s4 269488144
      %v2918 = vunpack.c.0.s8 %v2917
      %v2919 = vperm.slane %v1147, %v2918
      %v2921 = vunpack.c.l.s4 842150450
      %v2922 = vunpack.c.0.s8 %v2921
      %v2923 = vperm.slane %v1147, %v2922
      %v2925 = vunpack.c.l.s4 1414812756
      %v2926 = vunpack.c.0.s8 %v2925
      %v2927 = vperm.slane %v1147, %v2926
      %v2929 = vunpack.c.l.s4 1987475062
      %v2930 = vunpack.c.0.s8 %v2929
      %v2931 = vperm.slane %v1147, %v2930
      %v2933 = vunpack.c.l.s4 269488144
      %v2934 = vunpack.c.0.s8 %v2933
      %v2935 = vperm.slane %v1149, %v2934
      %v2937 = vunpack.c.l.s4 842150450
      %v2938 = vunpack.c.0.s8 %v2937
      %v2939 = vperm.slane %v1149, %v2938
      %v2941 = vunpack.c.l.s4 1414812756
      %v2942 = vunpack.c.0.s8 %v2941
      %v2943 = vperm.slane %v1149, %v2942
      %v2945 = vunpack.c.l.s4 1987475062
      %v2946 = vunpack.c.0.s8 %v2945
      %v2947 = vperm.slane %v1149, %v2946
      %v2949 = vunpack.c.l.s4 269488144
      %v2950 = vunpack.c.0.s8 %v2949
      %v2951 = vperm.slane %v1151, %v2950
      %v2953 = vunpack.c.l.s4 842150450
      %v2954 = vunpack.c.0.s8 %v2953
      %v2955 = vperm.slane %v1151, %v2954
      %v2957 = vunpack.c.l.s4 1414812756
      %v2958 = vunpack.c.0.s8 %v2957
      %v2959 = vperm.slane %v1151, %v2958
      %v2961 = vunpack.c.l.s4 1987475062
      %v2962 = vunpack.c.0.s8 %v2961
      %v2963 = vperm.slane %v1151, %v2962
      %v2965 = vunpack.c.l.s4 269488144
      %v2966 = vunpack.c.0.s8 %v2965
      %v2967 = vperm.slane %v1153, %v2966
      %v2969 = vunpack.c.l.s4 842150450
      %v2970 = vunpack.c.0.s8 %v2969
      %v2971 = vperm.slane %v1153, %v2970
      %v2973 = vunpack.c.l.s4 1414812756
      %v2974 = vunpack.c.0.s8 %v2973
      %v2975 = vperm.slane %v1153, %v2974
      %v2977 = vunpack.c.l.s4 1987475062
      %v2978 = vunpack.c.0.s8 %v2977
      %v2979 = vperm.slane %v1153, %v2978
      %v2981 = vunpack.c.l.s4 269488144
      %v2982 = vunpack.c.0.s8 %v2981
      %v2983 = vperm.slane %v1155, %v2982
      %v2985 = vunpack.c.l.s4 842150450
      %v2986 = vunpack.c.0.s8 %v2985
      %v2987 = vperm.slane %v1155, %v2986
      %v2989 = vunpack.c.l.s4 1414812756
      %v2990 = vunpack.c.0.s8 %v2989
      %v2991 = vperm.slane %v1155, %v2990
      %v2993 = vunpack.c.l.s4 1987475062
      %v2994 = vunpack.c.0.s8 %v2993
      %v2995 = vperm.slane %v1155, %v2994
      %v2997 = vunpack.c.l.s4 269488144
      %v2998 = vunpack.c.0.s8 %v2997
      %v2999 = vperm.slane %v1157, %v2998
      %v3001 = vunpack.c.l.s4 842150450
      %v3002 = vunpack.c.0.s8 %v3001
      %v3003 = vperm.slane %v1157, %v3002
      %v3005 = vunpack.c.l.s4 1414812756
      %v3006 = vunpack.c.0.s8 %v3005
      %v3007 = vperm.slane %v1157, %v3006
      %v3009 = vunpack.c.l.s4 1987475062
      %v3010 = vunpack.c.0.s8 %v3009
      %v3011 = vperm.slane %v1157, %v3010
      %v3013 = vunpack.c.l.s4 269488144
      %v3014 = vunpack.c.0.s8 %v3013
      %v3015 = vperm.slane %v1159, %v3014
      %v3017 = vunpack.c.l.s4 842150450
      %v3018 = vunpack.c.0.s8 %v3017
      %v3019 = vperm.slane %v1159, %v3018
      %v3021 = vunpack.c.l.s4 1414812756
      %v3022 = vunpack.c.0.s8 %v3021
      %v3023 = vperm.slane %v1159, %v3022
      %v3025 = vunpack.c.l.s4 1987475062
      %v3026 = vunpack.c.0.s8 %v3025
      %v3027 = vperm.slane %v1159, %v3026
      %v3029 = vunpack.c.l.s4 269488144
      %v3030 = vunpack.c.0.s8 %v3029
      %v3031 = vperm.slane %v1161, %v3030
      %v3033 = vunpack.c.l.s4 842150450
      %v3034 = vunpack.c.0.s8 %v3033
      %v3035 = vperm.slane %v1161, %v3034
      %v3037 = vunpack.c.l.s4 1414812756
      %v3038 = vunpack.c.0.s8 %v3037
      %v3039 = vperm.slane %v1161, %v3038
      %v3041 = vunpack.c.l.s4 1987475062
      %v3042 = vunpack.c.0.s8 %v3041
      %v3043 = vperm.slane %v1161, %v3042
      %v3045 = vunpack.c.l.s4 269488144
      %v3046 = vunpack.c.0.s8 %v3045
      %v3047 = vperm.slane %v1163, %v3046
      %v3049 = vunpack.c.l.s4 842150450
      %v3050 = vunpack.c.0.s8 %v3049
      %v3051 = vperm.slane %v1163, %v3050
      %v3053 = vunpack.c.l.s4 1414812756
      %v3054 = vunpack.c.0.s8 %v3053
      %v3055 = vperm.slane %v1163, %v3054
      %v3057 = vunpack.c.l.s4 1987475062
      %v3058 = vunpack.c.0.s8 %v3057
      %v3059 = vperm.slane %v1163, %v3058
      %v3061 = vunpack.c.l.s4 269488144
      %v3062 = vunpack.c.0.s8 %v3061
      %v3063 = vperm.slane %v1165, %v3062
      %v3065 = vunpack.c.l.s4 842150450
      %v3066 = vunpack.c.0.s8 %v3065
      %v3067 = vperm.slane %v1165, %v3066
      %v3069 = vunpack.c.l.s4 1414812756
      %v3070 = vunpack.c.0.s8 %v3069
      %v3071 = vperm.slane %v1165, %v3070
      %v3073 = vunpack.c.l.s4 1987475062
      %v3074 = vunpack.c.0.s8 %v3073
      %v3075 = vperm.slane %v1165, %v3074
      %v3077 = vunpack.c.l.s4 269488144
      %v3078 = vunpack.c.0.s8 %v3077
      %v3079 = vperm.slane %v1167, %v3078
      %v3081 = vunpack.c.l.s4 842150450
      %v3082 = vunpack.c.0.s8 %v3081
      %v3083 = vperm.slane %v1167, %v3082
      %v3085 = vunpack.c.l.s4 1414812756
      %v3086 = vunpack.c.0.s8 %v3085
      %v3087 = vperm.slane %v1167, %v3086
      %v3089 = vunpack.c.l.s4 1987475062
      %v3090 = vunpack.c.0.s8 %v3089
      %v3091 = vperm.slane %v1167, %v3090
      %v3093 = vunpack.c.l.s4 269488144
      %v3094 = vunpack.c.0.s8 %v3093
      %v3095 = vperm.slane %v1169, %v3094
      %v3097 = vunpack.c.l.s4 842150450
      %v3098 = vunpack.c.0.s8 %v3097
      %v3099 = vperm.slane %v1169, %v3098
      %v3101 = vunpack.c.l.s4 1414812756
      %v3102 = vunpack.c.0.s8 %v3101
      %v3103 = vperm.slane %v1169, %v3102
      %v3105 = vunpack.c.l.s4 1987475062
      %v3106 = vunpack.c.0.s8 %v3105
      %v3107 = vperm.slane %v1169, %v3106
      %v3109 = vunpack.c.l.s4 269488144
      %v3110 = vunpack.c.0.s8 %v3109
      %v3111 = vperm.slane %v1171, %v3110
      %v3113 = vunpack.c.l.s4 842150450
      %v3114 = vunpack.c.0.s8 %v3113
      %v3115 = vperm.slane %v1171, %v3114
      %v3117 = vunpack.c.l.s4 1414812756
      %v3118 = vunpack.c.0.s8 %v3117
      %v3119 = vperm.slane %v1171, %v3118
      %v3121 = vunpack.c.l.s4 1987475062
      %v3122 = vunpack.c.0.s8 %v3121
      %v3123 = vperm.slane %v1171, %v3122
      %v3125 = vunpack.c.l.s4 269488144
      %v3126 = vunpack.c.0.s8 %v3125
      %v3127 = vperm.slane %v1173, %v3126
      %v3129 = vunpack.c.l.s4 842150450
      %v3130 = vunpack.c.0.s8 %v3129
      %v3131 = vperm.slane %v1173, %v3130
      %v3133 = vunpack.c.l.s4 1414812756
      %v3134 = vunpack.c.0.s8 %v3133
      %v3135 = vperm.slane %v1173, %v3134
      %v3137 = vunpack.c.l.s4 1987475062
      %v3138 = vunpack.c.0.s8 %v3137
      %v3139 = vperm.slane %v1173, %v3138
      %v3141 = vunpack.c.l.s4 269488144
      %v3142 = vunpack.c.0.s8 %v3141
      %v3143 = vperm.slane %v1175, %v3142
      %v3145 = vunpack.c.l.s4 842150450
      %v3146 = vunpack.c.0.s8 %v3145
      %v3147 = vperm.slane %v1175, %v3146
      %v3149 = vunpack.c.l.s4 1414812756
      %v3150 = vunpack.c.0.s8 %v3149
      %v3151 = vperm.slane %v1175, %v3150
      %v3153 = vunpack.c.l.s4 1987475062
      %v3154 = vunpack.c.0.s8 %v3153
      %v3155 = vperm.slane %v1175, %v3154
      %v3157 = vunpack.c.l.s4 269488144
      %v3158 = vunpack.c.0.s8 %v3157
      %v3159 = vperm.slane %v1177, %v3158
      %v3161 = vunpack.c.l.s4 842150450
      %v3162 = vunpack.c.0.s8 %v3161
      %v3163 = vperm.slane %v1177, %v3162
      %v3165 = vunpack.c.l.s4 1414812756
      %v3166 = vunpack.c.0.s8 %v3165
      %v3167 = vperm.slane %v1177, %v3166
      %v3169 = vunpack.c.l.s4 1987475062
      %v3170 = vunpack.c.0.s8 %v3169
      %v3171 = vperm.slane %v1177, %v3170
      %v3173 = vunpack.c.l.s4 269488144
      %v3174 = vunpack.c.0.s8 %v3173
      %v3175 = vperm.slane %v1179, %v3174
      %v3177 = vunpack.c.l.s4 842150450
      %v3178 = vunpack.c.0.s8 %v3177
      %v3179 = vperm.slane %v1179, %v3178
      %v3181 = vunpack.c.l.s4 1414812756
      %v3182 = vunpack.c.0.s8 %v3181
      %v3183 = vperm.slane %v1179, %v3182
      %v3185 = vunpack.c.l.s4 1987475062
      %v3186 = vunpack.c.0.s8 %v3185
      %v3187 = vperm.slane %v1179, %v3186
      %v3189 = vunpack.c.l.s4 269488144
      %v3190 = vunpack.c.0.s8 %v3189
      %v3191 = vperm.slane %v1181, %v3190
      %v3193 = vunpack.c.l.s4 842150450
      %v3194 = vunpack.c.0.s8 %v3193
      %v3195 = vperm.slane %v1181, %v3194
      %v3197 = vunpack.c.l.s4 1414812756
      %v3198 = vunpack.c.0.s8 %v3197
      %v3199 = vperm.slane %v1181, %v3198
      %v3201 = vunpack.c.l.s4 1987475062
      %v3202 = vunpack.c.0.s8 %v3201
      %v3203 = vperm.slane %v1181, %v3202
      %v3205 = vunpack.c.l.s4 269488144
      %v3206 = vunpack.c.0.s8 %v3205
      %v3207 = vperm.slane %v1183, %v3206
      %v3209 = vunpack.c.l.s4 842150450
      %v3210 = vunpack.c.0.s8 %v3209
      %v3211 = vperm.slane %v1183, %v3210
      %v3213 = vunpack.c.l.s4 1414812756
      %v3214 = vunpack.c.0.s8 %v3213
      %v3215 = vperm.slane %v1183, %v3214
      %v3217 = vunpack.c.l.s4 1987475062
      %v3218 = vunpack.c.0.s8 %v3217
      %v3219 = vperm.slane %v1183, %v3218
      %v3221 = vunpack.c.l.s4 269488144
      %v3222 = vunpack.c.0.s8 %v3221
      %v3223 = vperm.slane %v1185, %v3222
      %v3225 = vunpack.c.l.s4 842150450
      %v3226 = vunpack.c.0.s8 %v3225
      %v3227 = vperm.slane %v1185, %v3226
      %v3229 = vunpack.c.l.s4 1414812756
      %v3230 = vunpack.c.0.s8 %v3229
      %v3231 = vperm.slane %v1185, %v3230
      %v3233 = vunpack.c.l.s4 1987475062
      %v3234 = vunpack.c.0.s8 %v3233
      %v3235 = vperm.slane %v1185, %v3234
      %v3237 = vunpack.c.l.s4 269488144
      %v3238 = vunpack.c.0.s8 %v3237
      %v3239 = vperm.slane %v1187, %v3238
      %v3241 = vunpack.c.l.s4 842150450
      %v3242 = vunpack.c.0.s8 %v3241
      %v3243 = vperm.slane %v1187, %v3242
      %v3245 = vunpack.c.l.s4 1414812756
      %v3246 = vunpack.c.0.s8 %v3245
      %v3247 = vperm.slane %v1187, %v3246
      %v3249 = vunpack.c.l.s4 1987475062
      %v3250 = vunpack.c.0.s8 %v3249
      %v3251 = vperm.slane %v1187, %v3250
      %v3253 = vunpack.c.l.s4 269488144
      %v3254 = vunpack.c.0.s8 %v3253
      %v3255 = vperm.slane %v1189, %v3254
      %v3257 = vunpack.c.l.s4 842150450
      %v3258 = vunpack.c.0.s8 %v3257
      %v3259 = vperm.slane %v1189, %v3258
      %v3261 = vunpack.c.l.s4 1414812756
      %v3262 = vunpack.c.0.s8 %v3261
      %v3263 = vperm.slane %v1189, %v3262
      %v3265 = vunpack.c.l.s4 1987475062
      %v3266 = vunpack.c.0.s8 %v3265
      %v3267 = vperm.slane %v1189, %v3266
      %v3269 = vunpack.c.l.s4 269488144
      %v3270 = vunpack.c.0.s8 %v3269
      %v3271 = vperm.slane %v1191, %v3270
      %v3273 = vunpack.c.l.s4 842150450
      %v3274 = vunpack.c.0.s8 %v3273
      %v3275 = vperm.slane %v1191, %v3274
      %v3277 = vunpack.c.l.s4 1414812756
      %v3278 = vunpack.c.0.s8 %v3277
      %v3279 = vperm.slane %v1191, %v3278
      %v3281 = vunpack.c.l.s4 1987475062
      %v3282 = vunpack.c.0.s8 %v3281
      %v3283 = vperm.slane %v1191, %v3282
      %v3285 = vunpack.c.l.s4 269488144
      %v3286 = vunpack.c.0.s8 %v3285
      %v3287 = vperm.slane %v1193, %v3286
      %v3289 = vunpack.c.l.s4 842150450
      %v3290 = vunpack.c.0.s8 %v3289
      %v3291 = vperm.slane %v1193, %v3290
      %v3293 = vunpack.c.l.s4 1414812756
      %v3294 = vunpack.c.0.s8 %v3293
      %v3295 = vperm.slane %v1193, %v3294
      %v3297 = vunpack.c.l.s4 1987475062
      %v3298 = vunpack.c.0.s8 %v3297
      %v3299 = vperm.slane %v1193, %v3298
      %v3301 = vunpack.c.l.s4 269488144
      %v3302 = vunpack.c.0.s8 %v3301
      %v3303 = vperm.slane %v1195, %v3302
      %v3305 = vunpack.c.l.s4 842150450
      %v3306 = vunpack.c.0.s8 %v3305
      %v3307 = vperm.slane %v1195, %v3306
      %v3309 = vunpack.c.l.s4 1414812756
      %v3310 = vunpack.c.0.s8 %v3309
      %v3311 = vperm.slane %v1195, %v3310
      %v3313 = vunpack.c.l.s4 1987475062
      %v3314 = vunpack.c.0.s8 %v3313
      %v3315 = vperm.slane %v1195, %v3314
      %v3317 = vunpack.c.l.s4 269488144
      %v3318 = vunpack.c.0.s8 %v3317
      %v3319 = vperm.slane %v1197, %v3318
      %v3321 = vunpack.c.l.s4 842150450
      %v3322 = vunpack.c.0.s8 %v3321
      %v3323 = vperm.slane %v1197, %v3322
      %v3325 = vunpack.c.l.s4 1414812756
      %v3326 = vunpack.c.0.s8 %v3325
      %v3327 = vperm.slane %v1197, %v3326
      %v3329 = vunpack.c.l.s4 1987475062
      %v3330 = vunpack.c.0.s8 %v3329
      %v3331 = vperm.slane %v1197, %v3330
      %v3333 = vunpack.c.l.s4 269488144
      %v3334 = vunpack.c.0.s8 %v3333
      %v3335 = vperm.slane %v1199, %v3334
      %v3337 = vunpack.c.l.s4 842150450
      %v3338 = vunpack.c.0.s8 %v3337
      %v3339 = vperm.slane %v1199, %v3338
      %v3341 = vunpack.c.l.s4 1414812756
      %v3342 = vunpack.c.0.s8 %v3341
      %v3343 = vperm.slane %v1199, %v3342
      %v3345 = vunpack.c.l.s4 1987475062
      %v3346 = vunpack.c.0.s8 %v3345
      %v3347 = vperm.slane %v1199, %v3346
      %v3349 = vunpack.c.l.s4 269488144
      %v3350 = vunpack.c.0.s8 %v3349
      %v3351 = vperm.slane %v1201, %v3350
      %v3353 = vunpack.c.l.s4 842150450
      %v3354 = vunpack.c.0.s8 %v3353
      %v3355 = vperm.slane %v1201, %v3354
      %v3357 = vunpack.c.l.s4 1414812756
      %v3358 = vunpack.c.0.s8 %v3357
      %v3359 = vperm.slane %v1201, %v3358
      %v3361 = vunpack.c.l.s4 1987475062
      %v3362 = vunpack.c.0.s8 %v3361
      %v3363 = vperm.slane %v1201, %v3362
      %v3365 = vunpack.c.l.s4 269488144
      %v3366 = vunpack.c.0.s8 %v3365
      %v3367 = vperm.slane %v1203, %v3366
      %v3369 = vunpack.c.l.s4 842150450
      %v3370 = vunpack.c.0.s8 %v3369
      %v3371 = vperm.slane %v1203, %v3370
      %v3373 = vunpack.c.l.s4 1414812756
      %v3374 = vunpack.c.0.s8 %v3373
      %v3375 = vperm.slane %v1203, %v3374
      %v3377 = vunpack.c.l.s4 1987475062
      %v3378 = vunpack.c.0.s8 %v3377
      %v3379 = vperm.slane %v1203, %v3378
      %3380 = vst [vmem:[#allocation1] ss:$4 sm:$0xff] %v1335
      %s3381 = scalar_lea.vmem [#allocation1], 1
      %3382 = vst [vmem:[%s3381] ss:$4 sm:$0xff] %v1339
      %s3383 = scalar_lea.vmem [#allocation1], 2
      %3384 = vst [vmem:[%s3383] ss:$4 sm:$0xff] %v1343
      %s3385 = scalar_lea.vmem [#allocation1], 3
      %3386 = vst [vmem:[%s3385] ss:$4 sm:$0xff] %v1347
      %s3387 = scalar_lea.vmem [#allocation1], 32
      %3388 = vst [vmem:[%s3387] ss:$4 sm:$0xff] %v1351
      %s3389 = scalar_lea.vmem [#allocation1], 33
      %3390 = vst [vmem:[%s3389] ss:$4 sm:$0xff] %v1355
      %s3391 = scalar_lea.vmem [#allocation1], 34
      %3392 = vst [vmem:[%s3391] ss:$4 sm:$0xff] %v1359
      %s3393 = scalar_lea.vmem [#allocation1], 35
      %3394 = vst [vmem:[%s3393] ss:$4 sm:$0xff] %v1363
      %v3395 = vld.sshfl [vmem:[#allocation1] sm:$0xff pattern:$0x73625140]
      %v3396 = vld.sshfl [vmem:[#allocation1 + $0x20] sm:$0xff pattern:$0x73625140]
      %3397 = vst [vmem:[#allocation1] ss:$4 sm:$0xff] %v1367
      %3398 = vst [vmem:[%s3381] ss:$4 sm:$0xff] %v1371
      %3399 = vst [vmem:[%s3383] ss:$4 sm:$0xff] %v1375
      %3400 = vst [vmem:[%s3385] ss:$4 sm:$0xff] %v1379
      %3401 = vst [vmem:[%s3387] ss:$4 sm:$0xff] %v1383
      %3402 = vst [vmem:[%s3389] ss:$4 sm:$0xff] %v1387
      %3403 = vst [vmem:[%s3391] ss:$4 sm:$0xff] %v1391
      %3404 = vst [vmem:[%s3393] ss:$4 sm:$0xff] %v1395
      %v3405 = vld.sshfl [vmem:[#allocation1] sm:$0xff pattern:$0x73625140]
      %v3406 = vld.sshfl [vmem:[#allocation1 + $0x20] sm:$0xff pattern:$0x73625140]
      %3407 = vst [vmem:[#allocation1] ss:$4 sm:$0xff] %v1399
      %3408 = vst [vmem:[%s3381] ss:$4 sm:$0xff] %v1403
      %3409 = vst [vmem:[%s3383] ss:$4 sm:$0xff] %v1407
      %3410 = vst [vmem:[%s3385] ss:$4 sm:$0xff] %v1411
      %3411 = vst [vmem:[%s3387] ss:$4 sm:$0xff] %v1415
      %3412 = vst [vmem:[%s3389] ss:$4 sm:$0xff] %v1419
      %3413 = vst [vmem:[%s3391] ss:$4 sm:$0xff] %v1423
      %3414 = vst [vmem:[%s3393] ss:$4 sm:$0xff] %v1427
      %v3415 = vld.sshfl [vmem:[#allocation1] sm:$0xff pattern:$0x73625140]
      %v3416 = vld.sshfl [vmem:[#allocation1 + $0x20] sm:$0xff pattern:$0x73625140]
      %3417 = vst [vmem:[#allocation1] ss:$4 sm:$0xff] %v1431
      %3418 = vst [vmem:[%s3381] ss:$4 sm:$0xff] %v1435
      %3419 = vst [vmem:[%s3383] ss:$4 sm:$0xff] %v1439
      %3420 = vst [vmem:[%s3385] ss:$4 sm:$0xff] %v1443
      %3421 = vst [vmem:[%s3387] ss:$4 sm:$0xff] %v1447
      %3422 = vst [vmem:[%s3389] ss:$4 sm:$0xff] %v1451
      %3423 = vst [vmem:[%s3391] ss:$4 sm:$0xff] %v1455
      %3424 = vst [vmem:[%s3393] ss:$4 sm:$0xff] %v1459
      %v3425 = vld.sshfl [vmem:[#allocation1] sm:$0xff pattern:$0x73625140]
      %v3426 = vld.sshfl [vmem:[#allocation1 + $0x20] sm:$0xff pattern:$0x73625140]
      %3427 = vst [vmem:[#allocation1] ss:$4 sm:$0xff] %v1463
      %3428 = vst [vmem:[%s3381] ss:$4 sm:$0xff] %v1467
      %3429 = vst [vmem:[%s3383] ss:$4 sm:$0xff] %v1471
      %3430 = vst [vmem:[%s3385] ss:$4 sm:$0xff] %v1475
      %3431 = vst [vmem:[%s3387] ss:$4 sm:$0xff] %v1479
      %3432 = vst [vmem:[%s3389] ss:$4 sm:$0xff] %v1483
      %3433 = vst [vmem:[%s3391] ss:$4 sm:$0xff] %v1487
      %3434 = vst [vmem:[%s3393] ss:$4 sm:$0xff] %v1491
      %v3435 = vld.sshfl [vmem:[#allocation1] sm:$0xff pattern:$0x73625140]
      %v3436 = vld.sshfl [vmem:[#allocation1 + $0x20] sm:$0xff pattern:$0x73625140]
      %3437 = vst [vmem:[#allocation1] ss:$4 sm:$0xff] %v1495
      %3438 = vst [vmem:[%s3381] ss:$4 sm:$0xff] %v1499
      %3439 = vst [vmem:[%s3383] ss:$4 sm:$0xff] %v1503
      %3440 = vst [vmem:[%s3385] ss:$4 sm:$0xff] %v1507
      %3441 = vst [vmem:[%s3387] ss:$4 sm:$0xff] %v1511
      %3442 = vst [vmem:[%s3389] ss:$4 sm:$0xff] %v1515
      %3443 = vst [vmem:[%s3391] ss:$4 sm:$0xff] %v1519
      %3444 = vst [vmem:[%s3393] ss:$4 sm:$0xff] %v1523
      %v3445 = vld.sshfl [vmem:[#allocation1] sm:$0xff pattern:$0x73625140]
      %v3446 = vld.sshfl [vmem:[#allocation1 + $0x20] sm:$0xff pattern:$0x73625140]
      %3447 = vst [vmem:[#allocation1] ss:$4 sm:$0xff] %v1527
      %3448 = vst [vmem:[%s3381] ss:$4 sm:$0xff] %v1531
      %3449 = vst [vmem:[%s3383] ss:$4 sm:$0xff] %v1535
      %3450 = vst [vmem:[%s3385] ss:$4 sm:$0xff] %v1539
      %3451 = vst [vmem:[%s3387] ss:$4 sm:$0xff] %v1543
      %3452 = vst [vmem:[%s3389] ss:$4 sm:$0xff] %v1547
      %3453 = vst [vmem:[%s3391] ss:$4 sm:$0xff] %v1551
      %3454 = vst [vmem:[%s3393] ss:$4 sm:$0xff] %v1555
      %v3455 = vld.sshfl [vmem:[#allocation1] sm:$0xff pattern:$0x73625140]
      %v3456 = vld.sshfl [vmem:[#allocation1 + $0x20] sm:$0xff pattern:$0x73625140]
      %3457 = vst [vmem:[#allocation1] ss:$4 sm:$0xff] %v1559
      %3458 = vst [vmem:[%s3381] ss:$4 sm:$0xff] %v1563
      %3459 = vst [vmem:[%s3383] ss:$4 sm:$0xff] %v1567
      %3460 = vst [vmem:[%s3385] ss:$4 sm:$0xff] %v1571
      %3461 = vst [vmem:[%s3387] ss:$4 sm:$0xff] %v1575
      %3462 = vst [vmem:[%s3389] ss:$4 sm:$0xff] %v1579
      %3463 = vst [vmem:[%s3391] ss:$4 sm:$0xff] %v1583
      %3464 = vst [vmem:[%s3393] ss:$4 sm:$0xff] %v1587
      %v3465 = vld.sshfl [vmem:[#allocation1] sm:$0xff pattern:$0x73625140]
      %v3466 = vld.sshfl [vmem:[#allocation1 + $0x20] sm:$0xff pattern:$0x73625140]
      %3467 = vst [vmem:[#allocation1] ss:$4 sm:$0xff] %v1591
      %3468 = vst [vmem:[%s3381] ss:$4 sm:$0xff] %v1595
      %3469 = vst [vmem:[%s3383] ss:$4 sm:$0xff] %v1599
      %3470 = vst [vmem:[%s3385] ss:$4 sm:$0xff] %v1603
      %3471 = vst [vmem:[%s3387] ss:$4 sm:$0xff] %v1607
      %3472 = vst [vmem:[%s3389] ss:$4 sm:$0xff] %v1611
      %3473 = vst [vmem:[%s3391] ss:$4 sm:$0xff] %v1615
      %3474 = vst [vmem:[%s3393] ss:$4 sm:$0xff] %v1619
      %v3475 = vld.sshfl [vmem:[#allocation1] sm:$0xff pattern:$0x73625140]
      %v3476 = vld.sshfl [vmem:[#allocation1 + $0x20] sm:$0xff pattern:$0x73625140]
      %3477 = vst [vmem:[#allocation1] ss:$4 sm:$0xff] %v1623
      %3478 = vst [vmem:[%s3381] ss:$4 sm:$0xff] %v1627
      %3479 = vst [vmem:[%s3383] ss:$4 sm:$0xff] %v1631
      %3480 = vst [vmem:[%s3385] ss:$4 sm:$0xff] %v1635
      %3481 = vst [vmem:[%s3387] ss:$4 sm:$0xff] %v1639
      %3482 = vst [vmem:[%s3389] ss:$4 sm:$0xff] %v1643
      %3483 = vst [vmem:[%s3391] ss:$4 sm:$0xff] %v1647
      %3484 = vst [vmem:[%s3393] ss:$4 sm:$0xff] %v1651
      %v3485 = vld.sshfl [vmem:[#allocation1] sm:$0xff pattern:$0x73625140]
      %v3486 = vld.sshfl [vmem:[#allocation1 + $0x20] sm:$0xff pattern:$0x73625140]
      %3487 = vst [vmem:[#allocation1] ss:$4 sm:$0xff] %v1655
      %3488 = vst [vmem:[%s3381] ss:$4 sm:$0xff] %v1659
      %3489 = vst [vmem:[%s3383] ss:$4 sm:$0xff] %v1663
      %3490 = vst [vmem:[%s3385] ss:$4 sm:$0xff] %v1667
      %3491 = vst [vmem:[%s3387] ss:$4 sm:$0xff] %v1671
      %3492 = vst [vmem:[%s3389] ss:$4 sm:$0xff] %v1675
      %3493 = vst [vmem:[%s3391] ss:$4 sm:$0xff] %v1679
      %3494 = vst [vmem:[%s3393] ss:$4 sm:$0xff] %v1683
      %v3495 = vld.sshfl [vmem:[#allocation1] sm:$0xff pattern:$0x73625140]
      %v3496 = vld.sshfl [vmem:[#allocation1 + $0x20] sm:$0xff pattern:$0x73625140]
      %3497 = vst [vmem:[#allocation1] ss:$4 sm:$0xff] %v1687
      %3498 = vst [vmem:[%s3381] ss:$4 sm:$0xff] %v1691
      %3499 = vst [vmem:[%s3383] ss:$4 sm:$0xff] %v1695
      %3500 = vst [vmem:[%s3385] ss:$4 sm:$0xff] %v1699
      %3501 = vst [vmem:[%s3387] ss:$4 sm:$0xff] %v1703
      %3502 = vst [vmem:[%s3389] ss:$4 sm:$0xff] %v1707
      %3503 = vst [vmem:[%s3391] ss:$4 sm:$0xff] %v1711
      %3504 = vst [vmem:[%s3393] ss:$4 sm:$0xff] %v1715
      %v3505 = vld.sshfl [vmem:[#allocation1] sm:$0xff pattern:$0x73625140]
      %v3506 = vld.sshfl [vmem:[#allocation1 + $0x20] sm:$0xff pattern:$0x73625140]
      %3507 = vst [vmem:[#allocation1] ss:$4 sm:$0xff] %v1719
      %3508 = vst [vmem:[%s3381] ss:$4 sm:$0xff] %v1723
      %3509 = vst [vmem:[%s3383] ss:$4 sm:$0xff] %v1727
      %3510 = vst [vmem:[%s3385] ss:$4 sm:$0xff] %v1731
      %3511 = vst [vmem:[%s3387] ss:$4 sm:$0xff] %v1735
      %3512 = vst [vmem:[%s3389] ss:$4 sm:$0xff] %v1739
      %3513 = vst [vmem:[%s3391] ss:$4 sm:$0xff] %v1743
      %3514 = vst [vmem:[%s3393] ss:$4 sm:$0xff] %v1747
      %v3515 = vld.sshfl [vmem:[#allocation1] sm:$0xff pattern:$0x73625140]
      %v3516 = vld.sshfl [vmem:[#allocation1 + $0x20] sm:$0xff pattern:$0x73625140]
      %3517 = vst [vmem:[#allocation1] ss:$4 sm:$0xff] %v1751
      %3518 = vst [vmem:[%s3381] ss:$4 sm:$0xff] %v1755
      %3519 = vst [vmem:[%s3383] ss:$4 sm:$0xff] %v1759
      %3520 = vst [vmem:[%s3385] ss:$4 sm:$0xff] %v1763
      %3521 = vst [vmem:[%s3387] ss:$4 sm:$0xff] %v1767
      %3522 = vst [vmem:[%s3389] ss:$4 sm:$0xff] %v1771
      %3523 = vst [vmem:[%s3391] ss:$4 sm:$0xff] %v1775
      %3524 = vst [vmem:[%s3393] ss:$4 sm:$0xff] %v1779
      %v3525 = vld.sshfl [vmem:[#allocation1] sm:$0xff pattern:$0x73625140]
      %v3526 = vld.sshfl [vmem:[#allocation1 + $0x20] sm:$0xff pattern:$0x73625140]
      %3527 = vst [vmem:[#allocation1] ss:$4 sm:$0xff] %v1783
      %3528 = vst [vmem:[%s3381] ss:$4 sm:$0xff] %v1787
      %3529 = vst [vmem:[%s3383] ss:$4 sm:$0xff] %v1791
      %3530 = vst [vmem:[%s3385] ss:$4 sm:$0xff] %v1795
      %3531 = vst [vmem:[%s3387] ss:$4 sm:$0xff] %v1799
      %3532 = vst [vmem:[%s3389] ss:$4 sm:$0xff] %v1803
      %3533 = vst [vmem:[%s3391] ss:$4 sm:$0xff] %v1807
      %3534 = vst [vmem:[%s3393] ss:$4 sm:$0xff] %v1811
      %v3535 = vld.sshfl [vmem:[#allocation1] sm:$0xff pattern:$0x73625140]
      %v3536 = vld.sshfl [vmem:[#allocation1 + $0x20] sm:$0xff pattern:$0x73625140]
      %3537 = vst [vmem:[#allocation1] ss:$4 sm:$0xff] %v1815
      %3538 = vst [vmem:[%s3381] ss:$4 sm:$0xff] %v1819
      %3539 = vst [vmem:[%s3383] ss:$4 sm:$0xff] %v1823
      %3540 = vst [vmem:[%s3385] ss:$4 sm:$0xff] %v1827
      %3541 = vst [vmem:[%s3387] ss:$4 sm:$0xff] %v1831
      %3542 = vst [vmem:[%s3389] ss:$4 sm:$0xff] %v1835
      %3543 = vst [vmem:[%s3391] ss:$4 sm:$0xff] %v1839
      %3544 = vst [vmem:[%s3393] ss:$4 sm:$0xff] %v1843
      %v3545 = vld.sshfl [vmem:[#allocation1] sm:$0xff pattern:$0x73625140]
      %v3546 = vld.sshfl [vmem:[#allocation1 + $0x20] sm:$0xff pattern:$0x73625140]
      %3547 = vst [vmem:[#allocation1] ss:$4 sm:$0xff] %v1847
      %3548 = vst [vmem:[%s3381] ss:$4 sm:$0xff] %v1851
      %3549 = vst [vmem:[%s3383] ss:$4 sm:$0xff] %v1855
      %3550 = vst [vmem:[%s3385] ss:$4 sm:$0xff] %v1859
      %3551 = vst [vmem:[%s3387] ss:$4 sm:$0xff] %v1863
      %3552 = vst [vmem:[%s3389] ss:$4 sm:$0xff] %v1867
      %3553 = vst [vmem:[%s3391] ss:$4 sm:$0xff] %v1871
      %3554 = vst [vmem:[%s3393] ss:$4 sm:$0xff] %v1875
      %v3555 = vld.sshfl [vmem:[#allocation1] sm:$0xff pattern:$0x73625140]
      %v3556 = vld.sshfl [vmem:[#allocation1 + $0x20] sm:$0xff pattern:$0x73625140]
      %3557 = vst [vmem:[#allocation1] ss:$4 sm:$0xff] %v1879
      %3558 = vst [vmem:[%s3381] ss:$4 sm:$0xff] %v1883
      %3559 = vst [vmem:[%s3383] ss:$4 sm:$0xff] %v1887
      %3560 = vst [vmem:[%s3385] ss:$4 sm:$0xff] %v1891
      %3561 = vst [vmem:[%s3387] ss:$4 sm:$0xff] %v1895
      %3562 = vst [vmem:[%s3389] ss:$4 sm:$0xff] %v1899
      %3563 = vst [vmem:[%s3391] ss:$4 sm:$0xff] %v1903
      %3564 = vst [vmem:[%s3393] ss:$4 sm:$0xff] %v1907
      %v3565 = vld.sshfl [vmem:[#allocation1] sm:$0xff pattern:$0x73625140]
      %v3566 = vld.sshfl [vmem:[#allocation1 + $0x20] sm:$0xff pattern:$0x73625140]
      %3567 = vst [vmem:[#allocation1] ss:$4 sm:$0xff] %v1911
      %3568 = vst [vmem:[%s3381] ss:$4 sm:$0xff] %v1915
      %3569 = vst [vmem:[%s3383] ss:$4 sm:$0xff] %v1919
      %3570 = vst [vmem:[%s3385] ss:$4 sm:$0xff] %v1923
      %3571 = vst [vmem:[%s3387] ss:$4 sm:$0xff] %v1927
      %3572 = vst [vmem:[%s3389] ss:$4 sm:$0xff] %v1931
      %3573 = vst [vmem:[%s3391] ss:$4 sm:$0xff] %v1935
      %3574 = vst [vmem:[%s3393] ss:$4 sm:$0xff] %v1939
      %v3575 = vld.sshfl [vmem:[#allocation1] sm:$0xff pattern:$0x73625140]
      %v3576 = vld.sshfl [vmem:[#allocation1 + $0x20] sm:$0xff pattern:$0x73625140]
      %3577 = vst [vmem:[#allocation1] ss:$4 sm:$0xff] %v1943
      %3578 = vst [vmem:[%s3381] ss:$4 sm:$0xff] %v1947
      %3579 = vst [vmem:[%s3383] ss:$4 sm:$0xff] %v1951
      %3580 = vst [vmem:[%s3385] ss:$4 sm:$0xff] %v1955
      %3581 = vst [vmem:[%s3387] ss:$4 sm:$0xff] %v1959
      %3582 = vst [vmem:[%s3389] ss:$4 sm:$0xff] %v1963
      %3583 = vst [vmem:[%s3391] ss:$4 sm:$0xff] %v1967
      %3584 = vst [vmem:[%s3393] ss:$4 sm:$0xff] %v1971
      %v3585 = vld.sshfl [vmem:[#allocation1] sm:$0xff pattern:$0x73625140]
      %v3586 = vld.sshfl [vmem:[#allocation1 + $0x20] sm:$0xff pattern:$0x73625140]
      %3587 = vst [vmem:[#allocation1] ss:$4 sm:$0xff] %v1975
      %3588 = vst [vmem:[%s3381] ss:$4 sm:$0xff] %v1979
      %3589 = vst [vmem:[%s3383] ss:$4 sm:$0xff] %v1983
      %3590 = vst [vmem:[%s3385] ss:$4 sm:$0xff] %v1987
      %3591 = vst [vmem:[%s3387] ss:$4 sm:$0xff] %v1991
      %3592 = vst [vmem:[%s3389] ss:$4 sm:$0xff] %v1995
      %3593 = vst [vmem:[%s3391] ss:$4 sm:$0xff] %v1999
      %3594 = vst [vmem:[%s3393] ss:$4 sm:$0xff] %v2003
      %v3595 = vld.sshfl [vmem:[#allocation1] sm:$0xff pattern:$0x73625140]
      %v3596 = vld.sshfl [vmem:[#allocation1 + $0x20] sm:$0xff pattern:$0x73625140]
      %3597 = vst [vmem:[#allocation1] ss:$4 sm:$0xff] %v2007
      %3598 = vst [vmem:[%s3381] ss:$4 sm:$0xff] %v2011
      %3599 = vst [vmem:[%s3383] ss:$4 sm:$0xff] %v2015
      %3600 = vst [vmem:[%s3385] ss:$4 sm:$0xff] %v2019
      %3601 = vst [vmem:[%s3387] ss:$4 sm:$0xff] %v2023
      %3602 = vst [vmem:[%s3389] ss:$4 sm:$0xff] %v2027
      %3603 = vst [vmem:[%s3391] ss:$4 sm:$0xff] %v2031
      %3604 = vst [vmem:[%s3393] ss:$4 sm:$0xff] %v2035
      %v3605 = vld.sshfl [vmem:[#allocation1] sm:$0xff pattern:$0x73625140]
      %v3606 = vld.sshfl [vmem:[#allocation1 + $0x20] sm:$0xff pattern:$0x73625140]
      %3607 = vst [vmem:[#allocation1] ss:$4 sm:$0xff] %v2039
      %3608 = vst [vmem:[%s3381] ss:$4 sm:$0xff] %v2043
      %3609 = vst [vmem:[%s3383] ss:$4 sm:$0xff] %v2047
      %3610 = vst [vmem:[%s3385] ss:$4 sm:$0xff] %v2051
      %3611 = vst [vmem:[%s3387] ss:$4 sm:$0xff] %v2055
      %3612 = vst [vmem:[%s3389] ss:$4 sm:$0xff] %v2059
      %3613 = vst [vmem:[%s3391] ss:$4 sm:$0xff] %v2063
      %3614 = vst [vmem:[%s3393] ss:$4 sm:$0xff] %v2067
      %v3615 = vld.sshfl [vmem:[#allocation1] sm:$0xff pattern:$0x73625140]
      %v3616 = vld.sshfl [vmem:[#allocation1 + $0x20] sm:$0xff pattern:$0x73625140]
      %3617 = vst [vmem:[#allocation1] ss:$4 sm:$0xff] %v2071
      %3618 = vst [vmem:[%s3381] ss:$4 sm:$0xff] %v2075
      %3619 = vst [vmem:[%s3383] ss:$4 sm:$0xff] %v2079
      %3620 = vst [vmem:[%s3385] ss:$4 sm:$0xff] %v2083
      %3621 = vst [vmem:[%s3387] ss:$4 sm:$0xff] %v2087
      %3622 = vst [vmem:[%s3389] ss:$4 sm:$0xff] %v2091
      %3623 = vst [vmem:[%s3391] ss:$4 sm:$0xff] %v2095
      %3624 = vst [vmem:[%s3393] ss:$4 sm:$0xff] %v2099
      %v3625 = vld.sshfl [vmem:[#allocation1] sm:$0xff pattern:$0x73625140]
      %v3626 = vld.sshfl [vmem:[#allocation1 + $0x20] sm:$0xff pattern:$0x73625140]
      %3627 = vst [vmem:[#allocation1] ss:$4 sm:$0xff] %v2103
      %3628 = vst [vmem:[%s3381] ss:$4 sm:$0xff] %v2107
      %3629 = vst [vmem:[%s3383] ss:$4 sm:$0xff] %v2111
      %3630 = vst [vmem:[%s3385] ss:$4 sm:$0xff] %v2115
      %3631 = vst [vmem:[%s3387] ss:$4 sm:$0xff] %v2119
      %3632 = vst [vmem:[%s3389] ss:$4 sm:$0xff] %v2123
      %3633 = vst [vmem:[%s3391] ss:$4 sm:$0xff] %v2127
      %3634 = vst [vmem:[%s3393] ss:$4 sm:$0xff] %v2131
      %v3635 = vld.sshfl [vmem:[#allocation1] sm:$0xff pattern:$0x73625140]
      %v3636 = vld.sshfl [vmem:[#allocation1 + $0x20] sm:$0xff pattern:$0x73625140]
      %3637 = vst [vmem:[#allocation1] ss:$4 sm:$0xff] %v2135
      %3638 = vst [vmem:[%s3381] ss:$4 sm:$0xff] %v2139
      %3639 = vst [vmem:[%s3383] ss:$4 sm:$0xff] %v2143
      %3640 = vst [vmem:[%s3385] ss:$4 sm:$0xff] %v2147
      %3641 = vst [vmem:[%s3387] ss:$4 sm:$0xff] %v2151
      %3642 = vst [vmem:[%s3389] ss:$4 sm:$0xff] %v2155
      %3643 = vst [vmem:[%s3391] ss:$4 sm:$0xff] %v2159
      %3644 = vst [vmem:[%s3393] ss:$4 sm:$0xff] %v2163
      %v3645 = vld.sshfl [vmem:[#allocation1] sm:$0xff pattern:$0x73625140]
      %v3646 = vld.sshfl [vmem:[#allocation1 + $0x20] sm:$0xff pattern:$0x73625140]
      %3647 = vst [vmem:[#allocation1] ss:$4 sm:$0xff] %v2167
      %3648 = vst [vmem:[%s3381] ss:$4 sm:$0xff] %v2171
      %3649 = vst [vmem:[%s3383] ss:$4 sm:$0xff] %v2175
      %3650 = vst [vmem:[%s3385] ss:$4 sm:$0xff] %v2179
      %3651 = vst [vmem:[%s3387] ss:$4 sm:$0xff] %v2183
      %3652 = vst [vmem:[%s3389] ss:$4 sm:$0xff] %v2187
      %3653 = vst [vmem:[%s3391] ss:$4 sm:$0xff] %v2191
      %3654 = vst [vmem:[%s3393] ss:$4 sm:$0xff] %v2195
      %v3655 = vld.sshfl [vmem:[#allocation1] sm:$0xff pattern:$0x73625140]
      %v3656 = vld.sshfl [vmem:[#allocation1 + $0x20] sm:$0xff pattern:$0x73625140]
      %3657 = vst [vmem:[#allocation1] ss:$4 sm:$0xff] %v2199
      %3658 = vst [vmem:[%s3381] ss:$4 sm:$0xff] %v2203
      %3659 = vst [vmem:[%s3383] ss:$4 sm:$0xff] %v2207
      %3660 = vst [vmem:[%s3385] ss:$4 sm:$0xff] %v2211
      %3661 = vst [vmem:[%s3387] ss:$4 sm:$0xff] %v2215
      %3662 = vst [vmem:[%s3389] ss:$4 sm:$0xff] %v2219
      %3663 = vst [vmem:[%s3391] ss:$4 sm:$0xff] %v2223
      %3664 = vst [vmem:[%s3393] ss:$4 sm:$0xff] %v2227
      %v3665 = vld.sshfl [vmem:[#allocation1] sm:$0xff pattern:$0x73625140]
      %v3666 = vld.sshfl [vmem:[#allocation1 + $0x20] sm:$0xff pattern:$0x73625140]
      %3667 = vst [vmem:[#allocation1] ss:$4 sm:$0xff] %v2231
      %3668 = vst [vmem:[%s3381] ss:$4 sm:$0xff] %v2235
      %3669 = vst [vmem:[%s3383] ss:$4 sm:$0xff] %v2239
      %3670 = vst [vmem:[%s3385] ss:$4 sm:$0xff] %v2243
      %3671 = vst [vmem:[%s3387] ss:$4 sm:$0xff] %v2247
      %3672 = vst [vmem:[%s3389] ss:$4 sm:$0xff] %v2251
      %3673 = vst [vmem:[%s3391] ss:$4 sm:$0xff] %v2255
      %3674 = vst [vmem:[%s3393] ss:$4 sm:$0xff] %v2259
      %v3675 = vld.sshfl [vmem:[#allocation1] sm:$0xff pattern:$0x73625140]
      %v3676 = vld.sshfl [vmem:[#allocation1 + $0x20] sm:$0xff pattern:$0x73625140]
      %3677 = vst [vmem:[#allocation1] ss:$4 sm:$0xff] %v2263
      %3678 = vst [vmem:[%s3381] ss:$4 sm:$0xff] %v2267
      %3679 = vst [vmem:[%s3383] ss:$4 sm:$0xff] %v2271
      %3680 = vst [vmem:[%s3385] ss:$4 sm:$0xff] %v2275
      %3681 = vst [vmem:[%s3387] ss:$4 sm:$0xff] %v2279
      %3682 = vst [vmem:[%s3389] ss:$4 sm:$0xff] %v2283
      %3683 = vst [vmem:[%s3391] ss:$4 sm:$0xff] %v2287
      %3684 = vst [vmem:[%s3393] ss:$4 sm:$0xff] %v2291
      %v3685 = vld.sshfl [vmem:[#allocation1] sm:$0xff pattern:$0x73625140]
      %v3686 = vld.sshfl [vmem:[#allocation1 + $0x20] sm:$0xff pattern:$0x73625140]
      %3687 = vst [vmem:[#allocation1] ss:$4 sm:$0xff] %v2295
      %3688 = vst [vmem:[%s3381] ss:$4 sm:$0xff] %v2299
      %3689 = vst [vmem:[%s3383] ss:$4 sm:$0xff] %v2303
      %3690 = vst [vmem:[%s3385] ss:$4 sm:$0xff] %v2307
      %3691 = vst [vmem:[%s3387] ss:$4 sm:$0xff] %v2311
      %3692 = vst [vmem:[%s3389] ss:$4 sm:$0xff] %v2315
      %3693 = vst [vmem:[%s3391] ss:$4 sm:$0xff] %v2319
      %3694 = vst [vmem:[%s3393] ss:$4 sm:$0xff] %v2323
      %v3695 = vld.sshfl [vmem:[#allocation1] sm:$0xff pattern:$0x73625140]
      %v3696 = vld.sshfl [vmem:[#allocation1 + $0x20] sm:$0xff pattern:$0x73625140]
      %3697 = vst [vmem:[#allocation1] ss:$4 sm:$0xff] %v2327
      %3698 = vst [vmem:[%s3381] ss:$4 sm:$0xff] %v2331
      %3699 = vst [vmem:[%s3383] ss:$4 sm:$0xff] %v2335
      %3700 = vst [vmem:[%s3385] ss:$4 sm:$0xff] %v2339
      %3701 = vst [vmem:[%s3387] ss:$4 sm:$0xff] %v2343
      %3702 = vst [vmem:[%s3389] ss:$4 sm:$0xff] %v2347
      %3703 = vst [vmem:[%s3391] ss:$4 sm:$0xff] %v2351
      %3704 = vst [vmem:[%s3393] ss:$4 sm:$0xff] %v2355
      %v3705 = vld.sshfl [vmem:[#allocation1] sm:$0xff pattern:$0x73625140]
      %v3706 = vld.sshfl [vmem:[#allocation1 + $0x20] sm:$0xff pattern:$0x73625140]
      %3707 = vst [vmem:[#allocation1] ss:$4 sm:$0xff] %v2359
      %3708 = vst [vmem:[%s3381] ss:$4 sm:$0xff] %v2363
      %3709 = vst [vmem:[%s3383] ss:$4 sm:$0xff] %v2367
      %3710 = vst [vmem:[%s3385] ss:$4 sm:$0xff] %v2371
      %3711 = vst [vmem:[%s3387] ss:$4 sm:$0xff] %v2375
      %3712 = vst [vmem:[%s3389] ss:$4 sm:$0xff] %v2379
      %3713 = vst [vmem:[%s3391] ss:$4 sm:$0xff] %v2383
      %3714 = vst [vmem:[%s3393] ss:$4 sm:$0xff] %v2387
      %v3715 = vld.sshfl [vmem:[#allocation1] sm:$0xff pattern:$0x73625140]
      %v3716 = vld.sshfl [vmem:[#allocation1 + $0x20] sm:$0xff pattern:$0x73625140]
      %3717 = vst [vmem:[#allocation1] ss:$4 sm:$0xff] %v2391
      %3718 = vst [vmem:[%s3381] ss:$4 sm:$0xff] %v2395
      %3719 = vst [vmem:[%s3383] ss:$4 sm:$0xff] %v2399
      %3720 = vst [vmem:[%s3385] ss:$4 sm:$0xff] %v2403
      %3721 = vst [vmem:[%s3387] ss:$4 sm:$0xff] %v2407
      %3722 = vst [vmem:[%s3389] ss:$4 sm:$0xff] %v2411
      %3723 = vst [vmem:[%s3391] ss:$4 sm:$0xff] %v2415
      %3724 = vst [vmem:[%s3393] ss:$4 sm:$0xff] %v2419
      %v3725 = vld.sshfl [vmem:[#allocation1] sm:$0xff pattern:$0x73625140]
      %v3726 = vld.sshfl [vmem:[#allocation1 + $0x20] sm:$0xff pattern:$0x73625140]
      %3727 = vst [vmem:[#allocation1] ss:$4 sm:$0xff] %v2423
      %3728 = vst [vmem:[%s3381] ss:$4 sm:$0xff] %v2427
      %3729 = vst [vmem:[%s3383] ss:$4 sm:$0xff] %v2431
      %3730 = vst [vmem:[%s3385] ss:$4 sm:$0xff] %v2435
      %3731 = vst [vmem:[%s3387] ss:$4 sm:$0xff] %v2439
      %3732 = vst [vmem:[%s3389] ss:$4 sm:$0xff] %v2443
      %3733 = vst [vmem:[%s3391] ss:$4 sm:$0xff] %v2447
      %3734 = vst [vmem:[%s3393] ss:$4 sm:$0xff] %v2451
      %v3735 = vld.sshfl [vmem:[#allocation1] sm:$0xff pattern:$0x73625140]
      %v3736 = vld.sshfl [vmem:[#allocation1 + $0x20] sm:$0xff pattern:$0x73625140]
      %3737 = vst [vmem:[#allocation1] ss:$4 sm:$0xff] %v2455
      %3738 = vst [vmem:[%s3381] ss:$4 sm:$0xff] %v2459
      %3739 = vst [vmem:[%s3383] ss:$4 sm:$0xff] %v2463
      %3740 = vst [vmem:[%s3385] ss:$4 sm:$0xff] %v2467
      %3741 = vst [vmem:[%s3387] ss:$4 sm:$0xff] %v2471
      %3742 = vst [vmem:[%s3389] ss:$4 sm:$0xff] %v2475
      %3743 = vst [vmem:[%s3391] ss:$4 sm:$0xff] %v2479
      %3744 = vst [vmem:[%s3393] ss:$4 sm:$0xff] %v2483
      %v3745 = vld.sshfl [vmem:[#allocation1] sm:$0xff pattern:$0x73625140]
      %v3746 = vld.sshfl [vmem:[#allocation1 + $0x20] sm:$0xff pattern:$0x73625140]
      %3747 = vst [vmem:[#allocation1] ss:$4 sm:$0xff] %v2487
      %3748 = vst [vmem:[%s3381] ss:$4 sm:$0xff] %v2491
      %3749 = vst [vmem:[%s3383] ss:$4 sm:$0xff] %v2495
      %3750 = vst [vmem:[%s3385] ss:$4 sm:$0xff] %v2499
      %3751 = vst [vmem:[%s3387] ss:$4 sm:$0xff] %v2503
      %3752 = vst [vmem:[%s3389] ss:$4 sm:$0xff] %v2507
      %3753 = vst [vmem:[%s3391] ss:$4 sm:$0xff] %v2511
      %3754 = vst [vmem:[%s3393] ss:$4 sm:$0xff] %v2515
      %v3755 = vld.sshfl [vmem:[#allocation1] sm:$0xff pattern:$0x73625140]
      %v3756 = vld.sshfl [vmem:[#allocation1 + $0x20] sm:$0xff pattern:$0x73625140]
      %3757 = vst [vmem:[#allocation1] ss:$4 sm:$0xff] %v2519
      %3758 = vst [vmem:[%s3381] ss:$4 sm:$0xff] %v2523
      %3759 = vst [vmem:[%s3383] ss:$4 sm:$0xff] %v2527
      %3760 = vst [vmem:[%s3385] ss:$4 sm:$0xff] %v2531
      %3761 = vst [vmem:[%s3387] ss:$4 sm:$0xff] %v2535
      %3762 = vst [vmem:[%s3389] ss:$4 sm:$0xff] %v2539
      %3763 = vst [vmem:[%s3391] ss:$4 sm:$0xff] %v2543
      %3764 = vst [vmem:[%s3393] ss:$4 sm:$0xff] %v2547
      %v3765 = vld.sshfl [vmem:[#allocation1] sm:$0xff pattern:$0x73625140]
      %v3766 = vld.sshfl [vmem:[#allocation1 + $0x20] sm:$0xff pattern:$0x73625140]
      %3767 = vst [vmem:[#allocation1] ss:$4 sm:$0xff] %v2551
      %3768 = vst [vmem:[%s3381] ss:$4 sm:$0xff] %v2555
      %3769 = vst [vmem:[%s3383] ss:$4 sm:$0xff] %v2559
      %3770 = vst [vmem:[%s3385] ss:$4 sm:$0xff] %v2563
      %3771 = vst [vmem:[%s3387] ss:$4 sm:$0xff] %v2567
      %3772 = vst [vmem:[%s3389] ss:$4 sm:$0xff] %v2571
      %3773 = vst [vmem:[%s3391] ss:$4 sm:$0xff] %v2575
      %3774 = vst [vmem:[%s3393] ss:$4 sm:$0xff] %v2579
      %v3775 = vld.sshfl [vmem:[#allocation1] sm:$0xff pattern:$0x73625140]
      %v3776 = vld.sshfl [vmem:[#allocation1 + $0x20] sm:$0xff pattern:$0x73625140]
      %3777 = vst [vmem:[#allocation1] ss:$4 sm:$0xff] %v2583
      %3778 = vst [vmem:[%s3381] ss:$4 sm:$0xff] %v2587
      %3779 = vst [vmem:[%s3383] ss:$4 sm:$0xff] %v2591
      %3780 = vst [vmem:[%s3385] ss:$4 sm:$0xff] %v2595
      %3781 = vst [vmem:[%s3387] ss:$4 sm:$0xff] %v2599
      %3782 = vst [vmem:[%s3389] ss:$4 sm:$0xff] %v2603
      %3783 = vst [vmem:[%s3391] ss:$4 sm:$0xff] %v2607
      %3784 = vst [vmem:[%s3393] ss:$4 sm:$0xff] %v2611
      %v3785 = vld.sshfl [vmem:[#allocation1] sm:$0xff pattern:$0x73625140]
      %v3786 = vld.sshfl [vmem:[#allocation1 + $0x20] sm:$0xff pattern:$0x73625140]
      %3787 = vst [vmem:[#allocation1] ss:$4 sm:$0xff] %v2615
      %3788 = vst [vmem:[%s3381] ss:$4 sm:$0xff] %v2619
      %3789 = vst [vmem:[%s3383] ss:$4 sm:$0xff] %v2623
      %3790 = vst [vmem:[%s3385] ss:$4 sm:$0xff] %v2627
      %3791 = vst [vmem:[%s3387] ss:$4 sm:$0xff] %v2631
      %3792 = vst [vmem:[%s3389] ss:$4 sm:$0xff] %v2635
      %3793 = vst [vmem:[%s3391] ss:$4 sm:$0xff] %v2639
      %3794 = vst [vmem:[%s3393] ss:$4 sm:$0xff] %v2643
      %v3795 = vld.sshfl [vmem:[#allocation1] sm:$0xff pattern:$0x73625140]
      %v3796 = vld.sshfl [vmem:[#allocation1 + $0x20] sm:$0xff pattern:$0x73625140]
      %3797 = vst [vmem:[#allocation1] ss:$4 sm:$0xff] %v2647
      %3798 = vst [vmem:[%s3381] ss:$4 sm:$0xff] %v2651
      %3799 = vst [vmem:[%s3383] ss:$4 sm:$0xff] %v2655
      %3800 = vst [vmem:[%s3385] ss:$4 sm:$0xff] %v2659
      %3801 = vst [vmem:[%s3387] ss:$4 sm:$0xff] %v2663
      %3802 = vst [vmem:[%s3389] ss:$4 sm:$0xff] %v2667
      %3803 = vst [vmem:[%s3391] ss:$4 sm:$0xff] %v2671
      %3804 = vst [vmem:[%s3393] ss:$4 sm:$0xff] %v2675
      %v3805 = vld.sshfl [vmem:[#allocation1] sm:$0xff pattern:$0x73625140]
      %v3806 = vld.sshfl [vmem:[#allocation1 + $0x20] sm:$0xff pattern:$0x73625140]
      %3807 = vst [vmem:[#allocation1] ss:$4 sm:$0xff] %v2679
      %3808 = vst [vmem:[%s3381] ss:$4 sm:$0xff] %v2683
      %3809 = vst [vmem:[%s3383] ss:$4 sm:$0xff] %v2687
      %3810 = vst [vmem:[%s3385] ss:$4 sm:$0xff] %v2691
      %3811 = vst [vmem:[%s3387] ss:$4 sm:$0xff] %v2695
      %3812 = vst [vmem:[%s3389] ss:$4 sm:$0xff] %v2699
      %3813 = vst [vmem:[%s3391] ss:$4 sm:$0xff] %v2703
      %3814 = vst [vmem:[%s3393] ss:$4 sm:$0xff] %v2707
      %v3815 = vld.sshfl [vmem:[#allocation1] sm:$0xff pattern:$0x73625140]
      %v3816 = vld.sshfl [vmem:[#allocation1 + $0x20] sm:$0xff pattern:$0x73625140]
      %3817 = vst [vmem:[#allocation1] ss:$4 sm:$0xff] %v2711
      %3818 = vst [vmem:[%s3381] ss:$4 sm:$0xff] %v2715
      %3819 = vst [vmem:[%s3383] ss:$4 sm:$0xff] %v2719
      %3820 = vst [vmem:[%s3385] ss:$4 sm:$0xff] %v2723
      %3821 = vst [vmem:[%s3387] ss:$4 sm:$0xff] %v2727
      %3822 = vst [vmem:[%s3389] ss:$4 sm:$0xff] %v2731
      %3823 = vst [vmem:[%s3391] ss:$4 sm:$0xff] %v2735
      %3824 = vst [vmem:[%s3393] ss:$4 sm:$0xff] %v2739
      %v3825 = vld.sshfl [vmem:[#allocation1] sm:$0xff pattern:$0x73625140]
      %v3826 = vld.sshfl [vmem:[#allocation1 + $0x20] sm:$0xff pattern:$0x73625140]
      %3827 = vst [vmem:[#allocation1] ss:$4 sm:$0xff] %v2743
      %3828 = vst [vmem:[%s3381] ss:$4 sm:$0xff] %v2747
      %3829 = vst [vmem:[%s3383] ss:$4 sm:$0xff] %v2751
      %3830 = vst [vmem:[%s3385] ss:$4 sm:$0xff] %v2755
      %3831 = vst [vmem:[%s3387] ss:$4 sm:$0xff] %v2759
      %3832 = vst [vmem:[%s3389] ss:$4 sm:$0xff] %v2763
      %3833 = vst [vmem:[%s3391] ss:$4 sm:$0xff] %v2767
      %3834 = vst [vmem:[%s3393] ss:$4 sm:$0xff] %v2771
      %v3835 = vld.sshfl [vmem:[#allocation1] sm:$0xff pattern:$0x73625140]
      %v3836 = vld.sshfl [vmem:[#allocation1 + $0x20] sm:$0xff pattern:$0x73625140]
      %3837 = vst [vmem:[#allocation1] ss:$4 sm:$0xff] %v2775
      %3838 = vst [vmem:[%s3381] ss:$4 sm:$0xff] %v2779
      %3839 = vst [vmem:[%s3383] ss:$4 sm:$0xff] %v2783
      %3840 = vst [vmem:[%s3385] ss:$4 sm:$0xff] %v2787
      %3841 = vst [vmem:[%s3387] ss:$4 sm:$0xff] %v2791
      %3842 = vst [vmem:[%s3389] ss:$4 sm:$0xff] %v2795
      %3843 = vst [vmem:[%s3391] ss:$4 sm:$0xff] %v2799
      %3844 = vst [vmem:[%s3393] ss:$4 sm:$0xff] %v2803
      %v3845 = vld.sshfl [vmem:[#allocation1] sm:$0xff pattern:$0x73625140]
      %v3846 = vld.sshfl [vmem:[#allocation1 + $0x20] sm:$0xff pattern:$0x73625140]
      %3847 = vst [vmem:[#allocation1] ss:$4 sm:$0xff] %v2807
      %3848 = vst [vmem:[%s3381] ss:$4 sm:$0xff] %v2811
      %3849 = vst [vmem:[%s3383] ss:$4 sm:$0xff] %v2815
      %3850 = vst [vmem:[%s3385] ss:$4 sm:$0xff] %v2819
      %3851 = vst [vmem:[%s3387] ss:$4 sm:$0xff] %v2823
      %3852 = vst [vmem:[%s3389] ss:$4 sm:$0xff] %v2827
      %3853 = vst [vmem:[%s3391] ss:$4 sm:$0xff] %v2831
      %3854 = vst [vmem:[%s3393] ss:$4 sm:$0xff] %v2835
      %v3855 = vld.sshfl [vmem:[#allocation1] sm:$0xff pattern:$0x73625140]
      %v3856 = vld.sshfl [vmem:[#allocation1 + $0x20] sm:$0xff pattern:$0x73625140]
      %3857 = vst [vmem:[#allocation1] ss:$4 sm:$0xff] %v2839
      %3858 = vst [vmem:[%s3381] ss:$4 sm:$0xff] %v2843
      %3859 = vst [vmem:[%s3383] ss:$4 sm:$0xff] %v2847
      %3860 = vst [vmem:[%s3385] ss:$4 sm:$0xff] %v2851
      %3861 = vst [vmem:[%s3387] ss:$4 sm:$0xff] %v2855
      %3862 = vst [vmem:[%s3389] ss:$4 sm:$0xff] %v2859
      %3863 = vst [vmem:[%s3391] ss:$4 sm:$0xff] %v2863
      %3864 = vst [vmem:[%s3393] ss:$4 sm:$0xff] %v2867
      %v3865 = vld.sshfl [vmem:[#allocation1] sm:$0xff pattern:$0x73625140]
      %v3866 = vld.sshfl [vmem:[#allocation1 + $0x20] sm:$0xff pattern:$0x73625140]
      %3867 = vst [vmem:[#allocation1] ss:$4 sm:$0xff] %v2871
      %3868 = vst [vmem:[%s3381] ss:$4 sm:$0xff] %v2875
      %3869 = vst [vmem:[%s3383] ss:$4 sm:$0xff] %v2879
      %3870 = vst [vmem:[%s3385] ss:$4 sm:$0xff] %v2883
      %3871 = vst [vmem:[%s3387] ss:$4 sm:$0xff] %v2887
      %3872 = vst [vmem:[%s3389] ss:$4 sm:$0xff] %v2891
      %3873 = vst [vmem:[%s3391] ss:$4 sm:$0xff] %v2895
      %3874 = vst [vmem:[%s3393] ss:$4 sm:$0xff] %v2899
      %v3875 = vld.sshfl [vmem:[#allocation1] sm:$0xff pattern:$0x73625140]
      %v3876 = vld.sshfl [vmem:[#allocation1 + $0x20] sm:$0xff pattern:$0x73625140]
      %3877 = vst [vmem:[#allocation1] ss:$4 sm:$0xff] %v2903
      %3878 = vst [vmem:[%s3381] ss:$4 sm:$0xff] %v2907
      %3879 = vst [vmem:[%s3383] ss:$4 sm:$0xff] %v2911
      %3880 = vst [vmem:[%s3385] ss:$4 sm:$0xff] %v2915
      %3881 = vst [vmem:[%s3387] ss:$4 sm:$0xff] %v2919
      %3882 = vst [vmem:[%s3389] ss:$4 sm:$0xff] %v2923
      %3883 = vst [vmem:[%s3391] ss:$4 sm:$0xff] %v2927
      %3884 = vst [vmem:[%s3393] ss:$4 sm:$0xff] %v2931
      %v3885 = vld.sshfl [vmem:[#allocation1] sm:$0xff pattern:$0x73625140]
      %v3886 = vld.sshfl [vmem:[#allocation1 + $0x20] sm:$0xff pattern:$0x73625140]
      %3887 = vst [vmem:[#allocation1] ss:$4 sm:$0xff] %v2935
      %3888 = vst [vmem:[%s3381] ss:$4 sm:$0xff] %v2939
      %3889 = vst [vmem:[%s3383] ss:$4 sm:$0xff] %v2943
      %3890 = vst [vmem:[%s3385] ss:$4 sm:$0xff] %v2947
      %3891 = vst [vmem:[%s3387] ss:$4 sm:$0xff] %v2951
      %3892 = vst [vmem:[%s3389] ss:$4 sm:$0xff] %v2955
      %3893 = vst [vmem:[%s3391] ss:$4 sm:$0xff] %v2959
      %3894 = vst [vmem:[%s3393] ss:$4 sm:$0xff] %v2963
      %v3895 = vld.sshfl [vmem:[#allocation1] sm:$0xff pattern:$0x73625140]
      %v3896 = vld.sshfl [vmem:[#allocation1 + $0x20] sm:$0xff pattern:$0x73625140]
      %3897 = vst [vmem:[#allocation1] ss:$4 sm:$0xff] %v2967
      %3898 = vst [vmem:[%s3381] ss:$4 sm:$0xff] %v2971
      %3899 = vst [vmem:[%s3383] ss:$4 sm:$0xff] %v2975
      %3900 = vst [vmem:[%s3385] ss:$4 sm:$0xff] %v2979
      %3901 = vst [vmem:[%s3387] ss:$4 sm:$0xff] %v2983
      %3902 = vst [vmem:[%s3389] ss:$4 sm:$0xff] %v2987
      %3903 = vst [vmem:[%s3391] ss:$4 sm:$0xff] %v2991
      %3904 = vst [vmem:[%s3393] ss:$4 sm:$0xff] %v2995
      %v3905 = vld.sshfl [vmem:[#allocation1] sm:$0xff pattern:$0x73625140]
      %v3906 = vld.sshfl [vmem:[#allocation1 + $0x20] sm:$0xff pattern:$0x73625140]
      %3907 = vst [vmem:[#allocation1] ss:$4 sm:$0xff] %v2999
      %3908 = vst [vmem:[%s3381] ss:$4 sm:$0xff] %v3003
      %3909 = vst [vmem:[%s3383] ss:$4 sm:$0xff] %v3007
      %3910 = vst [vmem:[%s3385] ss:$4 sm:$0xff] %v3011
      %3911 = vst [vmem:[%s3387] ss:$4 sm:$0xff] %v3015
      %3912 = vst [vmem:[%s3389] ss:$4 sm:$0xff] %v3019
      %3913 = vst [vmem:[%s3391] ss:$4 sm:$0xff] %v3023
      %3914 = vst [vmem:[%s3393] ss:$4 sm:$0xff] %v3027
      %v3915 = vld.sshfl [vmem:[#allocation1] sm:$0xff pattern:$0x73625140]
      %v3916 = vld.sshfl [vmem:[#allocation1 + $0x20] sm:$0xff pattern:$0x73625140]
      %3917 = vst [vmem:[#allocation1] ss:$4 sm:$0xff] %v3031
      %3918 = vst [vmem:[%s3381] ss:$4 sm:$0xff] %v3035
      %3919 = vst [vmem:[%s3383] ss:$4 sm:$0xff] %v3039
      %3920 = vst [vmem:[%s3385] ss:$4 sm:$0xff] %v3043
      %3921 = vst [vmem:[%s3387] ss:$4 sm:$0xff] %v3047
      %3922 = vst [vmem:[%s3389] ss:$4 sm:$0xff] %v3051
      %3923 = vst [vmem:[%s3391] ss:$4 sm:$0xff] %v3055
      %3924 = vst [vmem:[%s3393] ss:$4 sm:$0xff] %v3059
      %v3925 = vld.sshfl [vmem:[#allocation1] sm:$0xff pattern:$0x73625140]
      %v3926 = vld.sshfl [vmem:[#allocation1 + $0x20] sm:$0xff pattern:$0x73625140]
      %3927 = vst [vmem:[#allocation1] ss:$4 sm:$0xff] %v3063
      %3928 = vst [vmem:[%s3381] ss:$4 sm:$0xff] %v3067
      %3929 = vst [vmem:[%s3383] ss:$4 sm:$0xff] %v3071
      %3930 = vst [vmem:[%s3385] ss:$4 sm:$0xff] %v3075
      %3931 = vst [vmem:[%s3387] ss:$4 sm:$0xff] %v3079
      %3932 = vst [vmem:[%s3389] ss:$4 sm:$0xff] %v3083
      %3933 = vst [vmem:[%s3391] ss:$4 sm:$0xff] %v3087
      %3934 = vst [vmem:[%s3393] ss:$4 sm:$0xff] %v3091
      %v3935 = vld.sshfl [vmem:[#allocation1] sm:$0xff pattern:$0x73625140]
      %v3936 = vld.sshfl [vmem:[#allocation1 + $0x20] sm:$0xff pattern:$0x73625140]
      %3937 = vst [vmem:[#allocation1] ss:$4 sm:$0xff] %v3095
      %3938 = vst [vmem:[%s3381] ss:$4 sm:$0xff] %v3099
      %3939 = vst [vmem:[%s3383] ss:$4 sm:$0xff] %v3103
      %3940 = vst [vmem:[%s3385] ss:$4 sm:$0xff] %v3107
      %3941 = vst [vmem:[%s3387] ss:$4 sm:$0xff] %v3111
      %3942 = vst [vmem:[%s3389] ss:$4 sm:$0xff] %v3115
      %3943 = vst [vmem:[%s3391] ss:$4 sm:$0xff] %v3119
      %3944 = vst [vmem:[%s3393] ss:$4 sm:$0xff] %v3123
      %v3945 = vld.sshfl [vmem:[#allocation1] sm:$0xff pattern:$0x73625140]
      %v3946 = vld.sshfl [vmem:[#allocation1 + $0x20] sm:$0xff pattern:$0x73625140]
      %3947 = vst [vmem:[#allocation1] ss:$4 sm:$0xff] %v3127
      %3948 = vst [vmem:[%s3381] ss:$4 sm:$0xff] %v3131
      %3949 = vst [vmem:[%s3383] ss:$4 sm:$0xff] %v3135
      %3950 = vst [vmem:[%s3385] ss:$4 sm:$0xff] %v3139
      %3951 = vst [vmem:[%s3387] ss:$4 sm:$0xff] %v3143
      %3952 = vst [vmem:[%s3389] ss:$4 sm:$0xff] %v3147
      %3953 = vst [vmem:[%s3391] ss:$4 sm:$0xff] %v3151
      %3954 = vst [vmem:[%s3393] ss:$4 sm:$0xff] %v3155
      %v3955 = vld.sshfl [vmem:[#allocation1] sm:$0xff pattern:$0x73625140]
      %v3956 = vld.sshfl [vmem:[#allocation1 + $0x20] sm:$0xff pattern:$0x73625140]
      %3957 = vst [vmem:[#allocation1] ss:$4 sm:$0xff] %v3159
      %3958 = vst [vmem:[%s3381] ss:$4 sm:$0xff] %v3163
      %3959 = vst [vmem:[%s3383] ss:$4 sm:$0xff] %v3167
      %3960 = vst [vmem:[%s3385] ss:$4 sm:$0xff] %v3171
      %3961 = vst [vmem:[%s3387] ss:$4 sm:$0xff] %v3175
      %3962 = vst [vmem:[%s3389] ss:$4 sm:$0xff] %v3179
      %3963 = vst [vmem:[%s3391] ss:$4 sm:$0xff] %v3183
      %3964 = vst [vmem:[%s3393] ss:$4 sm:$0xff] %v3187
      %v3965 = vld.sshfl [vmem:[#allocation1] sm:$0xff pattern:$0x73625140]
      %v3966 = vld.sshfl [vmem:[#allocation1 + $0x20] sm:$0xff pattern:$0x73625140]
      %3967 = vst [vmem:[#allocation1] ss:$4 sm:$0xff] %v3191
      %3968 = vst [vmem:[%s3381] ss:$4 sm:$0xff] %v3195
      %3969 = vst [vmem:[%s3383] ss:$4 sm:$0xff] %v3199
      %3970 = vst [vmem:[%s3385] ss:$4 sm:$0xff] %v3203
      %3971 = vst [vmem:[%s3387] ss:$4 sm:$0xff] %v3207
      %3972 = vst [vmem:[%s3389] ss:$4 sm:$0xff] %v3211
      %3973 = vst [vmem:[%s3391] ss:$4 sm:$0xff] %v3215
      %3974 = vst [vmem:[%s3393] ss:$4 sm:$0xff] %v3219
      %v3975 = vld.sshfl [vmem:[#allocation1] sm:$0xff pattern:$0x73625140]
      %v3976 = vld.sshfl [vmem:[#allocation1 + $0x20] sm:$0xff pattern:$0x73625140]
      %3977 = vst [vmem:[#allocation1] ss:$4 sm:$0xff] %v3223
      %3978 = vst [vmem:[%s3381] ss:$4 sm:$0xff] %v3227
      %3979 = vst [vmem:[%s3383] ss:$4 sm:$0xff] %v3231
      %3980 = vst [vmem:[%s3385] ss:$4 sm:$0xff] %v3235
      %3981 = vst [vmem:[%s3387] ss:$4 sm:$0xff] %v3239
      %3982 = vst [vmem:[%s3389] ss:$4 sm:$0xff] %v3243
      %3983 = vst [vmem:[%s3391] ss:$4 sm:$0xff] %v3247
      %3984 = vst [vmem:[%s3393] ss:$4 sm:$0xff] %v3251
      %v3985 = vld.sshfl [vmem:[#allocation1] sm:$0xff pattern:$0x73625140]
      %v3986 = vld.sshfl [vmem:[#allocation1 + $0x20] sm:$0xff pattern:$0x73625140]
      %3987 = vst [vmem:[#allocation1] ss:$4 sm:$0xff] %v3255
      %3988 = vst [vmem:[%s3381] ss:$4 sm:$0xff] %v3259
      %3989 = vst [vmem:[%s3383] ss:$4 sm:$0xff] %v3263
      %3990 = vst [vmem:[%s3385] ss:$4 sm:$0xff] %v3267
      %3991 = vst [vmem:[%s3387] ss:$4 sm:$0xff] %v3271
      %3992 = vst [vmem:[%s3389] ss:$4 sm:$0xff] %v3275
      %3993 = vst [vmem:[%s3391] ss:$4 sm:$0xff] %v3279
      %3994 = vst [vmem:[%s3393] ss:$4 sm:$0xff] %v3283
      %v3995 = vld.sshfl [vmem:[#allocation1] sm:$0xff pattern:$0x73625140]
      %v3996 = vld.sshfl [vmem:[#allocation1 + $0x20] sm:$0xff pattern:$0x73625140]
      %3997 = vst [vmem:[#allocation1] ss:$4 sm:$0xff] %v3287
      %3998 = vst [vmem:[%s3381] ss:$4 sm:$0xff] %v3291
      %3999 = vst [vmem:[%s3383] ss:$4 sm:$0xff] %v3295
      %4000 = vst [vmem:[%s3385] ss:$4 sm:$0xff] %v3299
      %4001 = vst [vmem:[%s3387] ss:$4 sm:$0xff] %v3303
      %4002 = vst [vmem:[%s3389] ss:$4 sm:$0xff] %v3307
      %4003 = vst [vmem:[%s3391] ss:$4 sm:$0xff] %v3311
      %4004 = vst [vmem:[%s3393] ss:$4 sm:$0xff] %v3315
      %v4005 = vld.sshfl [vmem:[#allocation1] sm:$0xff pattern:$0x73625140]
      %v4006 = vld.sshfl [vmem:[#allocation1 + $0x20] sm:$0xff pattern:$0x73625140]
      %4007 = vst [vmem:[#allocation1] ss:$4 sm:$0xff] %v3319
      %4008 = vst [vmem:[%s3381] ss:$4 sm:$0xff] %v3323
      %4009 = vst [vmem:[%s3383] ss:$4 sm:$0xff] %v3327
      %4010 = vst [vmem:[%s3385] ss:$4 sm:$0xff] %v3331
      %4011 = vst [vmem:[%s3387] ss:$4 sm:$0xff] %v3335
      %4012 = vst [vmem:[%s3389] ss:$4 sm:$0xff] %v3339
      %4013 = vst [vmem:[%s3391] ss:$4 sm:$0xff] %v3343
      %4014 = vst [vmem:[%s3393] ss:$4 sm:$0xff] %v3347
      %v4015 = vld.sshfl [vmem:[#allocation1] sm:$0xff pattern:$0x73625140]
      %v4016 = vld.sshfl [vmem:[#allocation1 + $0x20] sm:$0xff pattern:$0x73625140]
      %4017 = vst [vmem:[#allocation1] ss:$4 sm:$0xff] %v3351
      %4018 = vst [vmem:[%s3381] ss:$4 sm:$0xff] %v3355
      %4019 = vst [vmem:[%s3383] ss:$4 sm:$0xff] %v3359
      %4020 = vst [vmem:[%s3385] ss:$4 sm:$0xff] %v3363
      %4021 = vst [vmem:[%s3387] ss:$4 sm:$0xff] %v3367
      %4022 = vst [vmem:[%s3389] ss:$4 sm:$0xff] %v3371
      %4023 = vst [vmem:[%s3391] ss:$4 sm:$0xff] %v3375
      %4024 = vst [vmem:[%s3393] ss:$4 sm:$0xff] %v3379
      %v4025 = vld.sshfl [vmem:[#allocation1] sm:$0xff pattern:$0x73625140]
      %v4026 = vld.sshfl [vmem:[#allocation1 + $0x20] sm:$0xff pattern:$0x73625140]
      %4027 = vset.pattern.permute.xlu0 0
      %4028 = vperm.xlu0 %4027, %v3395
      %v4029 = vpop.permute.xlu0 %4028
      %4030 = vset.pattern.permute.xlu0 0
      %4031 = vperm.xlu0 %4030, %v3396
      %v4032 = vpop.permute.xlu0 %4031
      %4033 = vset.pattern.permute.xlu0 0
      %4034 = vperm.xlu0 %4033, %v3405
      %v4035 = vpop.permute.xlu0 %4034
      %4036 = vset.pattern.permute.xlu0 0
      %4037 = vperm.xlu0 %4036, %v3406
      %v4038 = vpop.permute.xlu0 %4037
      %4039 = vset.pattern.permute.xlu0 0
      %4040 = vperm.xlu0 %4039, %v3415
      %v4041 = vpop.permute.xlu0 %4040
      %4042 = vset.pattern.permute.xlu0 0
      %4043 = vperm.xlu0 %4042, %v3416
      %v4044 = vpop.permute.xlu0 %4043
      %4045 = vset.pattern.permute.xlu0 0
      %4046 = vperm.xlu0 %4045, %v3425
      %v4047 = vpop.permute.xlu0 %4046
      %4048 = vset.pattern.permute.xlu0 0
      %4049 = vperm.xlu0 %4048, %v3426
      %v4050 = vpop.permute.xlu0 %4049
      %4051 = vset.pattern.permute.xlu0 0
      %4052 = vperm.xlu0 %4051, %v3435
      %v4053 = vpop.permute.xlu0 %4052
      %4054 = vset.pattern.permute.xlu0 0
      %4055 = vperm.xlu0 %4054, %v3436
      %v4056 = vpop.permute.xlu0 %4055
      %4057 = vset.pattern.permute.xlu0 0
      %4058 = vperm.xlu0 %4057, %v3445
      %v4059 = vpop.permute.xlu0 %4058
      %4060 = vset.pattern.permute.xlu0 0
      %4061 = vperm.xlu0 %4060, %v3446
      %v4062 = vpop.permute.xlu0 %4061
      %4063 = vset.pattern.permute.xlu0 0
      %4064 = vperm.xlu0 %4063, %v3455
      %v4065 = vpop.permute.xlu0 %4064
      %4066 = vset.pattern.permute.xlu0 0
      %4067 = vperm.xlu0 %4066, %v3456
      %v4068 = vpop.permute.xlu0 %4067
      %4069 = vset.pattern.permute.xlu0 0
      %4070 = vperm.xlu0 %4069, %v3465
      %v4071 = vpop.permute.xlu0 %4070
      %4072 = vset.pattern.permute.xlu0 0
      %4073 = vperm.xlu0 %4072, %v3466
      %v4074 = vpop.permute.xlu0 %4073
      %4075 = vset.pattern.permute.xlu0 0
      %4076 = vperm.xlu0 %4075, %v3475
      %v4077 = vpop.permute.xlu0 %4076
      %4078 = vset.pattern.permute.xlu0 0
      %4079 = vperm.xlu0 %4078, %v3476
      %v4080 = vpop.permute.xlu0 %4079
      %4081 = vset.pattern.permute.xlu0 0
      %4082 = vperm.xlu0 %4081, %v3485
      %v4083 = vpop.permute.xlu0 %4082
      %4084 = vset.pattern.permute.xlu0 0
      %4085 = vperm.xlu0 %4084, %v3486
      %v4086 = vpop.permute.xlu0 %4085
      %4087 = vset.pattern.permute.xlu0 0
      %4088 = vperm.xlu0 %4087, %v3495
      %v4089 = vpop.permute.xlu0 %4088
      %4090 = vset.pattern.permute.xlu0 0
      %4091 = vperm.xlu0 %4090, %v3496
      %v4092 = vpop.permute.xlu0 %4091
      %4093 = vset.pattern.permute.xlu0 0
      %4094 = vperm.xlu0 %4093, %v3505
      %v4095 = vpop.permute.xlu0 %4094
      %4096 = vset.pattern.permute.xlu0 0
      %4097 = vperm.xlu0 %4096, %v3506
      %v4098 = vpop.permute.xlu0 %4097
      %4099 = vset.pattern.permute.xlu0 0
      %4100 = vperm.xlu0 %4099, %v3515
      %v4101 = vpop.permute.xlu0 %4100
      %4102 = vset.pattern.permute.xlu0 0
      %4103 = vperm.xlu0 %4102, %v3516
      %v4104 = vpop.permute.xlu0 %4103
      %4105 = vset.pattern.permute.xlu0 0
      %4106 = vperm.xlu0 %4105, %v3525
      %v4107 = vpop.permute.xlu0 %4106
      %4108 = vset.pattern.permute.xlu0 0
      %4109 = vperm.xlu0 %4108, %v3526
      %v4110 = vpop.permute.xlu0 %4109
      %4111 = vset.pattern.permute.xlu0 0
      %4112 = vperm.xlu0 %4111, %v3535
      %v4113 = vpop.permute.xlu0 %4112
      %4114 = vset.pattern.permute.xlu0 0
      %4115 = vperm.xlu0 %4114, %v3536
      %v4116 = vpop.permute.xlu0 %4115
      %4117 = vset.pattern.permute.xlu0 0
      %4118 = vperm.xlu0 %4117, %v3545
      %v4119 = vpop.permute.xlu0 %4118
      %4120 = vset.pattern.permute.xlu0 0
      %4121 = vperm.xlu0 %4120, %v3546
      %v4122 = vpop.permute.xlu0 %4121
      %4123 = vset.pattern.permute.xlu0 0
      %4124 = vperm.xlu0 %4123, %v3555
      %v4125 = vpop.permute.xlu0 %4124
      %4126 = vset.pattern.permute.xlu0 0
      %4127 = vperm.xlu0 %4126, %v3556
      %v4128 = vpop.permute.xlu0 %4127
      %4129 = vset.pattern.permute.xlu0 0
      %4130 = vperm.xlu0 %4129, %v3565
      %v4131 = vpop.permute.xlu0 %4130
      %4132 = vset.pattern.permute.xlu0 0
      %4133 = vperm.xlu0 %4132, %v3566
      %v4134 = vpop.permute.xlu0 %4133
      %4135 = vset.pattern.permute.xlu0 0
      %4136 = vperm.xlu0 %4135, %v3575
      %v4137 = vpop.permute.xlu0 %4136
      %4138 = vset.pattern.permute.xlu0 0
      %4139 = vperm.xlu0 %4138, %v3576
      %v4140 = vpop.permute.xlu0 %4139
      %4141 = vset.pattern.permute.xlu0 0
      %4142 = vperm.xlu0 %4141, %v3585
      %v4143 = vpop.permute.xlu0 %4142
      %4144 = vset.pattern.permute.xlu0 0
      %4145 = vperm.xlu0 %4144, %v3586
      %v4146 = vpop.permute.xlu0 %4145
      %4147 = vset.pattern.permute.xlu0 0
      %4148 = vperm.xlu0 %4147, %v3595
      %v4149 = vpop.permute.xlu0 %4148
      %4150 = vset.pattern.permute.xlu0 0
      %4151 = vperm.xlu0 %4150, %v3596
      %v4152 = vpop.permute.xlu0 %4151
      %4153 = vset.pattern.permute.xlu0 0
      %4154 = vperm.xlu0 %4153, %v3605
      %v4155 = vpop.permute.xlu0 %4154
      %4156 = vset.pattern.permute.xlu0 0
      %4157 = vperm.xlu0 %4156, %v3606
      %v4158 = vpop.permute.xlu0 %4157
      %4159 = vset.pattern.permute.xlu0 0
      %4160 = vperm.xlu0 %4159, %v3615
      %v4161 = vpop.permute.xlu0 %4160
      %4162 = vset.pattern.permute.xlu0 0
      %4163 = vperm.xlu0 %4162, %v3616
      %v4164 = vpop.permute.xlu0 %4163
      %4165 = vset.pattern.permute.xlu0 0
      %4166 = vperm.xlu0 %4165, %v3625
      %v4167 = vpop.permute.xlu0 %4166
      %4168 = vset.pattern.permute.xlu0 0
      %4169 = vperm.xlu0 %4168, %v3626
      %v4170 = vpop.permute.xlu0 %4169
      %4171 = vset.pattern.permute.xlu0 0
      %4172 = vperm.xlu0 %4171, %v3635
      %v4173 = vpop.permute.xlu0 %4172
      %4174 = vset.pattern.permute.xlu0 0
      %4175 = vperm.xlu0 %4174, %v3636
      %v4176 = vpop.permute.xlu0 %4175
      %4177 = vset.pattern.permute.xlu0 0
      %4178 = vperm.xlu0 %4177, %v3645
      %v4179 = vpop.permute.xlu0 %4178
      %4180 = vset.pattern.permute.xlu0 0
      %4181 = vperm.xlu0 %4180, %v3646
      %v4182 = vpop.permute.xlu0 %4181
      %4183 = vset.pattern.permute.xlu0 0
      %4184 = vperm.xlu0 %4183, %v3655
      %v4185 = vpop.permute.xlu0 %4184
      %4186 = vset.pattern.permute.xlu0 0
      %4187 = vperm.xlu0 %4186, %v3656
      %v4188 = vpop.permute.xlu0 %4187
      %4189 = vset.pattern.permute.xlu0 0
      %4190 = vperm.xlu0 %4189, %v3665
      %v4191 = vpop.permute.xlu0 %4190
      %4192 = vset.pattern.permute.xlu0 0
      %4193 = vperm.xlu0 %4192, %v3666
      %v4194 = vpop.permute.xlu0 %4193
      %4195 = vset.pattern.permute.xlu0 0
      %4196 = vperm.xlu0 %4195, %v3675
      %v4197 = vpop.permute.xlu0 %4196
      %4198 = vset.pattern.permute.xlu0 0
      %4199 = vperm.xlu0 %4198, %v3676
      %v4200 = vpop.permute.xlu0 %4199
      %4201 = vset.pattern.permute.xlu0 0
      %4202 = vperm.xlu0 %4201, %v3685
      %v4203 = vpop.permute.xlu0 %4202
      %4204 = vset.pattern.permute.xlu0 0
      %4205 = vperm.xlu0 %4204, %v3686
      %v4206 = vpop.permute.xlu0 %4205
      %4207 = vset.pattern.permute.xlu0 0
      %4208 = vperm.xlu0 %4207, %v3695
      %v4209 = vpop.permute.xlu0 %4208
      %4210 = vset.pattern.permute.xlu0 0
      %4211 = vperm.xlu0 %4210, %v3696
      %v4212 = vpop.permute.xlu0 %4211
      %4213 = vset.pattern.permute.xlu0 0
      %4214 = vperm.xlu0 %4213, %v3705
      %v4215 = vpop.permute.xlu0 %4214
      %4216 = vset.pattern.permute.xlu0 0
      %4217 = vperm.xlu0 %4216, %v3706
      %v4218 = vpop.permute.xlu0 %4217
      %4219 = vset.pattern.permute.xlu0 0
      %4220 = vperm.xlu0 %4219, %v3715
      %v4221 = vpop.permute.xlu0 %4220
      %4222 = vset.pattern.permute.xlu0 0
      %4223 = vperm.xlu0 %4222, %v3716
      %v4224 = vpop.permute.xlu0 %4223
      %4225 = vset.pattern.permute.xlu0 0
      %4226 = vperm.xlu0 %4225, %v3725
      %v4227 = vpop.permute.xlu0 %4226
      %4228 = vset.pattern.permute.xlu0 0
      %4229 = vperm.xlu0 %4228, %v3726
      %v4230 = vpop.permute.xlu0 %4229
      %4231 = vset.pattern.permute.xlu0 0
      %4232 = vperm.xlu0 %4231, %v3735
      %v4233 = vpop.permute.xlu0 %4232
      %4234 = vset.pattern.permute.xlu0 0
      %4235 = vperm.xlu0 %4234, %v3736
      %v4236 = vpop.permute.xlu0 %4235
      %4237 = vset.pattern.permute.xlu0 0
      %4238 = vperm.xlu0 %4237, %v3745
      %v4239 = vpop.permute.xlu0 %4238
      %4240 = vset.pattern.permute.xlu0 0
      %4241 = vperm.xlu0 %4240, %v3746
      %v4242 = vpop.permute.xlu0 %4241
      %4243 = vset.pattern.permute.xlu0 0
      %4244 = vperm.xlu0 %4243, %v3755
      %v4245 = vpop.permute.xlu0 %4244
      %4246 = vset.pattern.permute.xlu0 0
      %4247 = vperm.xlu0 %4246, %v3756
      %v4248 = vpop.permute.xlu0 %4247
      %4249 = vset.pattern.permute.xlu0 0
      %4250 = vperm.xlu0 %4249, %v3765
      %v4251 = vpop.permute.xlu0 %4250
      %4252 = vset.pattern.permute.xlu0 0
      %4253 = vperm.xlu0 %4252, %v3766
      %v4254 = vpop.permute.xlu0 %4253
      %4255 = vset.pattern.permute.xlu0 0
      %4256 = vperm.xlu0 %4255, %v3775
      %v4257 = vpop.permute.xlu0 %4256
      %4258 = vset.pattern.permute.xlu0 0
      %4259 = vperm.xlu0 %4258, %v3776
      %v4260 = vpop.permute.xlu0 %4259
      %4261 = vset.pattern.permute.xlu0 0
      %4262 = vperm.xlu0 %4261, %v3785
      %v4263 = vpop.permute.xlu0 %4262
      %4264 = vset.pattern.permute.xlu0 0
      %4265 = vperm.xlu0 %4264, %v3786
      %v4266 = vpop.permute.xlu0 %4265
      %4267 = vset.pattern.permute.xlu0 0
      %4268 = vperm.xlu0 %4267, %v3795
      %v4269 = vpop.permute.xlu0 %4268
      %4270 = vset.pattern.permute.xlu0 0
      %4271 = vperm.xlu0 %4270, %v3796
      %v4272 = vpop.permute.xlu0 %4271
      %4273 = vset.pattern.permute.xlu0 0
      %4274 = vperm.xlu0 %4273, %v3805
      %v4275 = vpop.permute.xlu0 %4274
      %4276 = vset.pattern.permute.xlu0 0
      %4277 = vperm.xlu0 %4276, %v3806
      %v4278 = vpop.permute.xlu0 %4277
      %4279 = vset.pattern.permute.xlu0 0
      %4280 = vperm.xlu0 %4279, %v3815
      %v4281 = vpop.permute.xlu0 %4280
      %4282 = vset.pattern.permute.xlu0 0
      %4283 = vperm.xlu0 %4282, %v3816
      %v4284 = vpop.permute.xlu0 %4283
      %4285 = vset.pattern.permute.xlu0 0
      %4286 = vperm.xlu0 %4285, %v3825
      %v4287 = vpop.permute.xlu0 %4286
      %4288 = vset.pattern.permute.xlu0 0
      %4289 = vperm.xlu0 %4288, %v3826
      %v4290 = vpop.permute.xlu0 %4289
      %4291 = vset.pattern.permute.xlu0 0
      %4292 = vperm.xlu0 %4291, %v3835
      %v4293 = vpop.permute.xlu0 %4292
      %4294 = vset.pattern.permute.xlu0 0
      %4295 = vperm.xlu0 %4294, %v3836
      %v4296 = vpop.permute.xlu0 %4295
      %4297 = vset.pattern.permute.xlu0 0
      %4298 = vperm.xlu0 %4297, %v3845
      %v4299 = vpop.permute.xlu0 %4298
      %4300 = vset.pattern.permute.xlu0 0
      %4301 = vperm.xlu0 %4300, %v3846
      %v4302 = vpop.permute.xlu0 %4301
      %4303 = vset.pattern.permute.xlu0 0
      %4304 = vperm.xlu0 %4303, %v3855
      %v4305 = vpop.permute.xlu0 %4304
      %4306 = vset.pattern.permute.xlu0 0
      %4307 = vperm.xlu0 %4306, %v3856
      %v4308 = vpop.permute.xlu0 %4307
      %4309 = vset.pattern.permute.xlu0 0
      %4310 = vperm.xlu0 %4309, %v3865
      %v4311 = vpop.permute.xlu0 %4310
      %4312 = vset.pattern.permute.xlu0 0
      %4313 = vperm.xlu0 %4312, %v3866
      %v4314 = vpop.permute.xlu0 %4313
      %4315 = vset.pattern.permute.xlu0 0
      %4316 = vperm.xlu0 %4315, %v3875
      %v4317 = vpop.permute.xlu0 %4316
      %4318 = vset.pattern.permute.xlu0 0
      %4319 = vperm.xlu0 %4318, %v3876
      %v4320 = vpop.permute.xlu0 %4319
      %4321 = vset.pattern.permute.xlu0 0
      %4322 = vperm.xlu0 %4321, %v3885
      %v4323 = vpop.permute.xlu0 %4322
      %4324 = vset.pattern.permute.xlu0 0
      %4325 = vperm.xlu0 %4324, %v3886
      %v4326 = vpop.permute.xlu0 %4325
      %4327 = vset.pattern.permute.xlu0 0
      %4328 = vperm.xlu0 %4327, %v3895
      %v4329 = vpop.permute.xlu0 %4328
      %4330 = vset.pattern.permute.xlu0 0
      %4331 = vperm.xlu0 %4330, %v3896
      %v4332 = vpop.permute.xlu0 %4331
      %4333 = vset.pattern.permute.xlu0 0
      %4334 = vperm.xlu0 %4333, %v3905
      %v4335 = vpop.permute.xlu0 %4334
      %4336 = vset.pattern.permute.xlu0 0
      %4337 = vperm.xlu0 %4336, %v3906
      %v4338 = vpop.permute.xlu0 %4337
      %4339 = vset.pattern.permute.xlu0 0
      %4340 = vperm.xlu0 %4339, %v3915
      %v4341 = vpop.permute.xlu0 %4340
      %4342 = vset.pattern.permute.xlu0 0
      %4343 = vperm.xlu0 %4342, %v3916
      %v4344 = vpop.permute.xlu0 %4343
      %4345 = vset.pattern.permute.xlu0 0
      %4346 = vperm.xlu0 %4345, %v3925
      %v4347 = vpop.permute.xlu0 %4346
      %4348 = vset.pattern.permute.xlu0 0
      %4349 = vperm.xlu0 %4348, %v3926
      %v4350 = vpop.permute.xlu0 %4349
      %4351 = vset.pattern.permute.xlu0 0
      %4352 = vperm.xlu0 %4351, %v3935
      %v4353 = vpop.permute.xlu0 %4352
      %4354 = vset.pattern.permute.xlu0 0
      %4355 = vperm.xlu0 %4354, %v3936
      %v4356 = vpop.permute.xlu0 %4355
      %4357 = vset.pattern.permute.xlu0 0
      %4358 = vperm.xlu0 %4357, %v3945
      %v4359 = vpop.permute.xlu0 %4358
      %4360 = vset.pattern.permute.xlu0 0
      %4361 = vperm.xlu0 %4360, %v3946
      %v4362 = vpop.permute.xlu0 %4361
      %4363 = vset.pattern.permute.xlu0 0
      %4364 = vperm.xlu0 %4363, %v3955
      %v4365 = vpop.permute.xlu0 %4364
      %4366 = vset.pattern.permute.xlu0 0
      %4367 = vperm.xlu0 %4366, %v3956
      %v4368 = vpop.permute.xlu0 %4367
      %4369 = vset.pattern.permute.xlu0 0
      %4370 = vperm.xlu0 %4369, %v3965
      %v4371 = vpop.permute.xlu0 %4370
      %4372 = vset.pattern.permute.xlu0 0
      %4373 = vperm.xlu0 %4372, %v3966
      %v4374 = vpop.permute.xlu0 %4373
      %4375 = vset.pattern.permute.xlu0 0
      %4376 = vperm.xlu0 %4375, %v3975
      %v4377 = vpop.permute.xlu0 %4376
      %4378 = vset.pattern.permute.xlu0 0
      %4379 = vperm.xlu0 %4378, %v3976
      %v4380 = vpop.permute.xlu0 %4379
      %4381 = vset.pattern.permute.xlu0 0
      %4382 = vperm.xlu0 %4381, %v3985
      %v4383 = vpop.permute.xlu0 %4382
      %4384 = vset.pattern.permute.xlu0 0
      %4385 = vperm.xlu0 %4384, %v3986
      %v4386 = vpop.permute.xlu0 %4385
      %4387 = vset.pattern.permute.xlu0 0
      %4388 = vperm.xlu0 %4387, %v3995
      %v4389 = vpop.permute.xlu0 %4388
      %4390 = vset.pattern.permute.xlu0 0
      %4391 = vperm.xlu0 %4390, %v3996
      %v4392 = vpop.permute.xlu0 %4391
      %4393 = vset.pattern.permute.xlu0 0
      %4394 = vperm.xlu0 %4393, %v4005
      %v4395 = vpop.permute.xlu0 %4394
      %4396 = vset.pattern.permute.xlu0 0
      %4397 = vperm.xlu0 %4396, %v4006
      %v4398 = vpop.permute.xlu0 %4397
      %4399 = vset.pattern.permute.xlu0 0
      %4400 = vperm.xlu0 %4399, %v4015
      %v4401 = vpop.permute.xlu0 %4400
      %4402 = vset.pattern.permute.xlu0 0
      %4403 = vperm.xlu0 %4402, %v4016
      %v4404 = vpop.permute.xlu0 %4403
      %4405 = vset.pattern.permute.xlu0 0
      %4406 = vperm.xlu0 %4405, %v4025
      %v4407 = vpop.permute.xlu0 %4406
      %4408 = vset.pattern.permute.xlu0 0
      %4409 = vperm.xlu0 %4408, %v4026
      %v4410 = vpop.permute.xlu0 %4409
      %v4411 = vperm.slane %v4029, %v172
      %v4412 = vadd.s32 %v172, 4294967288
      %v4413 = vperm.slane %v4032, %v4412
      %vm4414 = vcmask 130112
      %v4415 = vsel %vm4414, %v4413, %v4411
      %v4416 = vadd.s32 %v172, 4294967280
      %v4417 = vperm.slane %v4035, %v4416
      %vm4418 = vcmask 195712
      %v4419 = vsel %vm4418, %v4417, %v4415
      %v4420 = vadd.s32 %v172, 4294967272
      %v4421 = vperm.slane %v4038, %v4420
      %vm4422 = vcmask 261312
      %v4423 = vsel %vm4422, %v4421, %v4419
      %v4424 = vadd.s32 %v172, 4294967264
      %v4425 = vperm.slane %v4041, %v4424
      %vm4426 = vcmask 326912
      %v4427 = vsel %vm4426, %v4425, %v4423
      %v4428 = vadd.s32 %v172, 4294967256
      %v4429 = vperm.slane %v4044, %v4428
      %vm4430 = vcmask 392512
      %v4431 = vsel %vm4430, %v4429, %v4427
      %v4432 = vadd.s32 %v172, 4294967248
      %v4433 = vperm.slane %v4047, %v4432
      %vm4434 = vcmask 458112
      %v4435 = vsel %vm4434, %v4433, %v4431
      %v4436 = vadd.s32 %v172, 4294967240
      %v4437 = vperm.slane %v4050, %v4436
      %vm4438 = vcmask 523712
      %v4439 = vsel %vm4438, %v4437, %v4435
      %v4440 = vadd.s32 %v172, 4294967232
      %v4441 = vperm.slane %v4053, %v4440
      %vm4442 = vcmask 589312
      %v4443 = vsel %vm4442, %v4441, %v4439
      %v4444 = vadd.s32 %v172, 4294967224
      %v4445 = vperm.slane %v4056, %v4444
      %vm4446 = vcmask 654912
      %v4447 = vsel %vm4446, %v4445, %v4443
      %v4448 = vadd.s32 %v172, 4294967216
      %v4449 = vperm.slane %v4059, %v4448
      %vm4450 = vcmask 720512
      %v4451 = vsel %vm4450, %v4449, %v4447
      %v4452 = vadd.s32 %v172, 4294967208
      %v4453 = vperm.slane %v4062, %v4452
      %vm4454 = vcmask 786112
      %v4455 = vsel %vm4454, %v4453, %v4451
      %v4456 = vadd.s32 %v172, 4294967200
      %v4457 = vperm.slane %v4065, %v4456
      %vm4458 = vcmask 851712
      %v4459 = vsel %vm4458, %v4457, %v4455
      %v4460 = vadd.s32 %v172, 4294967192
      %v4461 = vperm.slane %v4068, %v4460
      %vm4462 = vcmask 917312
      %v4463 = vsel %vm4462, %v4461, %v4459
      %v4464 = vadd.s32 %v172, 4294967184
      %v4465 = vperm.slane %v4071, %v4464
      %vm4466 = vcmask 982912
      %v4467 = vsel %vm4466, %v4465, %v4463
      %v4468 = vadd.s32 %v172, 4294967176
      %v4469 = vperm.slane %v4074, %v4468
      %vm4470 = vcmask 1048512
      %v4471 = vsel %vm4470, %v4469, %v4467
      %v4472 = vperm.slane %v4077, %v172
      %v4473 = vperm.slane %v4080, %v4412
      %v4474 = vsel %vm4414, %v4473, %v4472
      %v4475 = vperm.slane %v4083, %v4416
      %v4476 = vsel %vm4418, %v4475, %v4474
      %v4477 = vperm.slane %v4086, %v4420
      %v4478 = vsel %vm4422, %v4477, %v4476
      %v4479 = vperm.slane %v4089, %v4424
      %v4480 = vsel %vm4426, %v4479, %v4478
      %v4481 = vperm.slane %v4092, %v4428
      %v4482 = vsel %vm4430, %v4481, %v4480
      %v4483 = vperm.slane %v4095, %v4432
      %v4484 = vsel %vm4434, %v4483, %v4482
      %v4485 = vperm.slane %v4098, %v4436
      %v4486 = vsel %vm4438, %v4485, %v4484
      %v4487 = vperm.slane %v4101, %v4440
      %v4488 = vsel %vm4442, %v4487, %v4486
      %v4489 = vperm.slane %v4104, %v4444
      %v4490 = vsel %vm4446, %v4489, %v4488
      %v4491 = vperm.slane %v4107, %v4448
      %v4492 = vsel %vm4450, %v4491, %v4490
      %v4493 = vperm.slane %v4110, %v4452
      %v4494 = vsel %vm4454, %v4493, %v4492
      %v4495 = vperm.slane %v4113, %v4456
      %v4496 = vsel %vm4458, %v4495, %v4494
      %v4497 = vperm.slane %v4116, %v4460
      %v4498 = vsel %vm4462, %v4497, %v4496
      %v4499 = vperm.slane %v4119, %v4464
      %v4500 = vsel %vm4466, %v4499, %v4498
      %v4501 = vperm.slane %v4122, %v4468
      %v4502 = vsel %vm4470, %v4501, %v4500
      %v4503 = vperm.slane %v4125, %v172
      %v4504 = vperm.slane %v4128, %v4412
      %v4505 = vsel %vm4414, %v4504, %v4503
      %v4506 = vperm.slane %v4131, %v4416
      %v4507 = vsel %vm4418, %v4506, %v4505
      %v4508 = vperm.slane %v4134, %v4420
      %v4509 = vsel %vm4422, %v4508, %v4507
      %v4510 = vperm.slane %v4137, %v4424
      %v4511 = vsel %vm4426, %v4510, %v4509
      %v4512 = vperm.slane %v4140, %v4428
      %v4513 = vsel %vm4430, %v4512, %v4511
      %v4514 = vperm.slane %v4143, %v4432
      %v4515 = vsel %vm4434, %v4514, %v4513
      %v4516 = vperm.slane %v4146, %v4436
      %v4517 = vsel %vm4438, %v4516, %v4515
      %v4518 = vperm.slane %v4149, %v4440
      %v4519 = vsel %vm4442, %v4518, %v4517
      %v4520 = vperm.slane %v4152, %v4444
      %v4521 = vsel %vm4446, %v4520, %v4519
      %v4522 = vperm.slane %v4155, %v4448
      %v4523 = vsel %vm4450, %v4522, %v4521
      %v4524 = vperm.slane %v4158, %v4452
      %v4525 = vsel %vm4454, %v4524, %v4523
      %v4526 = vperm.slane %v4161, %v4456
      %v4527 = vsel %vm4458, %v4526, %v4525
      %v4528 = vperm.slane %v4164, %v4460
      %v4529 = vsel %vm4462, %v4528, %v4527
      %v4530 = vperm.slane %v4167, %v4464
      %v4531 = vsel %vm4466, %v4530, %v4529
      %v4532 = vperm.slane %v4170, %v4468
      %v4533 = vsel %vm4470, %v4532, %v4531
      %v4534 = vperm.slane %v4173, %v172
      %v4535 = vperm.slane %v4176, %v4412
      %v4536 = vsel %vm4414, %v4535, %v4534
      %v4537 = vperm.slane %v4179, %v4416
      %v4538 = vsel %vm4418, %v4537, %v4536
      %v4539 = vperm.slane %v4182, %v4420
      %v4540 = vsel %vm4422, %v4539, %v4538
      %v4541 = vperm.slane %v4185, %v4424
      %v4542 = vsel %vm4426, %v4541, %v4540
      %v4543 = vperm.slane %v4188, %v4428
      %v4544 = vsel %vm4430, %v4543, %v4542
      %v4545 = vperm.slane %v4191, %v4432
      %v4546 = vsel %vm4434, %v4545, %v4544
      %v4547 = vperm.slane %v4194, %v4436
      %v4548 = vsel %vm4438, %v4547, %v4546
      %v4549 = vperm.slane %v4197, %v4440
      %v4550 = vsel %vm4442, %v4549, %v4548
      %v4551 = vperm.slane %v4200, %v4444
      %v4552 = vsel %vm4446, %v4551, %v4550
      %v4553 = vperm.slane %v4203, %v4448
      %v4554 = vsel %vm4450, %v4553, %v4552
      %v4555 = vperm.slane %v4206, %v4452
      %v4556 = vsel %vm4454, %v4555, %v4554
      %v4557 = vperm.slane %v4209, %v4456
      %v4558 = vsel %vm4458, %v4557, %v4556
      %v4559 = vperm.slane %v4212, %v4460
      %v4560 = vsel %vm4462, %v4559, %v4558
      %v4561 = vperm.slane %v4215, %v4464
      %v4562 = vsel %vm4466, %v4561, %v4560
      %v4563 = vperm.slane %v4218, %v4468
      %v4564 = vsel %vm4470, %v4563, %v4562
      %v4565 = vperm.slane %v4221, %v172
      %v4566 = vperm.slane %v4224, %v4412
      %v4567 = vsel %vm4414, %v4566, %v4565
      %v4568 = vperm.slane %v4227, %v4416
      %v4569 = vsel %vm4418, %v4568, %v4567
      %v4570 = vperm.slane %v4230, %v4420
      %v4571 = vsel %vm4422, %v4570, %v4569
      %v4572 = vperm.slane %v4233, %v4424
      %v4573 = vsel %vm4426, %v4572, %v4571
      %v4574 = vperm.slane %v4236, %v4428
      %v4575 = vsel %vm4430, %v4574, %v4573
      %v4576 = vperm.slane %v4239, %v4432
      %v4577 = vsel %vm4434, %v4576, %v4575
      %v4578 = vperm.slane %v4242, %v4436
      %v4579 = vsel %vm4438, %v4578, %v4577
      %v4580 = vperm.slane %v4245, %v4440
      %v4581 = vsel %vm4442, %v4580, %v4579
      %v4582 = vperm.slane %v4248, %v4444
      %v4583 = vsel %vm4446, %v4582, %v4581
      %v4584 = vperm.slane %v4251, %v4448
      %v4585 = vsel %vm4450, %v4584, %v4583
      %v4586 = vperm.slane %v4254, %v4452
      %v4587 = vsel %vm4454, %v4586, %v4585
      %v4588 = vperm.slane %v4257, %v4456
      %v4589 = vsel %vm4458, %v4588, %v4587
      %v4590 = vperm.slane %v4260, %v4460
      %v4591 = vsel %vm4462, %v4590, %v4589
      %v4592 = vperm.slane %v4263, %v4464
      %v4593 = vsel %vm4466, %v4592, %v4591
      %v4594 = vperm.slane %v4266, %v4468
      %v4595 = vsel %vm4470, %v4594, %v4593
      %v4596 = vperm.slane %v4269, %v172
      %v4597 = vperm.slane %v4272, %v4412
      %v4598 = vsel %vm4414, %v4597, %v4596
      %v4599 = vperm.slane %v4275, %v4416
      %v4600 = vsel %vm4418, %v4599, %v4598
      %v4601 = vperm.slane %v4278, %v4420
      %v4602 = vsel %vm4422, %v4601, %v4600
      %v4603 = vperm.slane %v4281, %v4424
      %v4604 = vsel %vm4426, %v4603, %v4602
      %v4605 = vperm.slane %v4284, %v4428
      %v4606 = vsel %vm4430, %v4605, %v4604
      %v4607 = vperm.slane %v4287, %v4432
      %v4608 = vsel %vm4434, %v4607, %v4606
      %v4609 = vperm.slane %v4290, %v4436
      %v4610 = vsel %vm4438, %v4609, %v4608
      %v4611 = vperm.slane %v4293, %v4440
      %v4612 = vsel %vm4442, %v4611, %v4610
      %v4613 = vperm.slane %v4296, %v4444
      %v4614 = vsel %vm4446, %v4613, %v4612
      %v4615 = vperm.slane %v4299, %v4448
      %v4616 = vsel %vm4450, %v4615, %v4614
      %v4617 = vperm.slane %v4302, %v4452
      %v4618 = vsel %vm4454, %v4617, %v4616
      %v4619 = vperm.slane %v4305, %v4456
      %v4620 = vsel %vm4458, %v4619, %v4618
      %v4621 = vperm.slane %v4308, %v4460
      %v4622 = vsel %vm4462, %v4621, %v4620
      %v4623 = vperm.slane %v4311, %v4464
      %v4624 = vsel %vm4466, %v4623, %v4622
      %v4625 = vperm.slane %v4314, %v4468
      %v4626 = vsel %vm4470, %v4625, %v4624
      %v4627 = vperm.slane %v4317, %v172
      %v4628 = vperm.slane %v4320, %v4412
      %v4629 = vsel %vm4414, %v4628, %v4627
      %v4630 = vperm.slane %v4323, %v4416
      %v4631 = vsel %vm4418, %v4630, %v4629
      %v4632 = vperm.slane %v4326, %v4420
      %v4633 = vsel %vm4422, %v4632, %v4631
      %v4634 = vperm.slane %v4329, %v4424
      %v4635 = vsel %vm4426, %v4634, %v4633
      %v4636 = vperm.slane %v4332, %v4428
      %v4637 = vsel %vm4430, %v4636, %v4635
      %v4638 = vperm.slane %v4335, %v4432
      %v4639 = vsel %vm4434, %v4638, %v4637
      %v4640 = vperm.slane %v4338, %v4436
      %v4641 = vsel %vm4438, %v4640, %v4639
      %v4642 = vperm.slane %v4341, %v4440
      %v4643 = vsel %vm4442, %v4642, %v4641
      %v4644 = vperm.slane %v4344, %v4444
      %v4645 = vsel %vm4446, %v4644, %v4643
      %v4646 = vperm.slane %v4347, %v4448
      %v4647 = vsel %vm4450, %v4646, %v4645
      %v4648 = vperm.slane %v4350, %v4452
      %v4649 = vsel %vm4454, %v4648, %v4647
      %v4650 = vperm.slane %v4353, %v4456
      %v4651 = vsel %vm4458, %v4650, %v4649
      %v4652 = vperm.slane %v4356, %v4460
      %v4653 = vsel %vm4462, %v4652, %v4651
      %v4654 = vperm.slane %v4359, %v4464
      %v4655 = vsel %vm4466, %v4654, %v4653
      %v4656 = vperm.slane %v4362, %v4468
      %v4657 = vsel %vm4470, %v4656, %v4655
      %v4658 = vperm.slane %v4365, %v172
      %v4659 = vperm.slane %v4368, %v4412
      %v4660 = vsel %vm4414, %v4659, %v4658
      %v4661 = vperm.slane %v4371, %v4416
      %v4662 = vsel %vm4418, %v4661, %v4660
      %v4663 = vperm.slane %v4374, %v4420
      %v4664 = vsel %vm4422, %v4663, %v4662
      %v4665 = vperm.slane %v4377, %v4424
      %v4666 = vsel %vm4426, %v4665, %v4664
      %v4667 = vperm.slane %v4380, %v4428
      %v4668 = vsel %vm4430, %v4667, %v4666
      %v4669 = vperm.slane %v4383, %v4432
      %v4670 = vsel %vm4434, %v4669, %v4668
      %v4671 = vperm.slane %v4386, %v4436
      %v4672 = vsel %vm4438, %v4671, %v4670
      %v4673 = vperm.slane %v4389, %v4440
      %v4674 = vsel %vm4442, %v4673, %v4672
      %v4675 = vperm.slane %v4392, %v4444
      %v4676 = vsel %vm4446, %v4675, %v4674
      %v4677 = vperm.slane %v4395, %v4448
      %v4678 = vsel %vm4450, %v4677, %v4676
      %v4679 = vperm.slane %v4398, %v4452
      %v4680 = vsel %vm4454, %v4679, %v4678
      %v4681 = vperm.slane %v4401, %v4456
      %v4682 = vsel %vm4458, %v4681, %v4680
      %v4683 = vperm.slane %v4404, %v4460
      %v4684 = vsel %vm4462, %v4683, %v4682
      %v4685 = vperm.slane %v4407, %v4464
      %v4686 = vsel %vm4466, %v4685, %v4684
      %v4687 = vperm.slane %v4410, %v4468
      %v4688 = vsel %vm4470, %v4687, %v4686
      %vm4689 = vcmask 1041409
      %v4690 = vsel %vm4689, %v4595, %v4471
      %v4691 = vsel %vm4689, %v4626, %v4502
      %v4692 = vsel %vm4689, %v4657, %v4533
      %v4693 = vsel %vm4689, %v4688, %v4564
      %v4694 = vrot.slane %v4691, 6
      %v4695 = vrot.slane %v4692, 4
      %v4696 = vrot.slane %v4693, 2
      %vm4697 = vcmask 1041408
      %v4698 = vsel %vm4697, %v4690, %v4694
      %vm4699 = vcmask 1045508
      %v4700 = vsel %vm4699, %v4695, %v4696
      %vm4701 = vcmask 1043456
      %v4702 = vsel %vm4701, %v4698, %v4700
      %4704 = vst [vmem:[#allocation3] sm:$0xff] %v4702
    $region13: #{tpu_custom_call.1} parent=1 // pred_fallthru
      _
    // Predicated region
    $region14: #{tpu_custom_call.1} parent=1 // pred_check
      _
    $region15: #{tpu_custom_call.1} parent=1 // pred_check_branch
      %4706 = sbr.rel (0) target = $region17
    $region16: #{tpu_custom_call.1} parent=1 // pred_region
      %4708 = vsyncadd [#allocation4], 0
      %s4710 = sshll.u32 [#allocation3], 4
      %s4711 = int_to_ptr.vmem [resolvable:$true] %s4710
      %s4712 = sshll.u32 %s1, 4
      %s4713 = int_to_ptr.hbm [resolvable:$true] %s4712
      %4715 = dma.vmem_to_hbm [thread:$0]  %s4711, 128, %s4713, [#allocation4]
    $region17: #{tpu_custom_call.1} parent=1 // pred_fallthru
      _
    // Predicated region
    $region18: #{tpu_custom_call.1} parent=1 // pred_check
      _
    $region19: #{tpu_custom_call.1} parent=1 // pred_check_branch
      %4717 = sbr.rel (0) target = $region21
    $region20: #{tpu_custom_call.1} parent=1 // pred_region
      %4719 = dma.done [#allocation4], 128
    $region21: #{tpu_custom_call.1} parent=1 // pred_fallthru
      _
    %4720 = vsyncpa [#allocation4], 1

</llo_original>
